<compile_context>
chip_gen: v6e
topology: v6e:2x2x1
jax: 0.10.0
libtpu: 0.0.40
codegen_flags: <defaults>
</compile_context>

<pallas_src>
import functools

import jax
import jax.numpy as jnp
from jax.experimental import pallas as pl
from jax.experimental.pallas import tpu as pltpu


def _round_up(v, m):
    return (v + m - 1) // m * m


# ----------------------------------------------------------------------------
# Kernel: whole two-layer recurrence, everything VMEM-resident, no grid.
# ----------------------------------------------------------------------------
def encoder_kernel(x2d_ref, wih1_ref, whh1_ref, b1_ref, w2cat_hbm_ref, b2_ref,
                   out_ref, w2_vmem, dma_sem, xproj_ref):
    Bp, H2P = out_ref.shape
    T = x2d_ref.shape[0] // Bp
    H1P = whh1_ref.shape[0]

    # Kick off the fused layer-2 weight DMA immediately; it is hidden behind
    # the hoisted layer-1 projection and the first layer-1 cell below.
    w2_cp = pltpu.make_async_copy(w2cat_hbm_ref, w2_vmem, dma_sem)
    w2_cp.start()

    # Hoisted layer-1 input projection: single (T*Bp, F) x (F, 4*H1P) bf16
    # matmul with f32 accumulation, written to VMEM scratch so per-step
    # slices bound the live range instead of holding 32+ vregs across the loop.
    xproj_ref[...] = jnp.dot(x2d_ref[...], wih1_ref[...],
                             preferred_element_type=jnp.float32) + b1_ref[...]

    whh1 = whh1_ref[...]
    b2 = b2_ref[...]

    def sigmoid1(x):
        # sigmoid(x) == 0.5 * tanh(0.5 * x) + 0.5 : exactly one EUP push per
        # gate (tanh) plus cheap VPU mul/add, instead of exp + reciprocal.
        return 0.5 * jnp.tanh(0.5 * x) + 0.5

    def cell(pre, c, h_pad):
        # Gate order (i, f, g, o); slices are lane-aligned (h_pad % 128 == 0).
        i = sigmoid1(pre[:, 0 * h_pad:1 * h_pad])
        f = sigmoid1(pre[:, 1 * h_pad:2 * h_pad])
        g = jnp.tanh(pre[:, 2 * h_pad:3 * h_pad])
        o = sigmoid1(pre[:, 3 * h_pad:4 * h_pad])
        c_new = f * c + i * g
        h_new = o * jnp.tanh(c_new)
        return h_new, c_new

    h1 = jnp.zeros((Bp, H1P), jnp.float32)
    c1 = jnp.zeros((Bp, H1P), jnp.float32)
    h2 = jnp.zeros((Bp, H2P), jnp.float32)
    c2 = jnp.zeros((Bp, H2P), jnp.float32)

    w2 = None
    # Statically unrolled recurrence (T known at trace time): one fused
    # recurrent matmul per layer per step; layer-1(t+1) is independent of
    # layer-2(t), so the LLO scheduler can overlap them.
    for t in range(T):
        xp = xproj_ref[t * Bp:(t + 1) * Bp, :]
        if t == 0:
            pre1 = xp                       # h1 == 0: skip the recurrent dot
        else:
            pre1 = xp + jnp.dot(h1.astype(jnp.bfloat16), whh1,
                                preferred_element_type=jnp.float32)
        h1, c1 = cell(pre1, c1, H1P)

        if t == 0:
            # Wait for the layer-2 weights only right before their first use.
            w2_cp.wait()
            w2 = w2_vmem[...]

        # Fused layer-2 pre-activation: [h1 | h2] @ [Wih2; Whh2] + b2.
        h12 = jnp.concatenate([h1, h2], axis=1).astype(jnp.bfloat16)
        pre2 = jnp.dot(h12, w2, preferred_element_type=jnp.float32) + b2
        h2, c2 = cell(pre2, c2, H2P)

    out_ref[...] = h2   # single lane-dense store of the final hidden state


@functools.partial(jax.jit, static_argnames=("embedding_dim",))
def encoder_forward(x_btf, wih1, whh1, b1, w2cat, b2, *, embedding_dim):
    """x_btf: (B, T, F) float32 -> (B, embedding_dim) float32."""
    B, T, F = x_btf.shape
    H1P = whh1.shape[0]
    H2P = w2cat.shape[1] // 4
    Bp = _round_up(B, 8)

    # Layout plumbing (cheap XLA ops): time-major, pad batch to a sublane
    # multiple, flatten (T, Bp) so the layer-1 projection is one matmul, and
    # cast the activation MXU operand to bf16.
    x = jnp.transpose(x_btf, (1, 0, 2))              # (T, B, F)
    x = jnp.pad(x, ((0, 0), (0, Bp - B), (0, 0)))    # (T, Bp, F)
    x2d = x.reshape(T * Bp, F).astype(jnp.bfloat16)

    out_padded = pl.pallas_call(
        encoder_kernel,
        out_shape=jax.ShapeDtypeStruct((Bp, H2P), jnp.float32),
        in_specs=[
            pl.BlockSpec(memory_space=pltpu.MemorySpace.VMEM),   # x2d
            pl.BlockSpec(memory_space=pltpu.MemorySpace.VMEM),   # wih1
            pl.BlockSpec(memory_space=pltpu.MemorySpace.VMEM),   # whh1
            pl.BlockSpec(memory_space=pltpu.MemorySpace.VMEM),   # b1
            pl.BlockSpec(memory_space=pl.ANY),                   # w2cat (manual DMA)
            pl.BlockSpec(memory_space=pltpu.MemorySpace.VMEM),   # b2
        ],
        out_specs=pl.BlockSpec(memory_space=pltpu.MemorySpace.VMEM),
        scratch_shapes=[
            pltpu.VMEM(w2cat.shape, jnp.bfloat16),               # layer-2 weights
            pltpu.SemaphoreType.DMA(()),                         # its DMA sem
            pltpu.VMEM((T * Bp, 4 * H1P), jnp.float32),          # hoisted xproj
        ],
    )(x2d, wih1, whh1, b1, w2cat, b2)

    return out_padded[:B, :embedding_dim]


# ----------------------------------------------------------------------------
# Parameter init (PyTorch LSTM layout) + conversion to the fused kernel layout.
# ----------------------------------------------------------------------------
def init_lstm_params(key, input_size, hidden_size):
    """PyTorch layout: weight_ih (4H,in), weight_hh (4H,H), bias_ih/hh (4H,)."""
    k = 1.0 / (hidden_size ** 0.5)
    kw1, kw2, kb1, kb2 = jax.random.split(key, 4)
    w_ih = jax.random.uniform(kw1, (4 * hidden_size, input_size), jnp.float32, -k, k)
    w_hh = jax.random.uniform(kw2, (4 * hidden_size, hidden_size), jnp.float32, -k, k)
    b_ih = jax.random.uniform(kb1, (4 * hidden_size,), jnp.float32, -k, k)
    b_hh = jax.random.uniform(kb2, (4 * hidden_size,), jnp.float32, -k, k)
    return w_ih, w_hh, b_ih, b_hh


def prep_lstm_weights(w_ih, w_hh, b_ih, b_hh, in_pad, h_pad):
    """-> gate-fused, zero-padded: Wih (in_pad, 4*h_pad), Whh (h_pad, 4*h_pad),
    bias (1, 4*h_pad). Gate order (i, f, g, o)."""
    four_h, in_size = w_ih.shape
    H = four_h // 4
    wih_g = jnp.transpose(w_ih.reshape(4, H, in_size), (0, 2, 1))   # (4, in, H)
    whh_g = jnp.transpose(w_hh.reshape(4, H, H), (0, 2, 1))         # (4, H, H)
    b_g = (b_ih + b_hh).reshape(4, H)

    wih_g = jnp.pad(wih_g, ((0, 0), (0, in_pad - in_size), (0, h_pad - H)))
    whh_g = jnp.pad(whh_g, ((0, 0), (0, h_pad - H), (0, h_pad - H)))
    b_g = jnp.pad(b_g, ((0, 0), (0, h_pad - H)))

    wih_cat = jnp.concatenate([wih_g[g] for g in range(4)], axis=1)  # (in_pad, 4*h_pad)
    whh_cat = jnp.concatenate([whh_g[g] for g in range(4)], axis=1)  # (h_pad, 4*h_pad)
    b_cat = b_g.reshape(1, 4 * h_pad)
    return wih_cat, whh_cat, b_cat


# Pure-JAX reference (same math as torch.nn.LSTM forward with zero init state).
def lstm_ref(x_tbf, w_ih, w_hh, b_ih, b_hh):
    H = w_hh.shape[1]
    B = x_tbf.shape[1]
    wih = w_ih.T          # (in, 4H)
    whh = w_hh.T          # (H, 4H)
    b = b_ih + b_hh
    hp = jax.lax.Precision.HIGHEST

    def step(carry, x_t):
        h, c = carry
        pre = jnp.dot(x_t, wih, precision=hp) + jnp.dot(h, whh, precision=hp) + b
        i = jax.nn.sigmoid(pre[:, 0:H])
        f = jax.nn.sigmoid(pre[:, H:2 * H])
        g = jnp.tanh(pre[:, 2 * H:3 * H])
        o = jax.nn.sigmoid(pre[:, 3 * H:4 * H])
        c = f * c + i * g
        h = o * jnp.tanh(c)
        return (h, c), h

    init = (jnp.zeros((B, H), jnp.float32), jnp.zeros((B, H), jnp.float32))
    (h_final, _), h_seq = jax.lax.scan(step, init, x_tbf)
    return h_seq, h_final


if __name__ == "__main__":
    # Small shapes consistent with the module.
    B, T = 4, 8
    n_features = 8
    embedding_dim = 64
    hidden_dim = 2 * embedding_dim          # 128

    key = jax.random.PRNGKey(0)
    kx, k1, k2 = jax.random.split(key, 3)
    x = jax.random.normal(kx, (B, T, n_features), jnp.float32)   # (B, T, F)

    p1 = init_lstm_params(k1, n_features, hidden_dim)
    p2 = init_lstm_params(k2, hidden_dim, embedding_dim)

    H1P = _round_up(hidden_dim, 128)        # 128
    H2P = _round_up(embedding_dim, 128)     # 128 (pad 64 -> 128 for lane alignment)
    wih1, whh1, b1 = prep_lstm_weights(*p1, in_pad=n_features, h_pad=H1P)
    wih2, whh2, b2 = prep_lstm_weights(*p2, in_pad=H1P, h_pad=H2P)

    # Layer-2 matmul fusion: rows = [Wih2; Whh2] match the [h1 | h2] concat.
    w2cat = jnp.concatenate([wih2, whh2], axis=0)               # (H1P+H2P, 4*H2P)

    # bf16 MXU operands (gate math stays f32 inside the kernel).
    wih1 = wih1.astype(jnp.bfloat16)
    whh1 = whh1.astype(jnp.bfloat16)
    w2cat = w2cat.astype(jnp.bfloat16)

    out = encoder_forward(x, wih1, whh1, b1, w2cat, b2,
                          embedding_dim=embedding_dim)
    out = jax.block_until_ready(out)
    assert out.shape == (B, embedding_dim), out.shape

    # Correctness check vs. pure-JAX stacked-LSTM reference (f32, HIGHEST).
    # Tolerance loosened for the bf16 MXU operands on the 8-step recurrence.
    x_tbf = jnp.transpose(x, (1, 0, 2))
    h_seq1, _ = lstm_ref(x_tbf, *p1)
    _, h_final2 = lstm_ref(h_seq1, *p2)
    err = float(jnp.max(jnp.abs(out - h_final2)))
    assert err < 3e-2, err

    print("KERNEL_OK")
</pallas_src>

<mosaic_0001>
module attributes {stable_mosaic.version = 11 : i64} {
  func.func @encoder_kernel(%arg0: memref<64x8xbf16, #tpu.memory_space<vmem>>, %arg1: memref<8x512xbf16, #tpu.memory_space<vmem>>, %arg2: memref<128x512xbf16, #tpu.memory_space<vmem>>, %arg3: memref<1x512xf32, #tpu.memory_space<vmem>>, %arg4: memref<256x512xbf16, #tpu.memory_space<any>>, %arg5: memref<1x512xf32, #tpu.memory_space<vmem>>, %arg6: memref<8x128xf32, #tpu.memory_space<vmem>>, %arg7: memref<256x512xbf16, #tpu.memory_space<vmem>>, %arg8: memref<!tpu.dma_semaphore, #tpu.memory_space<semaphore_mem>>, %arg9: memref<64x512xf32, #tpu.memory_space<vmem>>) attributes {dimension_semantics = [], scalar_prefetch = 0 : i64, scratch_operands = 3 : i64, tpu.core_type = #tpu.core_type<tc>} {
    tpu.enqueue_dma source(%arg4 : memref<256x512xbf16, #tpu.memory_space<any>>) target(%arg7 : memref<256x512xbf16, #tpu.memory_space<vmem>>) target_semaphore(%arg8 : memref<!tpu.dma_semaphore, #tpu.memory_space<semaphore_mem>>)
    %c0 = arith.constant 0 : index
    %c0_0 = arith.constant 0 : index
    %0 = vector.load %arg0[%c0, %c0_0] : memref<64x8xbf16, #tpu.memory_space<vmem>>, vector<64x8xbf16>
    %c0_1 = arith.constant 0 : index
    %c0_2 = arith.constant 0 : index
    %1 = vector.load %arg1[%c0_1, %c0_2] : memref<8x512xbf16, #tpu.memory_space<vmem>>, vector<8x512xbf16>
    %cst = arith.constant dense<0.000000e+00> : vector<64x512xf32>
    %2 = tpu.matmul %0, %1, %cst {dimension_numbers = #tpu.dot_dimension_numbers<[1], [0], [0], [1], [0, 0, 1, 1], [], []>} : vector<64x8xbf16>, vector<8x512xbf16>, vector<64x512xf32> -> vector<64x512xf32>
    %c0_3 = arith.constant 0 : index
    %c0_4 = arith.constant 0 : index
    %3 = vector.load %arg3[%c0_3, %c0_4] : memref<1x512xf32, #tpu.memory_space<vmem>>, vector<1x512xf32>
    %4 = vector.broadcast %3 : vector<1x512xf32> to vector<64x512xf32>
    %5 = arith.addf %2, %4 : vector<64x512xf32>
    %c0_5 = arith.constant 0 : index
    %c0_6 = arith.constant 0 : index
    %6 = vector.load %arg9[%c0_5, %c0_6] : memref<64x512xf32, #tpu.memory_space<vmem>>, vector<64x512xf32>
    tpu.vector_store %arg9[%c0_5, %c0_6], %5 {strides = array<i32>} : memref<64x512xf32, #tpu.memory_space<vmem>>, vector<64x512xf32>,
    %c0_7 = arith.constant 0 : index
    %c0_8 = arith.constant 0 : index
    %7 = vector.load %arg2[%c0_7, %c0_8] : memref<128x512xbf16, #tpu.memory_space<vmem>>, vector<128x512xbf16>
    %c0_9 = arith.constant 0 : index
    %c0_10 = arith.constant 0 : index
    %8 = vector.load %arg5[%c0_9, %c0_10] : memref<1x512xf32, #tpu.memory_space<vmem>>, vector<1x512xf32>
    %cst_11 = arith.constant 0.000000e+00 : f32
    %9 = vector.broadcast %cst_11 : f32 to vector<8x128xf32>
    %cst_12 = arith.constant 0.000000e+00 : f32
    %10 = vector.broadcast %cst_12 : f32 to vector<8x128xf32>
    %cst_13 = arith.constant 0.000000e+00 : f32
    %11 = vector.broadcast %cst_13 : f32 to vector<8x128xf32>
    %c0_14 = arith.constant 0 : index
    %c0_15 = arith.constant 0 : index
    %12 = vector.load %arg9[%c0_14, %c0_15] : memref<64x512xf32, #tpu.memory_space<vmem>>, vector<8x512xf32>
    %13 = vector.extract_strided_slice %12 {offsets = [0, 0], sizes = [8, 128], strides = [1, 1]} : vector<8x512xf32> to vector<8x128xf32>
    %cst_16 = arith.constant 5.000000e-01 : f32
    %14 = vector.broadcast %cst_16 : f32 to vector<8x128xf32>
    %15 = arith.mulf %14, %13 : vector<8x128xf32>
    %16 = math.tanh %15 : vector<8x128xf32>
    %cst_17 = arith.constant 5.000000e-01 : f32
    %17 = vector.broadcast %cst_17 : f32 to vector<8x128xf32>
    %18 = arith.mulf %17, %16 : vector<8x128xf32>
    %cst_18 = arith.constant 5.000000e-01 : f32
    %19 = vector.broadcast %cst_18 : f32 to vector<8x128xf32>
    %20 = arith.addf %18, %19 : vector<8x128xf32>
    %21 = vector.extract_strided_slice %12 {offsets = [0, 128], sizes = [8, 128], strides = [1, 1]} : vector<8x512xf32> to vector<8x128xf32>
    %cst_19 = arith.constant 5.000000e-01 : f32
    %22 = vector.broadcast %cst_19 : f32 to vector<8x128xf32>
    %23 = arith.mulf %22, %21 : vector<8x128xf32>
    %24 = math.tanh %23 : vector<8x128xf32>
    %cst_20 = arith.constant 5.000000e-01 : f32
    %25 = vector.broadcast %cst_20 : f32 to vector<8x128xf32>
    %26 = arith.mulf %25, %24 : vector<8x128xf32>
    %cst_21 = arith.constant 5.000000e-01 : f32
    %27 = vector.broadcast %cst_21 : f32 to vector<8x128xf32>
    %28 = arith.addf %26, %27 : vector<8x128xf32>
    %29 = vector.extract_strided_slice %12 {offsets = [0, 256], sizes = [8, 128], strides = [1, 1]} : vector<8x512xf32> to vector<8x128xf32>
    %30 = math.tanh %29 : vector<8x128xf32>
    %31 = vector.extract_strided_slice %12 {offsets = [0, 384], sizes = [8, 128], strides = [1, 1]} : vector<8x512xf32> to vector<8x128xf32>
    %cst_22 = arith.constant 5.000000e-01 : f32
    %32 = vector.broadcast %cst_22 : f32 to vector<8x128xf32>
    %33 = arith.mulf %32, %31 : vector<8x128xf32>
    %34 = math.tanh %33 : vector<8x128xf32>
    %cst_23 = arith.constant 5.000000e-01 : f32
    %35 = vector.broadcast %cst_23 : f32 to vector<8x128xf32>
    %36 = arith.mulf %35, %34 : vector<8x128xf32>
    %cst_24 = arith.constant 5.000000e-01 : f32
    %37 = vector.broadcast %cst_24 : f32 to vector<8x128xf32>
    %38 = arith.addf %36, %37 : vector<8x128xf32>
    %39 = arith.mulf %28, %9 : vector<8x128xf32>
    %40 = arith.mulf %20, %30 : vector<8x128xf32>
    %41 = arith.addf %39, %40 : vector<8x128xf32>
    %42 = math.tanh %41 : vector<8x128xf32>
    %43 = arith.mulf %38, %42 : vector<8x128xf32>
    tpu.wait_dma2 semaphore(%arg8 : memref<!tpu.dma_semaphore, #tpu.memory_space<semaphore_mem>>) src(%arg4 : memref<256x512xbf16, #tpu.memory_space<any>>) dst(%arg7 : memref<256x512xbf16, #tpu.memory_space<vmem>>)
    %c0_25 = arith.constant 0 : index
    %c0_26 = arith.constant 0 : index
    %44 = vector.load %arg7[%c0_25, %c0_26] : memref<256x512xbf16, #tpu.memory_space<vmem>>, vector<256x512xbf16>
    %45 = tpu.concatenate %43, %10 in 1 : vector<8x128xf32>, vector<8x128xf32> -> vector<8x256xf32>
    %46 = arith.truncf %45 : vector<8x256xf32> to vector<8x256xbf16>
    %cst_27 = arith.constant dense<0.000000e+00> : vector<8x512xf32>
    %47 = tpu.matmul %46, %44, %cst_27 {dimension_numbers = #tpu.dot_dimension_numbers<[1], [0], [0], [1], [0, 0, 1, 1], [], []>} : vector<8x256xbf16>, vector<256x512xbf16>, vector<8x512xf32> -> vector<8x512xf32>
    %48 = vector.broadcast %8 : vector<1x512xf32> to vector<8x512xf32>
    %49 = arith.addf %47, %48 : vector<8x512xf32>
    %50 = vector.extract_strided_slice %49 {offsets = [0, 0], sizes = [8, 128], strides = [1, 1]} : vector<8x512xf32> to vector<8x128xf32>
    %cst_28 = arith.constant 5.000000e-01 : f32
    %51 = vector.broadcast %cst_28 : f32 to vector<8x128xf32>
    %52 = arith.mulf %51, %50 : vector<8x128xf32>
    %53 = math.tanh %52 : vector<8x128xf32>
    %cst_29 = arith.constant 5.000000e-01 : f32
    %54 = vector.broadcast %cst_29 : f32 to vector<8x128xf32>
    %55 = arith.mulf %54, %53 : vector<8x128xf32>
    %cst_30 = arith.constant 5.000000e-01 : f32
    %56 = vector.broadcast %cst_30 : f32 to vector<8x128xf32>
    %57 = arith.addf %55, %56 : vector<8x128xf32>
    %58 = vector.extract_strided_slice %49 {offsets = [0, 128], sizes = [8, 128], strides = [1, 1]} : vector<8x512xf32> to vector<8x128xf32>
    %cst_31 = arith.constant 5.000000e-01 : f32
    %59 = vector.broadcast %cst_31 : f32 to vector<8x128xf32>
    %60 = arith.mulf %59, %58 : vector<8x128xf32>
    %61 = math.tanh %60 : vector<8x128xf32>
    %cst_32 = arith.constant 5.000000e-01 : f32
    %62 = vector.broadcast %cst_32 : f32 to vector<8x128xf32>
    %63 = arith.mulf %62, %61 : vector<8x128xf32>
    %cst_33 = arith.constant 5.000000e-01 : f32
    %64 = vector.broadcast %cst_33 : f32 to vector<8x128xf32>
    %65 = arith.addf %63, %64 : vector<8x128xf32>
    %66 = vector.extract_strided_slice %49 {offsets = [0, 256], sizes = [8, 128], strides = [1, 1]} : vector<8x512xf32> to vector<8x128xf32>
    %67 = math.tanh %66 : vector<8x128xf32>
    %68 = vector.extract_strided_slice %49 {offsets = [0, 384], sizes = [8, 128], strides = [1, 1]} : vector<8x512xf32> to vector<8x128xf32>
    %cst_34 = arith.constant 5.000000e-01 : f32
    %69 = vector.broadcast %cst_34 : f32 to vector<8x128xf32>
    %70 = arith.mulf %69, %68 : vector<8x128xf32>
    %71 = math.tanh %70 : vector<8x128xf32>
    %cst_35 = arith.constant 5.000000e-01 : f32
    %72 = vector.broadcast %cst_35 : f32 to vector<8x128xf32>
    %73 = arith.mulf %72, %71 : vector<8x128xf32>
    %cst_36 = arith.constant 5.000000e-01 : f32
    %74 = vector.broadcast %cst_36 : f32 to vector<8x128xf32>
    %75 = arith.addf %73, %74 : vector<8x128xf32>
    %76 = arith.mulf %65, %11 : vector<8x128xf32>
    %77 = arith.mulf %57, %67 : vector<8x128xf32>
    %78 = arith.addf %76, %77 : vector<8x128xf32>
    %79 = math.tanh %78 : vector<8x128xf32>
    %80 = arith.mulf %75, %79 : vector<8x128xf32>
    %c8 = arith.constant 8 : index
    %c0_37 = arith.constant 0 : index
    %81 = vector.load %arg9[%c8, %c0_37] : memref<64x512xf32, #tpu.memory_space<vmem>>, vector<8x512xf32>
    %82 = arith.truncf %43 : vector<8x128xf32> to vector<8x128xbf16>
    %cst_38 = arith.constant dense<0.000000e+00> : vector<8x512xf32>
    %83 = tpu.matmul %82, %7, %cst_38 {dimension_numbers = #tpu.dot_dimension_numbers<[1], [0], [0], [1], [0, 0, 1, 1], [], []>} : vector<8x128xbf16>, vector<128x512xbf16>, vector<8x512xf32> -> vector<8x512xf32>
    %84 = arith.addf %81, %83 : vector<8x512xf32>
    %85 = vector.extract_strided_slice %84 {offsets = [0, 0], sizes = [8, 128], strides = [1, 1]} : vector<8x512xf32> to vector<8x128xf32>
    %cst_39 = arith.constant 5.000000e-01 : f32
    %86 = vector.broadcast %cst_39 : f32 to vector<8x128xf32>
    %87 = arith.mulf %86, %85 : vector<8x128xf32>
    %88 = math.tanh %87 : vector<8x128xf32>
    %cst_40 = arith.constant 5.000000e-01 : f32
    %89 = vector.broadcast %cst_40 : f32 to vector<8x128xf32>
    %90 = arith.mulf %89, %88 : vector<8x128xf32>
    %cst_41 = arith.constant 5.000000e-01 : f32
    %91 = vector.broadcast %cst_41 : f32 to vector<8x128xf32>
    %92 = arith.addf %90, %91 : vector<8x128xf32>
    %93 = vector.extract_strided_slice %84 {offsets = [0, 128], sizes = [8, 128], strides = [1, 1]} : vector<8x512xf32> to vector<8x128xf32>
    %cst_42 = arith.constant 5.000000e-01 : f32
    %94 = vector.broadcast %cst_42 : f32 to vector<8x128xf32>
    %95 = arith.mulf %94, %93 : vector<8x128xf32>
    %96 = math.tanh %95 : vector<8x128xf32>
    %cst_43 = arith.constant 5.000000e-01 : f32
    %97 = vector.broadcast %cst_43 : f32 to vector<8x128xf32>
    %98 = arith.mulf %97, %96 : vector<8x128xf32>
    %cst_44 = arith.constant 5.000000e-01 : f32
    %99 = vector.broadcast %cst_44 : f32 to vector<8x128xf32>
    %100 = arith.addf %98, %99 : vector<8x128xf32>
    %101 = vector.extract_strided_slice %84 {offsets = [0, 256], sizes = [8, 128], strides = [1, 1]} : vector<8x512xf32> to vector<8x128xf32>
    %102 = math.tanh %101 : vector<8x128xf32>
    %103 = vector.extract_strided_slice %84 {offsets = [0, 384], sizes = [8, 128], strides = [1, 1]} : vector<8x512xf32> to vector<8x128xf32>
    %cst_45 = arith.constant 5.000000e-01 : f32
    %104 = vector.broadcast %cst_45 : f32 to vector<8x128xf32>
    %105 = arith.mulf %104, %103 : vector<8x128xf32>
    %106 = math.tanh %105 : vector<8x128xf32>
    %cst_46 = arith.constant 5.000000e-01 : f32
    %107 = vector.broadcast %cst_46 : f32 to vector<8x128xf32>
    %108 = arith.mulf %107, %106 : vector<8x128xf32>
    %cst_47 = arith.constant 5.000000e-01 : f32
    %109 = vector.broadcast %cst_47 : f32 to vector<8x128xf32>
    %110 = arith.addf %108, %109 : vector<8x128xf32>
    %111 = arith.mulf %100, %41 : vector<8x128xf32>
    %112 = arith.mulf %92, %102 : vector<8x128xf32>
    %113 = arith.addf %111, %112 : vector<8x128xf32>
    %114 = math.tanh %113 : vector<8x128xf32>
    %115 = arith.mulf %110, %114 : vector<8x128xf32>
    %116 = tpu.concatenate %115, %80 in 1 : vector<8x128xf32>, vector<8x128xf32> -> vector<8x256xf32>
    %117 = arith.truncf %116 : vector<8x256xf32> to vector<8x256xbf16>
    %cst_48 = arith.constant dense<0.000000e+00> : vector<8x512xf32>
    %118 = tpu.matmul %117, %44, %cst_48 {dimension_numbers = #tpu.dot_dimension_numbers<[1], [0], [0], [1], [0, 0, 1, 1], [], []>} : vector<8x256xbf16>, vector<256x512xbf16>, vector<8x512xf32> -> vector<8x512xf32>
    %119 = vector.broadcast %8 : vector<1x512xf32> to vector<8x512xf32>
    %120 = arith.addf %118, %119 : vector<8x512xf32>
    %121 = vector.extract_strided_slice %120 {offsets = [0, 0], sizes = [8, 128], strides = [1, 1]} : vector<8x512xf32> to vector<8x128xf32>
    %cst_49 = arith.constant 5.000000e-01 : f32
    %122 = vector.broadcast %cst_49 : f32 to vector<8x128xf32>
    %123 = arith.mulf %122, %121 : vector<8x128xf32>
    %124 = math.tanh %123 : vector<8x128xf32>
    %cst_50 = arith.constant 5.000000e-01 : f32
    %125 = vector.broadcast %cst_50 : f32 to vector<8x128xf32>
    %126 = arith.mulf %125, %124 : vector<8x128xf32>
    %cst_51 = arith.constant 5.000000e-01 : f32
    %127 = vector.broadcast %cst_51 : f32 to vector<8x128xf32>
    %128 = arith.addf %126, %127 : vector<8x128xf32>
    %129 = vector.extract_strided_slice %120 {offsets = [0, 128], sizes = [8, 128], strides = [1, 1]} : vector<8x512xf32> to vector<8x128xf32>
    %cst_52 = arith.constant 5.000000e-01 : f32
    %130 = vector.broadcast %cst_52 : f32 to vector<8x128xf32>
    %131 = arith.mulf %130, %129 : vector<8x128xf32>
    %132 = math.tanh %131 : vector<8x128xf32>
    %cst_53 = arith.constant 5.000000e-01 : f32
    %133 = vector.broadcast %cst_53 : f32 to vector<8x128xf32>
    %134 = arith.mulf %133, %132 : vector<8x128xf32>
    %cst_54 = arith.constant 5.000000e-01 : f32
    %135 = vector.broadcast %cst_54 : f32 to vector<8x128xf32>
    %136 = arith.addf %134, %135 : vector<8x128xf32>
    %137 = vector.extract_strided_slice %120 {offsets = [0, 256], sizes = [8, 128], strides = [1, 1]} : vector<8x512xf32> to vector<8x128xf32>
    %138 = math.tanh %137 : vector<8x128xf32>
    %139 = vector.extract_strided_slice %120 {offsets = [0, 384], sizes = [8, 128], strides = [1, 1]} : vector<8x512xf32> to vector<8x128xf32>
    %cst_55 = arith.constant 5.000000e-01 : f32
    %140 = vector.broadcast %cst_55 : f32 to vector<8x128xf32>
    %141 = arith.mulf %140, %139 : vector<8x128xf32>
    %142 = math.tanh %141 : vector<8x128xf32>
    %cst_56 = arith.constant 5.000000e-01 : f32
    %143 = vector.broadcast %cst_56 : f32 to vector<8x128xf32>
    %144 = arith.mulf %143, %142 : vector<8x128xf32>
    %cst_57 = arith.constant 5.000000e-01 : f32
    %145 = vector.broadcast %cst_57 : f32 to vector<8x128xf32>
    %146 = arith.addf %144, %145 : vector<8x128xf32>
    %147 = arith.mulf %136, %78 : vector<8x128xf32>
    %148 = arith.mulf %128, %138 : vector<8x128xf32>
    %149 = arith.addf %147, %148 : vector<8x128xf32>
    %150 = math.tanh %149 : vector<8x128xf32>
    %151 = arith.mulf %146, %150 : vector<8x128xf32>
    %c16 = arith.constant 16 : index
    %c0_58 = arith.constant 0 : index
    %152 = vector.load %arg9[%c16, %c0_58] : memref<64x512xf32, #tpu.memory_space<vmem>>, vector<8x512xf32>
    %153 = arith.truncf %115 : vector<8x128xf32> to vector<8x128xbf16>
    %cst_59 = arith.constant dense<0.000000e+00> : vector<8x512xf32>
    %154 = tpu.matmul %153, %7, %cst_59 {dimension_numbers = #tpu.dot_dimension_numbers<[1], [0], [0], [1], [0, 0, 1, 1], [], []>} : vector<8x128xbf16>, vector<128x512xbf16>, vector<8x512xf32> -> vector<8x512xf32>
    %155 = arith.addf %152, %154 : vector<8x512xf32>
    %156 = vector.extract_strided_slice %155 {offsets = [0, 0], sizes = [8, 128], strides = [1, 1]} : vector<8x512xf32> to vector<8x128xf32>
    %cst_60 = arith.constant 5.000000e-01 : f32
    %157 = vector.broadcast %cst_60 : f32 to vector<8x128xf32>
    %158 = arith.mulf %157, %156 : vector<8x128xf32>
    %159 = math.tanh %158 : vector<8x128xf32>
    %cst_61 = arith.constant 5.000000e-01 : f32
    %160 = vector.broadcast %cst_61 : f32 to vector<8x128xf32>
    %161 = arith.mulf %160, %159 : vector<8x128xf32>
    %cst_62 = arith.constant 5.000000e-01 : f32
    %162 = vector.broadcast %cst_62 : f32 to vector<8x128xf32>
    %163 = arith.addf %161, %162 : vector<8x128xf32>
    %164 = vector.extract_strided_slice %155 {offsets = [0, 128], sizes = [8, 128], strides = [1, 1]} : vector<8x512xf32> to vector<8x128xf32>
    %cst_63 = arith.constant 5.000000e-01 : f32
    %165 = vector.broadcast %cst_63 : f32 to vector<8x128xf32>
    %166 = arith.mulf %165, %164 : vector<8x128xf32>
    %167 = math.tanh %166 : vector<8x128xf32>
    %cst_64 = arith.constant 5.000000e-01 : f32
    %168 = vector.broadcast %cst_64 : f32 to vector<8x128xf32>
    %169 = arith.mulf %168, %167 : vector<8x128xf32>
    %cst_65 = arith.constant 5.000000e-01 : f32
    %170 = vector.broadcast %cst_65 : f32 to vector<8x128xf32>
    %171 = arith.addf %169, %170 : vector<8x128xf32>
    %172 = vector.extract_strided_slice %155 {offsets = [0, 256], sizes = [8, 128], strides = [1, 1]} : vector<8x512xf32> to vector<8x128xf32>
    %173 = math.tanh %172 : vector<8x128xf32>
    %174 = vector.extract_strided_slice %155 {offsets = [0, 384], sizes = [8, 128], strides = [1, 1]} : vector<8x512xf32> to vector<8x128xf32>
    %cst_66 = arith.constant 5.000000e-01 : f32
    %175 = vector.broadcast %cst_66 : f32 to vector<8x128xf32>
    %176 = arith.mulf %175, %174 : vector<8x128xf32>
    %177 = math.tanh %176 : vector<8x128xf32>
    %cst_67 = arith.constant 5.000000e-01 : f32
    %178 = vector.broadcast %cst_67 : f32 to vector<8x128xf32>
    %179 = arith.mulf %178, %177 : vector<8x128xf32>
    %cst_68 = arith.constant 5.000000e-01 : f32
    %180 = vector.broadcast %cst_68 : f32 to vector<8x128xf32>
    %181 = arith.addf %179, %180 : vector<8x128xf32>
    %182 = arith.mulf %171, %113 : vector<8x128xf32>
    %183 = arith.mulf %163, %173 : vector<8x128xf32>
    %184 = arith.addf %182, %183 : vector<8x128xf32>
    %185 = math.tanh %184 : vector<8x128xf32>
    %186 = arith.mulf %181, %185 : vector<8x128xf32>
    %187 = tpu.concatenate %186, %151 in 1 : vector<8x128xf32>, vector<8x128xf32> -> vector<8x256xf32>
    %188 = arith.truncf %187 : vector<8x256xf32> to vector<8x256xbf16>
    %cst_69 = arith.constant dense<0.000000e+00> : vector<8x512xf32>
    %189 = tpu.matmul %188, %44, %cst_69 {dimension_numbers = #tpu.dot_dimension_numbers<[1], [0], [0], [1], [0, 0, 1, 1], [], []>} : vector<8x256xbf16>, vector<256x512xbf16>, vector<8x512xf32> -> vector<8x512xf32>
    %190 = vector.broadcast %8 : vector<1x512xf32> to vector<8x512xf32>
    %191 = arith.addf %189, %190 : vector<8x512xf32>
    %192 = vector.extract_strided_slice %191 {offsets = [0, 0], sizes = [8, 128], strides = [1, 1]} : vector<8x512xf32> to vector<8x128xf32>
    %cst_70 = arith.constant 5.000000e-01 : f32
    %193 = vector.broadcast %cst_70 : f32 to vector<8x128xf32>
    %194 = arith.mulf %193, %192 : vector<8x128xf32>
    %195 = math.tanh %194 : vector<8x128xf32>
    %cst_71 = arith.constant 5.000000e-01 : f32
    %196 = vector.broadcast %cst_71 : f32 to vector<8x128xf32>
    %197 = arith.mulf %196, %195 : vector<8x128xf32>
    %cst_72 = arith.constant 5.000000e-01 : f32
    %198 = vector.broadcast %cst_72 : f32 to vector<8x128xf32>
    %199 = arith.addf %197, %198 : vector<8x128xf32>
    %200 = vector.extract_strided_slice %191 {offsets = [0, 128], sizes = [8, 128], strides = [1, 1]} : vector<8x512xf32> to vector<8x128xf32>
    %cst_73 = arith.constant 5.000000e-01 : f32
    %201 = vector.broadcast %cst_73 : f32 to vector<8x128xf32>
    %202 = arith.mulf %201, %200 : vector<8x128xf32>
    %203 = math.tanh %202 : vector<8x128xf32>
    %cst_74 = arith.constant 5.000000e-01 : f32
    %204 = vector.broadcast %cst_74 : f32 to vector<8x128xf32>
    %205 = arith.mulf %204, %203 : vector<8x128xf32>
    %cst_75 = arith.constant 5.000000e-01 : f32
    %206 = vector.broadcast %cst_75 : f32 to vector<8x128xf32>
    %207 = arith.addf %205, %206 : vector<8x128xf32>
    %208 = vector.extract_strided_slice %191 {offsets = [0, 256], sizes = [8, 128], strides = [1, 1]} : vector<8x512xf32> to vector<8x128xf32>
    %209 = math.tanh %208 : vector<8x128xf32>
    %210 = vector.extract_strided_slice %191 {offsets = [0, 384], sizes = [8, 128], strides = [1, 1]} : vector<8x512xf32> to vector<8x128xf32>
    %cst_76 = arith.constant 5.000000e-01 : f32
    %211 = vector.broadcast %cst_76 : f32 to vector<8x128xf32>
    %212 = arith.mulf %211, %210 : vector<8x128xf32>
    %213 = math.tanh %212 : vector<8x128xf32>
    %cst_77 = arith.constant 5.000000e-01 : f32
    %214 = vector.broadcast %cst_77 : f32 to vector<8x128xf32>
    %215 = arith.mulf %214, %213 : vector<8x128xf32>
    %cst_78 = arith.constant 5.000000e-01 : f32
    %216 = vector.broadcast %cst_78 : f32 to vector<8x128xf32>
    %217 = arith.addf %215, %216 : vector<8x128xf32>
    %218 = arith.mulf %207, %149 : vector<8x128xf32>
    %219 = arith.mulf %199, %209 : vector<8x128xf32>
    %220 = arith.addf %218, %219 : vector<8x128xf32>
    %221 = math.tanh %220 : vector<8x128xf32>
    %222 = arith.mulf %217, %221 : vector<8x128xf32>
    %c24 = arith.constant 24 : index
    %c0_79 = arith.constant 0 : index
    %223 = vector.load %arg9[%c24, %c0_79] : memref<64x512xf32, #tpu.memory_space<vmem>>, vector<8x512xf32>
    %224 = arith.truncf %186 : vector<8x128xf32> to vector<8x128xbf16>
    %cst_80 = arith.constant dense<0.000000e+00> : vector<8x512xf32>
    %225 = tpu.matmul %224, %7, %cst_80 {dimension_numbers = #tpu.dot_dimension_numbers<[1], [0], [0], [1], [0, 0, 1, 1], [], []>} : vector<8x128xbf16>, vector<128x512xbf16>, vector<8x512xf32> -> vector<8x512xf32>
    %226 = arith.addf %223, %225 : vector<8x512xf32>
    %227 = vector.extract_strided_slice %226 {offsets = [0, 0], sizes = [8, 128], strides = [1, 1]} : vector<8x512xf32> to vector<8x128xf32>
    %cst_81 = arith.constant 5.000000e-01 : f32
    %228 = vector.broadcast %cst_81 : f32 to vector<8x128xf32>
    %229 = arith.mulf %228, %227 : vector<8x128xf32>
    %230 = math.tanh %229 : vector<8x128xf32>
    %cst_82 = arith.constant 5.000000e-01 : f32
    %231 = vector.broadcast %cst_82 : f32 to vector<8x128xf32>
    %232 = arith.mulf %231, %230 : vector<8x128xf32>
    %cst_83 = arith.constant 5.000000e-01 : f32
    %233 = vector.broadcast %cst_83 : f32 to vector<8x128xf32>
    %234 = arith.addf %232, %233 : vector<8x128xf32>
    %235 = vector.extract_strided_slice %226 {offsets = [0, 128], sizes = [8, 128], strides = [1, 1]} : vector<8x512xf32> to vector<8x128xf32>
    %cst_84 = arith.constant 5.000000e-01 : f32
    %236 = vector.broadcast %cst_84 : f32 to vector<8x128xf32>
    %237 = arith.mulf %236, %235 : vector<8x128xf32>
    %238 = math.tanh %237 : vector<8x128xf32>
    %cst_85 = arith.constant 5.000000e-01 : f32
    %239 = vector.broadcast %cst_85 : f32 to vector<8x128xf32>
    %240 = arith.mulf %239, %238 : vector<8x128xf32>
    %cst_86 = arith.constant 5.000000e-01 : f32
    %241 = vector.broadcast %cst_86 : f32 to vector<8x128xf32>
    %242 = arith.addf %240, %241 : vector<8x128xf32>
    %243 = vector.extract_strided_slice %226 {offsets = [0, 256], sizes = [8, 128], strides = [1, 1]} : vector<8x512xf32> to vector<8x128xf32>
    %244 = math.tanh %243 : vector<8x128xf32>
    %245 = vector.extract_strided_slice %226 {offsets = [0, 384], sizes = [8, 128], strides = [1, 1]} : vector<8x512xf32> to vector<8x128xf32>
    %cst_87 = arith.constant 5.000000e-01 : f32
    %246 = vector.broadcast %cst_87 : f32 to vector<8x128xf32>
    %247 = arith.mulf %246, %245 : vector<8x128xf32>
    %248 = math.tanh %247 : vector<8x128xf32>
    %cst_88 = arith.constant 5.000000e-01 : f32
    %249 = vector.broadcast %cst_88 : f32 to vector<8x128xf32>
    %250 = arith.mulf %249, %248 : vector<8x128xf32>
    %cst_89 = arith.constant 5.000000e-01 : f32
    %251 = vector.broadcast %cst_89 : f32 to vector<8x128xf32>
    %252 = arith.addf %250, %251 : vector<8x128xf32>
    %253 = arith.mulf %242, %184 : vector<8x128xf32>
    %254 = arith.mulf %234, %244 : vector<8x128xf32>
    %255 = arith.addf %253, %254 : vector<8x128xf32>
    %256 = math.tanh %255 : vector<8x128xf32>
    %257 = arith.mulf %252, %256 : vector<8x128xf32>
    %258 = tpu.concatenate %257, %222 in 1 : vector<8x128xf32>, vector<8x128xf32> -> vector<8x256xf32>
    %259 = arith.truncf %258 : vector<8x256xf32> to vector<8x256xbf16>
    %cst_90 = arith.constant dense<0.000000e+00> : vector<8x512xf32>
    %260 = tpu.matmul %259, %44, %cst_90 {dimension_numbers = #tpu.dot_dimension_numbers<[1], [0], [0], [1], [0, 0, 1, 1], [], []>} : vector<8x256xbf16>, vector<256x512xbf16>, vector<8x512xf32> -> vector<8x512xf32>
    %261 = vector.broadcast %8 : vector<1x512xf32> to vector<8x512xf32>
    %262 = arith.addf %260, %261 : vector<8x512xf32>
    %263 = vector.extract_strided_slice %262 {offsets = [0, 0], sizes = [8, 128], strides = [1, 1]} : vector<8x512xf32> to vector<8x128xf32>
    %cst_91 = arith.constant 5.000000e-01 : f32
    %264 = vector.broadcast %cst_91 : f32 to vector<8x128xf32>
    %265 = arith.mulf %264, %263 : vector<8x128xf32>
    %266 = math.tanh %265 : vector<8x128xf32>
    %cst_92 = arith.constant 5.000000e-01 : f32
    %267 = vector.broadcast %cst_92 : f32 to vector<8x128xf32>
    %268 = arith.mulf %267, %266 : vector<8x128xf32>
    %cst_93 = arith.constant 5.000000e-01 : f32
    %269 = vector.broadcast %cst_93 : f32 to vector<8x128xf32>
    %270 = arith.addf %268, %269 : vector<8x128xf32>
    %271 = vector.extract_strided_slice %262 {offsets = [0, 128], sizes = [8, 128], strides = [1, 1]} : vector<8x512xf32> to vector<8x128xf32>
    %cst_94 = arith.constant 5.000000e-01 : f32
    %272 = vector.broadcast %cst_94 : f32 to vector<8x128xf32>
    %273 = arith.mulf %272, %271 : vector<8x128xf32>
    %274 = math.tanh %273 : vector<8x128xf32>
    %cst_95 = arith.constant 5.000000e-01 : f32
    %275 = vector.broadcast %cst_95 : f32 to vector<8x128xf32>
    %276 = arith.mulf %275, %274 : vector<8x128xf32>
    %cst_96 = arith.constant 5.000000e-01 : f32
    %277 = vector.broadcast %cst_96 : f32 to vector<8x128xf32>
    %278 = arith.addf %276, %277 : vector<8x128xf32>
    %279 = vector.extract_strided_slice %262 {offsets = [0, 256], sizes = [8, 128], strides = [1, 1]} : vector<8x512xf32> to vector<8x128xf32>
    %280 = math.tanh %279 : vector<8x128xf32>
    %281 = vector.extract_strided_slice %262 {offsets = [0, 384], sizes = [8, 128], strides = [1, 1]} : vector<8x512xf32> to vector<8x128xf32>
    %cst_97 = arith.constant 5.000000e-01 : f32
    %282 = vector.broadcast %cst_97 : f32 to vector<8x128xf32>
    %283 = arith.mulf %282, %281 : vector<8x128xf32>
    %284 = math.tanh %283 : vector<8x128xf32>
    %cst_98 = arith.constant 5.000000e-01 : f32
    %285 = vector.broadcast %cst_98 : f32 to vector<8x128xf32>
    %286 = arith.mulf %285, %284 : vector<8x128xf32>
    %cst_99 = arith.constant 5.000000e-01 : f32
    %287 = vector.broadcast %cst_99 : f32 to vector<8x128xf32>
    %288 = arith.addf %286, %287 : vector<8x128xf32>
    %289 = arith.mulf %278, %220 : vector<8x128xf32>
    %290 = arith.mulf %270, %280 : vector<8x128xf32>
    %291 = arith.addf %289, %290 : vector<8x128xf32>
    %292 = math.tanh %291 : vector<8x128xf32>
    %293 = arith.mulf %288, %292 : vector<8x128xf32>
    %c32 = arith.constant 32 : index
    %c0_100 = arith.constant 0 : index
    %294 = vector.load %arg9[%c32, %c0_100] : memref<64x512xf32, #tpu.memory_space<vmem>>, vector<8x512xf32>
    %295 = arith.truncf %257 : vector<8x128xf32> to vector<8x128xbf16>
    %cst_101 = arith.constant dense<0.000000e+00> : vector<8x512xf32>
    %296 = tpu.matmul %295, %7, %cst_101 {dimension_numbers = #tpu.dot_dimension_numbers<[1], [0], [0], [1], [0, 0, 1, 1], [], []>} : vector<8x128xbf16>, vector<128x512xbf16>, vector<8x512xf32> -> vector<8x512xf32>
    %297 = arith.addf %294, %296 : vector<8x512xf32>
    %298 = vector.extract_strided_slice %297 {offsets = [0, 0], sizes = [8, 128], strides = [1, 1]} : vector<8x512xf32> to vector<8x128xf32>
    %cst_102 = arith.constant 5.000000e-01 : f32
    %299 = vector.broadcast %cst_102 : f32 to vector<8x128xf32>
    %300 = arith.mulf %299, %298 : vector<8x128xf32>
    %301 = math.tanh %300 : vector<8x128xf32>
    %cst_103 = arith.constant 5.000000e-01 : f32
    %302 = vector.broadcast %cst_103 : f32 to vector<8x128xf32>
    %303 = arith.mulf %302, %301 : vector<8x128xf32>
    %cst_104 = arith.constant 5.000000e-01 : f32
    %304 = vector.broadcast %cst_104 : f32 to vector<8x128xf32>
    %305 = arith.addf %303, %304 : vector<8x128xf32>
    %306 = vector.extract_strided_slice %297 {offsets = [0, 128], sizes = [8, 128], strides = [1, 1]} : vector<8x512xf32> to vector<8x128xf32>
    %cst_105 = arith.constant 5.000000e-01 : f32
    %307 = vector.broadcast %cst_105 : f32 to vector<8x128xf32>
    %308 = arith.mulf %307, %306 : vector<8x128xf32>
    %309 = math.tanh %308 : vector<8x128xf32>
    %cst_106 = arith.constant 5.000000e-01 : f32
    %310 = vector.broadcast %cst_106 : f32 to vector<8x128xf32>
    %311 = arith.mulf %310, %309 : vector<8x128xf32>
    %cst_107 = arith.constant 5.000000e-01 : f32
    %312 = vector.broadcast %cst_107 : f32 to vector<8x128xf32>
    %313 = arith.addf %311, %312 : vector<8x128xf32>
    %314 = vector.extract_strided_slice %297 {offsets = [0, 256], sizes = [8, 128], strides = [1, 1]} : vector<8x512xf32> to vector<8x128xf32>
    %315 = math.tanh %314 : vector<8x128xf32>
    %316 = vector.extract_strided_slice %297 {offsets = [0, 384], sizes = [8, 128], strides = [1, 1]} : vector<8x512xf32> to vector<8x128xf32>
    %cst_108 = arith.constant 5.000000e-01 : f32
    %317 = vector.broadcast %cst_108 : f32 to vector<8x128xf32>
    %318 = arith.mulf %317, %316 : vector<8x128xf32>
    %319 = math.tanh %318 : vector<8x128xf32>
    %cst_109 = arith.constant 5.000000e-01 : f32
    %320 = vector.broadcast %cst_109 : f32 to vector<8x128xf32>
    %321 = arith.mulf %320, %319 : vector<8x128xf32>
    %cst_110 = arith.constant 5.000000e-01 : f32
    %322 = vector.broadcast %cst_110 : f32 to vector<8x128xf32>
    %323 = arith.addf %321, %322 : vector<8x128xf32>
    %324 = arith.mulf %313, %255 : vector<8x128xf32>
    %325 = arith.mulf %305, %315 : vector<8x128xf32>
    %326 = arith.addf %324, %325 : vector<8x128xf32>
    %327 = math.tanh %326 : vector<8x128xf32>
    %328 = arith.mulf %323, %327 : vector<8x128xf32>
    %329 = tpu.concatenate %328, %293 in 1 : vector<8x128xf32>, vector<8x128xf32> -> vector<8x256xf32>
    %330 = arith.truncf %329 : vector<8x256xf32> to vector<8x256xbf16>
    %cst_111 = arith.constant dense<0.000000e+00> : vector<8x512xf32>
    %331 = tpu.matmul %330, %44, %cst_111 {dimension_numbers = #tpu.dot_dimension_numbers<[1], [0], [0], [1], [0, 0, 1, 1], [], []>} : vector<8x256xbf16>, vector<256x512xbf16>, vector<8x512xf32> -> vector<8x512xf32>
    %332 = vector.broadcast %8 : vector<1x512xf32> to vector<8x512xf32>
    %333 = arith.addf %331, %332 : vector<8x512xf32>
    %334 = vector.extract_strided_slice %333 {offsets = [0, 0], sizes = [8, 128], strides = [1, 1]} : vector<8x512xf32> to vector<8x128xf32>
    %cst_112 = arith.constant 5.000000e-01 : f32
    %335 = vector.broadcast %cst_112 : f32 to vector<8x128xf32>
    %336 = arith.mulf %335, %334 : vector<8x128xf32>
    %337 = math.tanh %336 : vector<8x128xf32>
    %cst_113 = arith.constant 5.000000e-01 : f32
    %338 = vector.broadcast %cst_113 : f32 to vector<8x128xf32>
    %339 = arith.mulf %338, %337 : vector<8x128xf32>
    %cst_114 = arith.constant 5.000000e-01 : f32
    %340 = vector.broadcast %cst_114 : f32 to vector<8x128xf32>
    %341 = arith.addf %339, %340 : vector<8x128xf32>
    %342 = vector.extract_strided_slice %333 {offsets = [0, 128], sizes = [8, 128], strides = [1, 1]} : vector<8x512xf32> to vector<8x128xf32>
    %cst_115 = arith.constant 5.000000e-01 : f32
    %343 = vector.broadcast %cst_115 : f32 to vector<8x128xf32>
    %344 = arith.mulf %343, %342 : vector<8x128xf32>
    %345 = math.tanh %344 : vector<8x128xf32>
    %cst_116 = arith.constant 5.000000e-01 : f32
    %346 = vector.broadcast %cst_116 : f32 to vector<8x128xf32>
    %347 = arith.mulf %346, %345 : vector<8x128xf32>
    %cst_117 = arith.constant 5.000000e-01 : f32
    %348 = vector.broadcast %cst_117 : f32 to vector<8x128xf32>
    %349 = arith.addf %347, %348 : vector<8x128xf32>
    %350 = vector.extract_strided_slice %333 {offsets = [0, 256], sizes = [8, 128], strides = [1, 1]} : vector<8x512xf32> to vector<8x128xf32>
    %351 = math.tanh %350 : vector<8x128xf32>
    %352 = vector.extract_strided_slice %333 {offsets = [0, 384], sizes = [8, 128], strides = [1, 1]} : vector<8x512xf32> to vector<8x128xf32>
    %cst_118 = arith.constant 5.000000e-01 : f32
    %353 = vector.broadcast %cst_118 : f32 to vector<8x128xf32>
    %354 = arith.mulf %353, %352 : vector<8x128xf32>
    %355 = math.tanh %354 : vector<8x128xf32>
    %cst_119 = arith.constant 5.000000e-01 : f32
    %356 = vector.broadcast %cst_119 : f32 to vector<8x128xf32>
    %357 = arith.mulf %356, %355 : vector<8x128xf32>
    %cst_120 = arith.constant 5.000000e-01 : f32
    %358 = vector.broadcast %cst_120 : f32 to vector<8x128xf32>
    %359 = arith.addf %357, %358 : vector<8x128xf32>
    %360 = arith.mulf %349, %291 : vector<8x128xf32>
    %361 = arith.mulf %341, %351 : vector<8x128xf32>
    %362 = arith.addf %360, %361 : vector<8x128xf32>
    %363 = math.tanh %362 : vector<8x128xf32>
    %364 = arith.mulf %359, %363 : vector<8x128xf32>
    %c40 = arith.constant 40 : index
    %c0_121 = arith.constant 0 : index
    %365 = vector.load %arg9[%c40, %c0_121] : memref<64x512xf32, #tpu.memory_space<vmem>>, vector<8x512xf32>
    %366 = arith.truncf %328 : vector<8x128xf32> to vector<8x128xbf16>
    %cst_122 = arith.constant dense<0.000000e+00> : vector<8x512xf32>
    %367 = tpu.matmul %366, %7, %cst_122 {dimension_numbers = #tpu.dot_dimension_numbers<[1], [0], [0], [1], [0, 0, 1, 1], [], []>} : vector<8x128xbf16>, vector<128x512xbf16>, vector<8x512xf32> -> vector<8x512xf32>
    %368 = arith.addf %365, %367 : vector<8x512xf32>
    %369 = vector.extract_strided_slice %368 {offsets = [0, 0], sizes = [8, 128], strides = [1, 1]} : vector<8x512xf32> to vector<8x128xf32>
    %cst_123 = arith.constant 5.000000e-01 : f32
    %370 = vector.broadcast %cst_123 : f32 to vector<8x128xf32>
    %371 = arith.mulf %370, %369 : vector<8x128xf32>
    %372 = math.tanh %371 : vector<8x128xf32>
    %cst_124 = arith.constant 5.000000e-01 : f32
    %373 = vector.broadcast %cst_124 : f32 to vector<8x128xf32>
    %374 = arith.mulf %373, %372 : vector<8x128xf32>
    %cst_125 = arith.constant 5.000000e-01 : f32
    %375 = vector.broadcast %cst_125 : f32 to vector<8x128xf32>
    %376 = arith.addf %374, %375 : vector<8x128xf32>
    %377 = vector.extract_strided_slice %368 {offsets = [0, 128], sizes = [8, 128], strides = [1, 1]} : vector<8x512xf32> to vector<8x128xf32>
    %cst_126 = arith.constant 5.000000e-01 : f32
    %378 = vector.broadcast %cst_126 : f32 to vector<8x128xf32>
    %379 = arith.mulf %378, %377 : vector<8x128xf32>
    %380 = math.tanh %379 : vector<8x128xf32>
    %cst_127 = arith.constant 5.000000e-01 : f32
    %381 = vector.broadcast %cst_127 : f32 to vector<8x128xf32>
    %382 = arith.mulf %381, %380 : vector<8x128xf32>
    %cst_128 = arith.constant 5.000000e-01 : f32
    %383 = vector.broadcast %cst_128 : f32 to vector<8x128xf32>
    %384 = arith.addf %382, %383 : vector<8x128xf32>
    %385 = vector.extract_strided_slice %368 {offsets = [0, 256], sizes = [8, 128], strides = [1, 1]} : vector<8x512xf32> to vector<8x128xf32>
    %386 = math.tanh %385 : vector<8x128xf32>
    %387 = vector.extract_strided_slice %368 {offsets = [0, 384], sizes = [8, 128], strides = [1, 1]} : vector<8x512xf32> to vector<8x128xf32>
    %cst_129 = arith.constant 5.000000e-01 : f32
    %388 = vector.broadcast %cst_129 : f32 to vector<8x128xf32>
    %389 = arith.mulf %388, %387 : vector<8x128xf32>
    %390 = math.tanh %389 : vector<8x128xf32>
    %cst_130 = arith.constant 5.000000e-01 : f32
    %391 = vector.broadcast %cst_130 : f32 to vector<8x128xf32>
    %392 = arith.mulf %391, %390 : vector<8x128xf32>
    %cst_131 = arith.constant 5.000000e-01 : f32
    %393 = vector.broadcast %cst_131 : f32 to vector<8x128xf32>
    %394 = arith.addf %392, %393 : vector<8x128xf32>
    %395 = arith.mulf %384, %326 : vector<8x128xf32>
    %396 = arith.mulf %376, %386 : vector<8x128xf32>
    %397 = arith.addf %395, %396 : vector<8x128xf32>
    %398 = math.tanh %397 : vector<8x128xf32>
    %399 = arith.mulf %394, %398 : vector<8x128xf32>
    %400 = tpu.concatenate %399, %364 in 1 : vector<8x128xf32>, vector<8x128xf32> -> vector<8x256xf32>
    %401 = arith.truncf %400 : vector<8x256xf32> to vector<8x256xbf16>
    %cst_132 = arith.constant dense<0.000000e+00> : vector<8x512xf32>
    %402 = tpu.matmul %401, %44, %cst_132 {dimension_numbers = #tpu.dot_dimension_numbers<[1], [0], [0], [1], [0, 0, 1, 1], [], []>} : vector<8x256xbf16>, vector<256x512xbf16>, vector<8x512xf32> -> vector<8x512xf32>
    %403 = vector.broadcast %8 : vector<1x512xf32> to vector<8x512xf32>
    %404 = arith.addf %402, %403 : vector<8x512xf32>
    %405 = vector.extract_strided_slice %404 {offsets = [0, 0], sizes = [8, 128], strides = [1, 1]} : vector<8x512xf32> to vector<8x128xf32>
    %cst_133 = arith.constant 5.000000e-01 : f32
    %406 = vector.broadcast %cst_133 : f32 to vector<8x128xf32>
    %407 = arith.mulf %406, %405 : vector<8x128xf32>
    %408 = math.tanh %407 : vector<8x128xf32>
    %cst_134 = arith.constant 5.000000e-01 : f32
    %409 = vector.broadcast %cst_134 : f32 to vector<8x128xf32>
    %410 = arith.mulf %409, %408 : vector<8x128xf32>
    %cst_135 = arith.constant 5.000000e-01 : f32
    %411 = vector.broadcast %cst_135 : f32 to vector<8x128xf32>
    %412 = arith.addf %410, %411 : vector<8x128xf32>
    %413 = vector.extract_strided_slice %404 {offsets = [0, 128], sizes = [8, 128], strides = [1, 1]} : vector<8x512xf32> to vector<8x128xf32>
    %cst_136 = arith.constant 5.000000e-01 : f32
    %414 = vector.broadcast %cst_136 : f32 to vector<8x128xf32>
    %415 = arith.mulf %414, %413 : vector<8x128xf32>
    %416 = math.tanh %415 : vector<8x128xf32>
    %cst_137 = arith.constant 5.000000e-01 : f32
    %417 = vector.broadcast %cst_137 : f32 to vector<8x128xf32>
    %418 = arith.mulf %417, %416 : vector<8x128xf32>
    %cst_138 = arith.constant 5.000000e-01 : f32
    %419 = vector.broadcast %cst_138 : f32 to vector<8x128xf32>
    %420 = arith.addf %418, %419 : vector<8x128xf32>
    %421 = vector.extract_strided_slice %404 {offsets = [0, 256], sizes = [8, 128], strides = [1, 1]} : vector<8x512xf32> to vector<8x128xf32>
    %422 = math.tanh %421 : vector<8x128xf32>
    %423 = vector.extract_strided_slice %404 {offsets = [0, 384], sizes = [8, 128], strides = [1, 1]} : vector<8x512xf32> to vector<8x128xf32>
    %cst_139 = arith.constant 5.000000e-01 : f32
    %424 = vector.broadcast %cst_139 : f32 to vector<8x128xf32>
    %425 = arith.mulf %424, %423 : vector<8x128xf32>
    %426 = math.tanh %425 : vector<8x128xf32>
    %cst_140 = arith.constant 5.000000e-01 : f32
    %427 = vector.broadcast %cst_140 : f32 to vector<8x128xf32>
    %428 = arith.mulf %427, %426 : vector<8x128xf32>
    %cst_141 = arith.constant 5.000000e-01 : f32
    %429 = vector.broadcast %cst_141 : f32 to vector<8x128xf32>
    %430 = arith.addf %428, %429 : vector<8x128xf32>
    %431 = arith.mulf %420, %362 : vector<8x128xf32>
    %432 = arith.mulf %412, %422 : vector<8x128xf32>
    %433 = arith.addf %431, %432 : vector<8x128xf32>
    %434 = math.tanh %433 : vector<8x128xf32>
    %435 = arith.mulf %430, %434 : vector<8x128xf32>
    %c48 = arith.constant 48 : index
    %c0_142 = arith.constant 0 : index
    %436 = vector.load %arg9[%c48, %c0_142] : memref<64x512xf32, #tpu.memory_space<vmem>>, vector<8x512xf32>
    %437 = arith.truncf %399 : vector<8x128xf32> to vector<8x128xbf16>
    %cst_143 = arith.constant dense<0.000000e+00> : vector<8x512xf32>
    %438 = tpu.matmul %437, %7, %cst_143 {dimension_numbers = #tpu.dot_dimension_numbers<[1], [0], [0], [1], [0, 0, 1, 1], [], []>} : vector<8x128xbf16>, vector<128x512xbf16>, vector<8x512xf32> -> vector<8x512xf32>
    %439 = arith.addf %436, %438 : vector<8x512xf32>
    %440 = vector.extract_strided_slice %439 {offsets = [0, 0], sizes = [8, 128], strides = [1, 1]} : vector<8x512xf32> to vector<8x128xf32>
    %cst_144 = arith.constant 5.000000e-01 : f32
    %441 = vector.broadcast %cst_144 : f32 to vector<8x128xf32>
    %442 = arith.mulf %441, %440 : vector<8x128xf32>
    %443 = math.tanh %442 : vector<8x128xf32>
    %cst_145 = arith.constant 5.000000e-01 : f32
    %444 = vector.broadcast %cst_145 : f32 to vector<8x128xf32>
    %445 = arith.mulf %444, %443 : vector<8x128xf32>
    %cst_146 = arith.constant 5.000000e-01 : f32
    %446 = vector.broadcast %cst_146 : f32 to vector<8x128xf32>
    %447 = arith.addf %445, %446 : vector<8x128xf32>
    %448 = vector.extract_strided_slice %439 {offsets = [0, 128], sizes = [8, 128], strides = [1, 1]} : vector<8x512xf32> to vector<8x128xf32>
    %cst_147 = arith.constant 5.000000e-01 : f32
    %449 = vector.broadcast %cst_147 : f32 to vector<8x128xf32>
    %450 = arith.mulf %449, %448 : vector<8x128xf32>
    %451 = math.tanh %450 : vector<8x128xf32>
    %cst_148 = arith.constant 5.000000e-01 : f32
    %452 = vector.broadcast %cst_148 : f32 to vector<8x128xf32>
    %453 = arith.mulf %452, %451 : vector<8x128xf32>
    %cst_149 = arith.constant 5.000000e-01 : f32
    %454 = vector.broadcast %cst_149 : f32 to vector<8x128xf32>
    %455 = arith.addf %453, %454 : vector<8x128xf32>
    %456 = vector.extract_strided_slice %439 {offsets = [0, 256], sizes = [8, 128], strides = [1, 1]} : vector<8x512xf32> to vector<8x128xf32>
    %457 = math.tanh %456 : vector<8x128xf32>
    %458 = vector.extract_strided_slice %439 {offsets = [0, 384], sizes = [8, 128], strides = [1, 1]} : vector<8x512xf32> to vector<8x128xf32>
    %cst_150 = arith.constant 5.000000e-01 : f32
    %459 = vector.broadcast %cst_150 : f32 to vector<8x128xf32>
    %460 = arith.mulf %459, %458 : vector<8x128xf32>
    %461 = math.tanh %460 : vector<8x128xf32>
    %cst_151 = arith.constant 5.000000e-01 : f32
    %462 = vector.broadcast %cst_151 : f32 to vector<8x128xf32>
    %463 = arith.mulf %462, %461 : vector<8x128xf32>
    %cst_152 = arith.constant 5.000000e-01 : f32
    %464 = vector.broadcast %cst_152 : f32 to vector<8x128xf32>
    %465 = arith.addf %463, %464 : vector<8x128xf32>
    %466 = arith.mulf %455, %397 : vector<8x128xf32>
    %467 = arith.mulf %447, %457 : vector<8x128xf32>
    %468 = arith.addf %466, %467 : vector<8x128xf32>
    %469 = math.tanh %468 : vector<8x128xf32>
    %470 = arith.mulf %465, %469 : vector<8x128xf32>
    %471 = tpu.concatenate %470, %435 in 1 : vector<8x128xf32>, vector<8x128xf32> -> vector<8x256xf32>
    %472 = arith.truncf %471 : vector<8x256xf32> to vector<8x256xbf16>
    %cst_153 = arith.constant dense<0.000000e+00> : vector<8x512xf32>
    %473 = tpu.matmul %472, %44, %cst_153 {dimension_numbers = #tpu.dot_dimension_numbers<[1], [0], [0], [1], [0, 0, 1, 1], [], []>} : vector<8x256xbf16>, vector<256x512xbf16>, vector<8x512xf32> -> vector<8x512xf32>
    %474 = vector.broadcast %8 : vector<1x512xf32> to vector<8x512xf32>
    %475 = arith.addf %473, %474 : vector<8x512xf32>
    %476 = vector.extract_strided_slice %475 {offsets = [0, 0], sizes = [8, 128], strides = [1, 1]} : vector<8x512xf32> to vector<8x128xf32>
    %cst_154 = arith.constant 5.000000e-01 : f32
    %477 = vector.broadcast %cst_154 : f32 to vector<8x128xf32>
    %478 = arith.mulf %477, %476 : vector<8x128xf32>
    %479 = math.tanh %478 : vector<8x128xf32>
    %cst_155 = arith.constant 5.000000e-01 : f32
    %480 = vector.broadcast %cst_155 : f32 to vector<8x128xf32>
    %481 = arith.mulf %480, %479 : vector<8x128xf32>
    %cst_156 = arith.constant 5.000000e-01 : f32
    %482 = vector.broadcast %cst_156 : f32 to vector<8x128xf32>
    %483 = arith.addf %481, %482 : vector<8x128xf32>
    %484 = vector.extract_strided_slice %475 {offsets = [0, 128], sizes = [8, 128], strides = [1, 1]} : vector<8x512xf32> to vector<8x128xf32>
    %cst_157 = arith.constant 5.000000e-01 : f32
    %485 = vector.broadcast %cst_157 : f32 to vector<8x128xf32>
    %486 = arith.mulf %485, %484 : vector<8x128xf32>
    %487 = math.tanh %486 : vector<8x128xf32>
    %cst_158 = arith.constant 5.000000e-01 : f32
    %488 = vector.broadcast %cst_158 : f32 to vector<8x128xf32>
    %489 = arith.mulf %488, %487 : vector<8x128xf32>
    %cst_159 = arith.constant 5.000000e-01 : f32
    %490 = vector.broadcast %cst_159 : f32 to vector<8x128xf32>
    %491 = arith.addf %489, %490 : vector<8x128xf32>
    %492 = vector.extract_strided_slice %475 {offsets = [0, 256], sizes = [8, 128], strides = [1, 1]} : vector<8x512xf32> to vector<8x128xf32>
    %493 = math.tanh %492 : vector<8x128xf32>
    %494 = vector.extract_strided_slice %475 {offsets = [0, 384], sizes = [8, 128], strides = [1, 1]} : vector<8x512xf32> to vector<8x128xf32>
    %cst_160 = arith.constant 5.000000e-01 : f32
    %495 = vector.broadcast %cst_160 : f32 to vector<8x128xf32>
    %496 = arith.mulf %495, %494 : vector<8x128xf32>
    %497 = math.tanh %496 : vector<8x128xf32>
    %cst_161 = arith.constant 5.000000e-01 : f32
    %498 = vector.broadcast %cst_161 : f32 to vector<8x128xf32>
    %499 = arith.mulf %498, %497 : vector<8x128xf32>
    %cst_162 = arith.constant 5.000000e-01 : f32
    %500 = vector.broadcast %cst_162 : f32 to vector<8x128xf32>
    %501 = arith.addf %499, %500 : vector<8x128xf32>
    %502 = arith.mulf %491, %433 : vector<8x128xf32>
    %503 = arith.mulf %483, %493 : vector<8x128xf32>
    %504 = arith.addf %502, %503 : vector<8x128xf32>
    %505 = math.tanh %504 : vector<8x128xf32>
    %506 = arith.mulf %501, %505 : vector<8x128xf32>
    %c56 = arith.constant 56 : index
    %c0_163 = arith.constant 0 : index
    %507 = vector.load %arg9[%c56, %c0_163] : memref<64x512xf32, #tpu.memory_space<vmem>>, vector<8x512xf32>
    %508 = arith.truncf %470 : vector<8x128xf32> to vector<8x128xbf16>
    %cst_164 = arith.constant dense<0.000000e+00> : vector<8x512xf32>
    %509 = tpu.matmul %508, %7, %cst_164 {dimension_numbers = #tpu.dot_dimension_numbers<[1], [0], [0], [1], [0, 0, 1, 1], [], []>} : vector<8x128xbf16>, vector<128x512xbf16>, vector<8x512xf32> -> vector<8x512xf32>
    %510 = arith.addf %507, %509 : vector<8x512xf32>
    %511 = vector.extract_strided_slice %510 {offsets = [0, 0], sizes = [8, 128], strides = [1, 1]} : vector<8x512xf32> to vector<8x128xf32>
    %cst_165 = arith.constant 5.000000e-01 : f32
    %512 = vector.broadcast %cst_165 : f32 to vector<8x128xf32>
    %513 = arith.mulf %512, %511 : vector<8x128xf32>
    %514 = math.tanh %513 : vector<8x128xf32>
    %cst_166 = arith.constant 5.000000e-01 : f32
    %515 = vector.broadcast %cst_166 : f32 to vector<8x128xf32>
    %516 = arith.mulf %515, %514 : vector<8x128xf32>
    %cst_167 = arith.constant 5.000000e-01 : f32
    %517 = vector.broadcast %cst_167 : f32 to vector<8x128xf32>
    %518 = arith.addf %516, %517 : vector<8x128xf32>
    %519 = vector.extract_strided_slice %510 {offsets = [0, 128], sizes = [8, 128], strides = [1, 1]} : vector<8x512xf32> to vector<8x128xf32>
    %cst_168 = arith.constant 5.000000e-01 : f32
    %520 = vector.broadcast %cst_168 : f32 to vector<8x128xf32>
    %521 = arith.mulf %520, %519 : vector<8x128xf32>
    %522 = math.tanh %521 : vector<8x128xf32>
    %cst_169 = arith.constant 5.000000e-01 : f32
    %523 = vector.broadcast %cst_169 : f32 to vector<8x128xf32>
    %524 = arith.mulf %523, %522 : vector<8x128xf32>
    %cst_170 = arith.constant 5.000000e-01 : f32
    %525 = vector.broadcast %cst_170 : f32 to vector<8x128xf32>
    %526 = arith.addf %524, %525 : vector<8x128xf32>
    %527 = vector.extract_strided_slice %510 {offsets = [0, 256], sizes = [8, 128], strides = [1, 1]} : vector<8x512xf32> to vector<8x128xf32>
    %528 = math.tanh %527 : vector<8x128xf32>
    %529 = vector.extract_strided_slice %510 {offsets = [0, 384], sizes = [8, 128], strides = [1, 1]} : vector<8x512xf32> to vector<8x128xf32>
    %cst_171 = arith.constant 5.000000e-01 : f32
    %530 = vector.broadcast %cst_171 : f32 to vector<8x128xf32>
    %531 = arith.mulf %530, %529 : vector<8x128xf32>
    %532 = math.tanh %531 : vector<8x128xf32>
    %cst_172 = arith.constant 5.000000e-01 : f32
    %533 = vector.broadcast %cst_172 : f32 to vector<8x128xf32>
    %534 = arith.mulf %533, %532 : vector<8x128xf32>
    %cst_173 = arith.constant 5.000000e-01 : f32
    %535 = vector.broadcast %cst_173 : f32 to vector<8x128xf32>
    %536 = arith.addf %534, %535 : vector<8x128xf32>
    %537 = arith.mulf %526, %468 : vector<8x128xf32>
    %538 = arith.mulf %518, %528 : vector<8x128xf32>
    %539 = arith.addf %537, %538 : vector<8x128xf32>
    %540 = math.tanh %539 : vector<8x128xf32>
    %541 = arith.mulf %536, %540 : vector<8x128xf32>
    %542 = tpu.concatenate %541, %506 in 1 : vector<8x128xf32>, vector<8x128xf32> -> vector<8x256xf32>
    %543 = arith.truncf %542 : vector<8x256xf32> to vector<8x256xbf16>
    %cst_174 = arith.constant dense<0.000000e+00> : vector<8x512xf32>
    %544 = tpu.matmul %543, %44, %cst_174 {dimension_numbers = #tpu.dot_dimension_numbers<[1], [0], [0], [1], [0, 0, 1, 1], [], []>} : vector<8x256xbf16>, vector<256x512xbf16>, vector<8x512xf32> -> vector<8x512xf32>
    %545 = vector.broadcast %8 : vector<1x512xf32> to vector<8x512xf32>
    %546 = arith.addf %544, %545 : vector<8x512xf32>
    %547 = vector.extract_strided_slice %546 {offsets = [0, 0], sizes = [8, 128], strides = [1, 1]} : vector<8x512xf32> to vector<8x128xf32>
    %cst_175 = arith.constant 5.000000e-01 : f32
    %548 = vector.broadcast %cst_175 : f32 to vector<8x128xf32>
    %549 = arith.mulf %548, %547 : vector<8x128xf32>
    %550 = math.tanh %549 : vector<8x128xf32>
    %cst_176 = arith.constant 5.000000e-01 : f32
    %551 = vector.broadcast %cst_176 : f32 to vector<8x128xf32>
    %552 = arith.mulf %551, %550 : vector<8x128xf32>
    %cst_177 = arith.constant 5.000000e-01 : f32
    %553 = vector.broadcast %cst_177 : f32 to vector<8x128xf32>
    %554 = arith.addf %552, %553 : vector<8x128xf32>
    %555 = vector.extract_strided_slice %546 {offsets = [0, 128], sizes = [8, 128], strides = [1, 1]} : vector<8x512xf32> to vector<8x128xf32>
    %cst_178 = arith.constant 5.000000e-01 : f32
    %556 = vector.broadcast %cst_178 : f32 to vector<8x128xf32>
    %557 = arith.mulf %556, %555 : vector<8x128xf32>
    %558 = math.tanh %557 : vector<8x128xf32>
    %cst_179 = arith.constant 5.000000e-01 : f32
    %559 = vector.broadcast %cst_179 : f32 to vector<8x128xf32>
    %560 = arith.mulf %559, %558 : vector<8x128xf32>
    %cst_180 = arith.constant 5.000000e-01 : f32
    %561 = vector.broadcast %cst_180 : f32 to vector<8x128xf32>
    %562 = arith.addf %560, %561 : vector<8x128xf32>
    %563 = vector.extract_strided_slice %546 {offsets = [0, 256], sizes = [8, 128], strides = [1, 1]} : vector<8x512xf32> to vector<8x128xf32>
    %564 = math.tanh %563 : vector<8x128xf32>
    %565 = vector.extract_strided_slice %546 {offsets = [0, 384], sizes = [8, 128], strides = [1, 1]} : vector<8x512xf32> to vector<8x128xf32>
    %cst_181 = arith.constant 5.000000e-01 : f32
    %566 = vector.broadcast %cst_181 : f32 to vector<8x128xf32>
    %567 = arith.mulf %566, %565 : vector<8x128xf32>
    %568 = math.tanh %567 : vector<8x128xf32>
    %cst_182 = arith.constant 5.000000e-01 : f32
    %569 = vector.broadcast %cst_182 : f32 to vector<8x128xf32>
    %570 = arith.mulf %569, %568 : vector<8x128xf32>
    %cst_183 = arith.constant 5.000000e-01 : f32
    %571 = vector.broadcast %cst_183 : f32 to vector<8x128xf32>
    %572 = arith.addf %570, %571 : vector<8x128xf32>
    %573 = arith.mulf %562, %504 : vector<8x128xf32>
    %574 = arith.mulf %554, %564 : vector<8x128xf32>
    %575 = arith.addf %573, %574 : vector<8x128xf32>
    %576 = math.tanh %575 : vector<8x128xf32>
    %577 = arith.mulf %572, %576 : vector<8x128xf32>
    %c0_184 = arith.constant 0 : index
    %c0_185 = arith.constant 0 : index
    %578 = vector.load %arg6[%c0_184, %c0_185] : memref<8x128xf32, #tpu.memory_space<vmem>>, vector<8x128xf32>
    tpu.vector_store %arg6[%c0_184, %c0_185], %577 {strides = array<i32>} : memref<8x128xf32, #tpu.memory_space<vmem>>, vector<8x128xf32>,
    return
  }
}

</mosaic_0001>

<llo_original>
// kernel: encoder_forward.1
$region0: #{encoder_forward.1}
  #allocation0 [shape = 'u32[]', space=smem, size = 0x4, offset = 0x4, fixed_abs, tag = 'smem constant byte address 0x4 - core index']
  #allocation1 [shape = 'u32[144,128]{1,0:T(1,128)}', space=vmem, size = 0x12000, scoped, tag = 'internal scratch']
  #allocation2 [shape = 'bf16[256,512]{1,0:T(8,128)(2,1)}', space=vmem, size = 0x40000, scoped, tag = 'scratch operand']
  #allocation3 [shape = 's32[1]{0}', space=sflag, size = 0x4, scoped, tag = 'scratch operand']
  #allocation4 [shape = 'f32[64,512]{1,0:T(8,128)}', space=vmem, size = 0x20000, scoped, tag = 'scratch operand']
  #allocation7 [shape = 's32[]', space=sflag, size = 0x4, offset = 0, fixed_abs, tag = 'sflag constant byte address 0x0 - dummy sync flag']
  #allocation8 [shape = 's32[]', space=sflag, size = 0x4, offset = 0, fixed_abs, tag = 'sflag constant byte address 0x0 - dummy sync flag']
  #allocation9 [shape = 'u32[]', space=smem, size = 0x4, offset = 0x44, fixed_abs, tag = 'smem constant byte address 0x44 - assertion arg 0']
  #allocation10 [shape = 'u32[]', space=smem, size = 0x4, offset = 0x48, fixed_abs, tag = 'smem constant byte address 0x48 - assertion arg 1']
  %s0 = inlined_call_operand.vmem [shape: bf16[64,8], index: 0, kind: input, shape index: {}]
  %s1 = inlined_call_operand.vmem [shape: bf16[8,512], index: 1, kind: input, shape index: {}]
  %s2 = inlined_call_operand.hbm [shape: bf16[128,512], index: 2, kind: input, shape index: {}]
  %s3 = inlined_call_operand.vmem [shape: f32[1,512], index: 3, kind: input, shape index: {}]
  %s4 = inlined_call_operand.hbm [shape: bf16[256,512], index: 4, kind: input, shape index: {}]
  %s5 = inlined_call_operand.vmem [shape: f32[1,512], index: 5, kind: input, shape index: {}]
  %s6 = inlined_call_operand.vmem [shape: f32[8,128], index: 6, kind: output, shape index: {}]
  %s7 = sld [smem:[#allocation0]]
  $region38: #{encoder_forward.1} parent=0
    _
  %s9 = ssub.s32 1, %s7
  %s10 = scalar_select 0, %s9, %s7
  $region1: #{encoder_forward.1} parent=0
    #allocation5 [shape = 'u8[131072]{0}', space=vmem, size = 0x20000, scoped, tag = 'input window, operand 2, single buffered']
    #allocation6 [shape = 's32[1]{0}', space=sflag, size = 0x4, scoped, tag = 'scoped memory for encoder_forward.1']
    %11 = vsyncpa [#allocation6], 0
    // Predicated region
    $region2: #{encoder_forward.1} parent=1 // pred_check
      _
    $region3: #{encoder_forward.1} parent=1 // pred_check_branch
      %13 = sbr.rel (0) target = $region5
    $region4: #{encoder_forward.1} parent=1 // pred_region
      _
    $region5: #{encoder_forward.1} parent=1 // pred_fallthru
      _
    // Predicated region
    $region6: #{encoder_forward.1} parent=1 // pred_check
      _
    $region7: #{encoder_forward.1} parent=1 // pred_check_branch
      %15 = sbr.rel (0) target = $region9
    $region8: #{encoder_forward.1} parent=1 // pred_region
      _
    $region9: #{encoder_forward.1} parent=1 // pred_fallthru
      _
    // Predicated region
    $region10: #{encoder_forward.1} parent=1 // pred_check
      _
    $region11: #{encoder_forward.1} parent=1 // pred_check_branch
      %17 = sbr.rel (0) target = $region13
    $region12: #{encoder_forward.1} parent=1 // pred_region
      %s19 = ssub.s32 4096, 4096
      %20 = vsyncadd [#allocation6], %s19
      %s21 = sshll.u32 [#allocation5], 4
      %s22 = int_to_ptr.vmem [resolvable:$true] %s21
      %27 = dma.hbm_to_vmem [thread:$0]  %s2, 4096, %s22, [#allocation6], 256, 256, 16
    $region13: #{encoder_forward.1} parent=1 // pred_fallthru
      _
    // Predicated region
    $region14: #{encoder_forward.1} parent=1 // pred_check
      _
    $region15: #{encoder_forward.1} parent=1 // pred_check_branch
      %29 = sbr.rel (0) target = $region17
    $region16: #{encoder_forward.1} parent=1 // pred_region
      _
    $region17: #{encoder_forward.1} parent=1 // pred_fallthru
      _
    // Predicated region
    $region18: #{encoder_forward.1} parent=1 // pred_check
      _
    $region19: #{encoder_forward.1} parent=1 // pred_check_branch
      %31 = sbr.rel (0) target = $region21
    $region20: #{encoder_forward.1} parent=1 // pred_region
      _
    $region21: #{encoder_forward.1} parent=1 // pred_fallthru
      _
    // Predicated region
    $region22: #{encoder_forward.1} parent=1 // pred_check
      _
    $region23: #{encoder_forward.1} parent=1 // pred_check_branch
      %33 = sbr.rel (0) target = $region25
    $region24: #{encoder_forward.1} parent=1 // pred_region
      %34 = dma.done [#allocation6], 4096
    $region25: #{encoder_forward.1} parent=1 // pred_fallthru
      _
    // Predicated region
    $region26: #{encoder_forward.1} parent=1 // pred_check
      _
    $region27: #{encoder_forward.1} parent=1 // pred_check_branch
      %37 = sbr.rel target = $region29
    $region28: #{encoder_forward.1} parent=1 // pred_region
      %38 = sst [smem:[#allocation9]] [#allocation8]
      %39 = sst [smem:[#allocation10]] [#allocation7]
    $region29: #{encoder_forward.1} parent=1 // pred_fallthru
      _
    %41 = shalt.err (0)
    %s43 = sshll.u32 [#allocation2], 4
    %s44 = int_to_ptr.vmem [resolvable:$true] %s43
    %46 = dma.hbm_to_vmem [thread:$0]  %s4, 8192, %s44, [#allocation3]
    %v47 = vld [vmem:[%s0] sm:$0xf]
    %v48 = vld [vmem:[%s0 + $0x4] sm:$0xf]
    %v49 = vld [vmem:[%s0 + $0x8] sm:$0xf]
    %v50 = vld [vmem:[%s0 + $0xc] sm:$0xf]
    %v51 = vld [vmem:[%s0 + $0x10] sm:$0xf]
    %v52 = vld [vmem:[%s0 + $0x14] sm:$0xf]
    %v53 = vld [vmem:[%s0 + $0x18] sm:$0xf]
    %v54 = vld [vmem:[%s0 + $0x1c] sm:$0xf]
    %v55 = vld [vmem:[%s1] sm:$0xff]
    %v56 = vld [vmem:[%s1 + $0x8] sm:$0xff]
    %v57 = vld [vmem:[%s3] sm:$0xf]
    %v59 = vlaneseq
    %v60 = vshrl.u32 %v59, 7
    %v61 = vsub.s32 0, %v60
    %v62 = vrot.slane %v57, %v61
    %v63 = vlaneseq
    %v64 = vshrl.u32 %v63, 7
    %v65 = vsub.s32 1, %v64
    %v66 = vrot.slane %v57, %v65
    %v67 = vlaneseq
    %v68 = vshrl.u32 %v67, 7
    %v69 = vsub.s32 2, %v68
    %v70 = vrot.slane %v57, %v69
    %v71 = vlaneseq
    %v72 = vshrl.u32 %v71, 7
    %v73 = vsub.s32 3, %v72
    %v74 = vrot.slane %v57, %v73
    %v87 = vunpack.c.l.b16 %v47
    %v88 = vunpack.c.l.b16 %v48
    %v89 = vunpack.c.l.b16 %v49
    %v90 = vunpack.c.l.b16 %v50
    %v91 = vunpack.c.l.b16 %v51
    %v92 = vunpack.c.l.b16 %v52
    %v93 = vunpack.c.l.b16 %v53
    %v94 = vunpack.c.l.b16 %v54
    %v95 = vpack.c.b16 %v88, %v87
    %v96 = vpack.c.b16 %v90, %v89
    %v97 = vpack.c.b16 %v92, %v91
    %v98 = vpack.c.b16 %v94, %v93
    %v101 = vunpack.c.l.b16 %v55
    %v102 = vunpack.c.h.b16 %v55
    %v103 = vunpack.c.l.b16 %v56
    %v104 = vunpack.c.h.b16 %v56
    %v105 = vpack.c.b16 %v101, %v101
    %v106 = vpack.c.b16 %v102, %v102
    %v107 = vpack.c.b16 %v103, %v103
    %v108 = vpack.c.b16 %v104, %v104
    %vm109 = vcmask 64512
    %v111 = vsel %vm109, %v95, 0
    %v114 = vsel %vm109, %v96, 0
    %v117 = vsel %vm109, %v97, 0
    %v120 = vsel %vm109, %v98, 0
    %vm122 = vcmask 1043456
    %v124 = vsel %vm122, %v105, 0
    %v127 = vsel %vm122, %v106, 0
    %v130 = vsel %vm122, %v107, 0
    %v133 = vsel %vm122, %v108, 0
    %135 = vmatprep.subr.bf16.mxu0 0
    %136 = vmatpush1.bf16.msra.mxu0 0
    %137 = vmatprep.subr.bf16.mxu0 0
    %138 = vmatpush1.bf16.msra.mxu0 0
    %139 = vmatprep.subr.bf16.mxu0 0
    %140 = vmatpush1.bf16.msra.mxu0 0
    %141 = vmatprep.subr.bf16.mxu0 0
    %142 = vmatpush1.bf16.msra.mxu0 0
    %143 = vmatprep.subr.bf16.mxu0 0
    %144 = vmatpush1.bf16.msra.mxu0 0
    %145 = vmatprep.subr.bf16.mxu0 0
    %146 = vmatpush1.bf16.msra.mxu0 0
    %147 = vmatprep.subr.bf16.mxu0 0
    %148 = vmatpush1.bf16.msra.mxu0 0
    %149 = vmatprep.subr.bf16.mxu0 %v127
    %150 = vmatpush1.bf16.msra.mxu0 %v124
    %151 = vmatprep.subr.bf16.mxu0 0
    %152 = vmatpush2.bf16.msra.mxu0 0
    %153 = vmatprep.subr.bf16.mxu0 0
    %154 = vmatpush2.bf16.msra.mxu0 0
    %155 = vmatprep.subr.bf16.mxu0 0
    %156 = vmatpush2.bf16.msra.mxu0 0
    %157 = vmatprep.subr.bf16.mxu0 0
    %158 = vmatpush2.bf16.msra.mxu0 0
    %159 = vmatprep.subr.bf16.mxu0 0
    %160 = vmatpush2.bf16.msra.mxu0 0
    %161 = vmatprep.subr.bf16.mxu0 0
    %162 = vmatpush2.bf16.msra.mxu0 0
    %163 = vmatprep.subr.bf16.mxu0 0
    %164 = vmatpush2.bf16.msra.mxu0 0
    %165 = vmatprep.subr.bf16.mxu0 0
    %166 = vmatpush2.bf16.msra.mxu0 0
    %167 = vmatprep.mubr.bf16.mxu0 0
    %168 = vmatmul.mubr.bf16.gmra.mxu0 %v111
    %v169 = vpop.f32.mrf.mxu0
    %v170 = vadd.f32 %v62, %v169
    %v171 = vpop.f32.mrf.mxu0
    %v172 = vadd.f32 %v66, %v171
    %v173 = vpop.f32.mrf.mxu0
    %v174 = vadd.f32 %v62, %v173
    %v175 = vpop.f32.mrf.mxu0
    %v176 = vadd.f32 %v66, %v175
    %177 = vmatprep.mubr.bf16.mxu0 0
    %178 = vmatmul.mubr.bf16.gmra.mxu0 %v114
    %v179 = vpop.f32.mrf.mxu0
    %v180 = vadd.f32 %v62, %v179
    %v181 = vpop.f32.mrf.mxu0
    %v182 = vadd.f32 %v66, %v181
    %v183 = vpop.f32.mrf.mxu0
    %v184 = vadd.f32 %v62, %v183
    %v185 = vpop.f32.mrf.mxu0
    %v186 = vadd.f32 %v66, %v185
    %187 = vmatprep.mubr.bf16.mxu0 0
    %188 = vmatmul.mubr.bf16.gmra.mxu0 %v117
    %v189 = vpop.f32.mrf.mxu0
    %v190 = vadd.f32 %v62, %v189
    %v191 = vpop.f32.mrf.mxu0
    %v192 = vadd.f32 %v66, %v191
    %v193 = vpop.f32.mrf.mxu0
    %v194 = vadd.f32 %v62, %v193
    %v195 = vpop.f32.mrf.mxu0
    %v196 = vadd.f32 %v66, %v195
    %197 = vmatprep.mubr.bf16.mxu0 0
    %198 = vmatmul.mubr.bf16.gmra.mxu0 %v120
    %v199 = vpop.f32.mrf.mxu0
    %v200 = vadd.f32 %v62, %v199
    %v201 = vpop.f32.mrf.mxu0
    %v202 = vadd.f32 %v66, %v201
    %v203 = vpop.f32.mrf.mxu0
    %v204 = vadd.f32 %v62, %v203
    %v205 = vpop.f32.mrf.mxu0
    %v206 = vadd.f32 %v66, %v205
    %207 = vdwg.mxu0
    %208 = vmatprep.subr.bf16.mxu0 0
    %209 = vmatpush1.bf16.msra.mxu0 0
    %210 = vmatprep.subr.bf16.mxu0 0
    %211 = vmatpush1.bf16.msra.mxu0 0
    %212 = vmatprep.subr.bf16.mxu0 0
    %213 = vmatpush1.bf16.msra.mxu0 0
    %214 = vmatprep.subr.bf16.mxu0 0
    %215 = vmatpush1.bf16.msra.mxu0 0
    %216 = vmatprep.subr.bf16.mxu0 0
    %217 = vmatpush1.bf16.msra.mxu0 0
    %218 = vmatprep.subr.bf16.mxu0 0
    %219 = vmatpush1.bf16.msra.mxu0 0
    %220 = vmatprep.subr.bf16.mxu0 0
    %221 = vmatpush1.bf16.msra.mxu0 0
    %222 = vmatprep.subr.bf16.mxu0 %v133
    %223 = vmatpush1.bf16.msra.mxu0 %v130
    %224 = vmatprep.subr.bf16.mxu0 0
    %225 = vmatpush2.bf16.msra.mxu0 0
    %226 = vmatprep.subr.bf16.mxu0 0
    %227 = vmatpush2.bf16.msra.mxu0 0
    %228 = vmatprep.subr.bf16.mxu0 0
    %229 = vmatpush2.bf16.msra.mxu0 0
    %230 = vmatprep.subr.bf16.mxu0 0
    %231 = vmatpush2.bf16.msra.mxu0 0
    %232 = vmatprep.subr.bf16.mxu0 0
    %233 = vmatpush2.bf16.msra.mxu0 0
    %234 = vmatprep.subr.bf16.mxu0 0
    %235 = vmatpush2.bf16.msra.mxu0 0
    %236 = vmatprep.subr.bf16.mxu0 0
    %237 = vmatpush2.bf16.msra.mxu0 0
    %238 = vmatprep.subr.bf16.mxu0 0
    %239 = vmatpush2.bf16.msra.mxu0 0
    %240 = vmatprep.mubr.bf16.mxu0 0
    %241 = vmatmul.mubr.bf16.gmra.mxu0 %v111
    %v242 = vpop.f32.mrf.mxu0
    %v243 = vadd.f32 %v70, %v242
    %v244 = vpop.f32.mrf.mxu0
    %v245 = vadd.f32 %v74, %v244
    %v246 = vpop.f32.mrf.mxu0
    %v247 = vadd.f32 %v70, %v246
    %v248 = vpop.f32.mrf.mxu0
    %v249 = vadd.f32 %v74, %v248
    %250 = vmatprep.mubr.bf16.mxu0 0
    %251 = vmatmul.mubr.bf16.gmra.mxu0 %v114
    %v252 = vpop.f32.mrf.mxu0
    %v253 = vadd.f32 %v70, %v252
    %v254 = vpop.f32.mrf.mxu0
    %v255 = vadd.f32 %v74, %v254
    %v256 = vpop.f32.mrf.mxu0
    %v257 = vadd.f32 %v70, %v256
    %v258 = vpop.f32.mrf.mxu0
    %v259 = vadd.f32 %v74, %v258
    %260 = vmatprep.mubr.bf16.mxu0 0
    %261 = vmatmul.mubr.bf16.gmra.mxu0 %v117
    %v262 = vpop.f32.mrf.mxu0
    %v263 = vadd.f32 %v70, %v262
    %v264 = vpop.f32.mrf.mxu0
    %v265 = vadd.f32 %v74, %v264
    %v266 = vpop.f32.mrf.mxu0
    %v267 = vadd.f32 %v70, %v266
    %v268 = vpop.f32.mrf.mxu0
    %v269 = vadd.f32 %v74, %v268
    %270 = vmatprep.mubr.bf16.mxu0 0
    %271 = vmatmul.mubr.bf16.gmra.mxu0 %v120
    %v272 = vpop.f32.mrf.mxu0
    %v273 = vadd.f32 %v70, %v272
    %v274 = vpop.f32.mrf.mxu0
    %v275 = vadd.f32 %v74, %v274
    %v276 = vpop.f32.mrf.mxu0
    %v277 = vadd.f32 %v70, %v276
    %v278 = vpop.f32.mrf.mxu0
    %v279 = vadd.f32 %v74, %v278
    %280 = vdwg.mxu0
    %281 = vst [vmem:[#allocation4] sm:$0xff] %v170
    %282 = vst [vmem:[#allocation4 + $0x8] sm:$0xff] %v172
    %283 = vst [vmem:[#allocation4 + $0x10] sm:$0xff] %v243
    %284 = vst [vmem:[#allocation4 + $0x18] sm:$0xff] %v245
    %285 = vst [vmem:[#allocation4 + $0x20] sm:$0xff] %v174
    %286 = vst [vmem:[#allocation4 + $0x28] sm:$0xff] %v176
    %287 = vst [vmem:[#allocation4 + $0x30] sm:$0xff] %v247
    %288 = vst [vmem:[#allocation4 + $0x38] sm:$0xff] %v249
    %289 = vst [vmem:[#allocation4 + $0x40] sm:$0xff] %v180
    %290 = vst [vmem:[#allocation4 + $0x48] sm:$0xff] %v182
    %291 = vst [vmem:[#allocation4 + $0x50] sm:$0xff] %v253
    %292 = vst [vmem:[#allocation4 + $0x58] sm:$0xff] %v255
    %293 = vst [vmem:[#allocation4 + $0x60] sm:$0xff] %v184
    %294 = vst [vmem:[#allocation4 + $0x68] sm:$0xff] %v186
    %295 = vst [vmem:[#allocation4 + $0x70] sm:$0xff] %v257
    %296 = vst [vmem:[#allocation4 + $0x78] sm:$0xff] %v259
    %297 = vst [vmem:[#allocation4 + $0x80] sm:$0xff] %v190
    %298 = vst [vmem:[#allocation4 + $0x88] sm:$0xff] %v192
    %299 = vst [vmem:[#allocation4 + $0x90] sm:$0xff] %v263
    %300 = vst [vmem:[#allocation4 + $0x98] sm:$0xff] %v265
    %301 = vst [vmem:[#allocation4 + $0xa0] sm:$0xff] %v194
    %302 = vst [vmem:[#allocation4 + $0xa8] sm:$0xff] %v196
    %303 = vst [vmem:[#allocation4 + $0xb0] sm:$0xff] %v267
    %304 = vst [vmem:[#allocation4 + $0xb8] sm:$0xff] %v269
    %305 = vst [vmem:[#allocation4 + $0xc0] sm:$0xff] %v200
    %306 = vst [vmem:[#allocation4 + $0xc8] sm:$0xff] %v202
    %307 = vst [vmem:[#allocation4 + $0xd0] sm:$0xff] %v273
    %308 = vst [vmem:[#allocation4 + $0xd8] sm:$0xff] %v275
    %309 = vst [vmem:[#allocation4 + $0xe0] sm:$0xff] %v204
    %310 = vst [vmem:[#allocation4 + $0xe8] sm:$0xff] %v206
    %311 = vst [vmem:[#allocation4 + $0xf0] sm:$0xff] %v277
    %312 = vst [vmem:[#allocation4 + $0xf8] sm:$0xff] %v279
    %v313 = vld [vmem:[#allocation5] sm:$0xff]
    %v314 = vld [vmem:[#allocation5 + $0x8] sm:$0xff]
    %v315 = vld [vmem:[#allocation5 + $0x10] sm:$0xff]
    %v316 = vld [vmem:[#allocation5 + $0x18] sm:$0xff]
    %v317 = vld [vmem:[#allocation5 + $0x20] sm:$0xff]
    %v318 = vld [vmem:[#allocation5 + $0x28] sm:$0xff]
    %v319 = vld [vmem:[#allocation5 + $0x30] sm:$0xff]
    %v320 = vld [vmem:[#allocation5 + $0x38] sm:$0xff]
    %v321 = vld [vmem:[#allocation5 + $0x40] sm:$0xff]
    %v322 = vld [vmem:[#allocation5 + $0x48] sm:$0xff]
    %v323 = vld [vmem:[#allocation5 + $0x50] sm:$0xff]
    %v324 = vld [vmem:[#allocation5 + $0x58] sm:$0xff]
    %v325 = vld [vmem:[#allocation5 + $0x60] sm:$0xff]
    %v326 = vld [vmem:[#allocation5 + $0x68] sm:$0xff]
    %v327 = vld [vmem:[#allocation5 + $0x70] sm:$0xff]
    %v328 = vld [vmem:[#allocation5 + $0x78] sm:$0xff]
    %v329 = vld [vmem:[#allocation5 + $0x80] sm:$0xff]
    %v330 = vld [vmem:[#allocation5 + $0x88] sm:$0xff]
    %v331 = vld [vmem:[#allocation5 + $0x90] sm:$0xff]
    %v332 = vld [vmem:[#allocation5 + $0x98] sm:$0xff]
    %v333 = vld [vmem:[#allocation5 + $0xa0] sm:$0xff]
    %v334 = vld [vmem:[#allocation5 + $0xa8] sm:$0xff]
    %v335 = vld [vmem:[#allocation5 + $0xb0] sm:$0xff]
    %v336 = vld [vmem:[#allocation5 + $0xb8] sm:$0xff]
    %v337 = vld [vmem:[#allocation5 + $0xc0] sm:$0xff]
    %v338 = vld [vmem:[#allocation5 + $0xc8] sm:$0xff]
    %v339 = vld [vmem:[#allocation5 + $0xd0] sm:$0xff]
    %v340 = vld [vmem:[#allocation5 + $0xd8] sm:$0xff]
    %v341 = vld [vmem:[#allocation5 + $0xe0] sm:$0xff]
    %v342 = vld [vmem:[#allocation5 + $0xe8] sm:$0xff]
    %v343 = vld [vmem:[#allocation5 + $0xf0] sm:$0xff]
    %v344 = vld [vmem:[#allocation5 + $0xf8] sm:$0xff]
    %v345 = vld [vmem:[%s5] sm:$0xf]
    %v346 = vld [vmem:[#allocation4] sm:$0xff]
    %v347 = vld [vmem:[#allocation4 + $0x8] sm:$0xff]
    %v348 = vld [vmem:[#allocation4 + $0x10] sm:$0xff]
    %v349 = vld [vmem:[#allocation4 + $0x18] sm:$0xff]
    %v350 = vmul.f32 %v346, 0.5
    %v351 = vtanh.pop %v350
    %v352 = vmul.f32 %v351, 0.5
    %v353 = vadd.f32 %v352, 0.5
    %v354 = vmul.f32 %v347, 0.5
    %v355 = vtanh.pop %v354
    %v356 = vmul.f32 %v355, 0.5
    %v357 = vadd.f32 %v356, 0.5
    %v358 = vtanh.pop %v348
    %v359 = vmul.f32 %v349, 0.5
    %v360 = vtanh.pop %v359
    %v361 = vmul.f32 %v360, 0.5
    %v362 = vadd.f32 %v361, 0.5
    %v363 = vmul.f32 %v357, 0.0
    %v364 = vmul.f32 %v353, %v358
    %v365 = vadd.f32 %v363, %v364
    %v366 = vtanh.pop %v365
    %v367 = vmul.f32 %v362, %v366
    %s368 = smul.u32 4, 32
    %s369 = smul.u32 %s368, 4
    %s370 = sshll.u32 %s369, 4
    %371 = dma.done [#allocation3], %s370
    %v372 = vld [vmem:[#allocation2] sm:$0xff]
    %v373 = vld [vmem:[#allocation2 + $0x8] sm:$0xff]
    %v374 = vld [vmem:[#allocation2 + $0x10] sm:$0xff]
    %v375 = vld [vmem:[#allocation2 + $0x18] sm:$0xff]
    %v376 = vld [vmem:[#allocation2 + $0x20] sm:$0xff]
    %v377 = vld [vmem:[#allocation2 + $0x28] sm:$0xff]
    %v378 = vld [vmem:[#allocation2 + $0x30] sm:$0xff]
    %v379 = vld [vmem:[#allocation2 + $0x38] sm:$0xff]
    %v380 = vld [vmem:[#allocation2 + $0x40] sm:$0xff]
    %v381 = vld [vmem:[#allocation2 + $0x48] sm:$0xff]
    %v382 = vld [vmem:[#allocation2 + $0x50] sm:$0xff]
    %v383 = vld [vmem:[#allocation2 + $0x58] sm:$0xff]
    %v384 = vld [vmem:[#allocation2 + $0x60] sm:$0xff]
    %v385 = vld [vmem:[#allocation2 + $0x68] sm:$0xff]
    %v386 = vld [vmem:[#allocation2 + $0x70] sm:$0xff]
    %v387 = vld [vmem:[#allocation2 + $0x78] sm:$0xff]
    %v388 = vld [vmem:[#allocation2 + $0x80] sm:$0xff]
    %v389 = vld [vmem:[#allocation2 + $0x88] sm:$0xff]
    %v390 = vld [vmem:[#allocation2 + $0x90] sm:$0xff]
    %v391 = vld [vmem:[#allocation2 + $0x98] sm:$0xff]
    %v392 = vld [vmem:[#allocation2 + $0xa0] sm:$0xff]
    %v393 = vld [vmem:[#allocation2 + $0xa8] sm:$0xff]
    %v394 = vld [vmem:[#allocation2 + $0xb0] sm:$0xff]
    %v395 = vld [vmem:[#allocation2 + $0xb8] sm:$0xff]
    %v396 = vld [vmem:[#allocation2 + $0xc0] sm:$0xff]
    %v397 = vld [vmem:[#allocation2 + $0xc8] sm:$0xff]
    %v398 = vld [vmem:[#allocation2 + $0xd0] sm:$0xff]
    %v399 = vld [vmem:[#allocation2 + $0xd8] sm:$0xff]
    %v400 = vld [vmem:[#allocation2 + $0xe0] sm:$0xff]
    %v401 = vld [vmem:[#allocation2 + $0xe8] sm:$0xff]
    %v402 = vld [vmem:[#allocation2 + $0xf0] sm:$0xff]
    %v403 = vld [vmem:[#allocation2 + $0xf8] sm:$0xff]
    %v404 = vld [vmem:[#allocation2 + $0x100] sm:$0xff]
    %v405 = vld [vmem:[#allocation2 + $0x108] sm:$0xff]
    %v406 = vld [vmem:[#allocation2 + $0x110] sm:$0xff]
    %v407 = vld [vmem:[#allocation2 + $0x118] sm:$0xff]
    %v408 = vld [vmem:[#allocation2 + $0x120] sm:$0xff]
    %v409 = vld [vmem:[#allocation2 + $0x128] sm:$0xff]
    %v410 = vld [vmem:[#allocation2 + $0x130] sm:$0xff]
    %v411 = vld [vmem:[#allocation2 + $0x138] sm:$0xff]
    %v412 = vld [vmem:[#allocation2 + $0x140] sm:$0xff]
    %v413 = vld [vmem:[#allocation2 + $0x148] sm:$0xff]
    %v414 = vld [vmem:[#allocation2 + $0x150] sm:$0xff]
    %v415 = vld [vmem:[#allocation2 + $0x158] sm:$0xff]
    %v416 = vld [vmem:[#allocation2 + $0x160] sm:$0xff]
    %v417 = vld [vmem:[#allocation2 + $0x168] sm:$0xff]
    %v418 = vld [vmem:[#allocation2 + $0x170] sm:$0xff]
    %v419 = vld [vmem:[#allocation2 + $0x178] sm:$0xff]
    %v420 = vld [vmem:[#allocation2 + $0x180] sm:$0xff]
    %v421 = vld [vmem:[#allocation2 + $0x188] sm:$0xff]
    %v422 = vld [vmem:[#allocation2 + $0x190] sm:$0xff]
    %v423 = vld [vmem:[#allocation2 + $0x198] sm:$0xff]
    %v424 = vld [vmem:[#allocation2 + $0x1a0] sm:$0xff]
    %v425 = vld [vmem:[#allocation2 + $0x1a8] sm:$0xff]
    %v426 = vld [vmem:[#allocation2 + $0x1b0] sm:$0xff]
    %v427 = vld [vmem:[#allocation2 + $0x1b8] sm:$0xff]
    %v428 = vld [vmem:[#allocation2 + $0x1c0] sm:$0xff]
    %v429 = vld [vmem:[#allocation2 + $0x1c8] sm:$0xff]
    %v430 = vld [vmem:[#allocation2 + $0x1d0] sm:$0xff]
    %v431 = vld [vmem:[#allocation2 + $0x1d8] sm:$0xff]
    %v432 = vld [vmem:[#allocation2 + $0x1e0] sm:$0xff]
    %v433 = vld [vmem:[#allocation2 + $0x1e8] sm:$0xff]
    %v434 = vld [vmem:[#allocation2 + $0x1f0] sm:$0xff]
    %v435 = vld [vmem:[#allocation2 + $0x1f8] sm:$0xff]
    %v436 = vpack.c.bf16 %v367, %v367
    %v437 = vpack.c.bf16 0.0, 0.0
    %v439 = vlaneseq
    %v440 = vshrl.u32 %v439, 7
    %v441 = vsub.s32 0, %v440
    %v442 = vrot.slane %v345, %v441
    %v443 = vlaneseq
    %v444 = vshrl.u32 %v443, 7
    %v445 = vsub.s32 1, %v444
    %v446 = vrot.slane %v345, %v445
    %v447 = vlaneseq
    %v448 = vshrl.u32 %v447, 7
    %v449 = vsub.s32 2, %v448
    %v450 = vrot.slane %v345, %v449
    %v451 = vlaneseq
    %v452 = vshrl.u32 %v451, 7
    %v453 = vsub.s32 3, %v452
    %v454 = vrot.slane %v345, %v453
    %v523 = vunpack.c.l.b16 %v372
    %v524 = vunpack.c.h.b16 %v372
    %v525 = vunpack.c.l.b16 %v373
    %v526 = vunpack.c.h.b16 %v373
    %v527 = vunpack.c.l.b16 %v374
    %v528 = vunpack.c.h.b16 %v374
    %v529 = vunpack.c.l.b16 %v375
    %v530 = vunpack.c.h.b16 %v375
    %v531 = vunpack.c.l.b16 %v376
    %v532 = vunpack.c.h.b16 %v376
    %v533 = vunpack.c.l.b16 %v377
    %v534 = vunpack.c.h.b16 %v377
    %v535 = vunpack.c.l.b16 %v378
    %v536 = vunpack.c.h.b16 %v378
    %v537 = vunpack.c.l.b16 %v379
    %v538 = vunpack.c.h.b16 %v379
    %v539 = vunpack.c.l.b16 %v380
    %v540 = vunpack.c.h.b16 %v380
    %v541 = vunpack.c.l.b16 %v381
    %v542 = vunpack.c.h.b16 %v381
    %v543 = vunpack.c.l.b16 %v382
    %v544 = vunpack.c.h.b16 %v382
    %v545 = vunpack.c.l.b16 %v383
    %v546 = vunpack.c.h.b16 %v383
    %v547 = vunpack.c.l.b16 %v384
    %v548 = vunpack.c.h.b16 %v384
    %v549 = vunpack.c.l.b16 %v385
    %v550 = vunpack.c.h.b16 %v385
    %v551 = vunpack.c.l.b16 %v386
    %v552 = vunpack.c.h.b16 %v386
    %v553 = vunpack.c.l.b16 %v387
    %v554 = vunpack.c.h.b16 %v387
    %v555 = vunpack.c.l.b16 %v388
    %v556 = vunpack.c.h.b16 %v388
    %v557 = vunpack.c.l.b16 %v389
    %v558 = vunpack.c.h.b16 %v389
    %v559 = vunpack.c.l.b16 %v390
    %v560 = vunpack.c.h.b16 %v390
    %v561 = vunpack.c.l.b16 %v391
    %v562 = vunpack.c.h.b16 %v391
    %v563 = vunpack.c.l.b16 %v392
    %v564 = vunpack.c.h.b16 %v392
    %v565 = vunpack.c.l.b16 %v393
    %v566 = vunpack.c.h.b16 %v393
    %v567 = vunpack.c.l.b16 %v394
    %v568 = vunpack.c.h.b16 %v394
    %v569 = vunpack.c.l.b16 %v395
    %v570 = vunpack.c.h.b16 %v395
    %v571 = vunpack.c.l.b16 %v396
    %v572 = vunpack.c.h.b16 %v396
    %v573 = vunpack.c.l.b16 %v397
    %v574 = vunpack.c.h.b16 %v397
    %v575 = vunpack.c.l.b16 %v398
    %v576 = vunpack.c.h.b16 %v398
    %v577 = vunpack.c.l.b16 %v399
    %v578 = vunpack.c.h.b16 %v399
    %v579 = vunpack.c.l.b16 %v400
    %v580 = vunpack.c.h.b16 %v400
    %v581 = vunpack.c.l.b16 %v401
    %v582 = vunpack.c.h.b16 %v401
    %v583 = vunpack.c.l.b16 %v402
    %v584 = vunpack.c.h.b16 %v402
    %v585 = vunpack.c.l.b16 %v403
    %v586 = vunpack.c.h.b16 %v403
    %v587 = vunpack.c.l.b16 %v404
    %v588 = vunpack.c.h.b16 %v404
    %v589 = vunpack.c.l.b16 %v405
    %v590 = vunpack.c.h.b16 %v405
    %v591 = vunpack.c.l.b16 %v406
    %v592 = vunpack.c.h.b16 %v406
    %v593 = vunpack.c.l.b16 %v407
    %v594 = vunpack.c.h.b16 %v407
    %v595 = vunpack.c.l.b16 %v408
    %v596 = vunpack.c.h.b16 %v408
    %v597 = vunpack.c.l.b16 %v409
    %v598 = vunpack.c.h.b16 %v409
    %v599 = vunpack.c.l.b16 %v410
    %v600 = vunpack.c.h.b16 %v410
    %v601 = vunpack.c.l.b16 %v411
    %v602 = vunpack.c.h.b16 %v411
    %v603 = vunpack.c.l.b16 %v412
    %v604 = vunpack.c.h.b16 %v412
    %v605 = vunpack.c.l.b16 %v413
    %v606 = vunpack.c.h.b16 %v413
    %v607 = vunpack.c.l.b16 %v414
    %v608 = vunpack.c.h.b16 %v414
    %v609 = vunpack.c.l.b16 %v415
    %v610 = vunpack.c.h.b16 %v415
    %v611 = vunpack.c.l.b16 %v416
    %v612 = vunpack.c.h.b16 %v416
    %v613 = vunpack.c.l.b16 %v417
    %v614 = vunpack.c.h.b16 %v417
    %v615 = vunpack.c.l.b16 %v418
    %v616 = vunpack.c.h.b16 %v418
    %v617 = vunpack.c.l.b16 %v419
    %v618 = vunpack.c.h.b16 %v419
    %v619 = vunpack.c.l.b16 %v420
    %v620 = vunpack.c.h.b16 %v420
    %v621 = vunpack.c.l.b16 %v421
    %v622 = vunpack.c.h.b16 %v421
    %v623 = vunpack.c.l.b16 %v422
    %v624 = vunpack.c.h.b16 %v422
    %v625 = vunpack.c.l.b16 %v423
    %v626 = vunpack.c.h.b16 %v423
    %v627 = vunpack.c.l.b16 %v424
    %v628 = vunpack.c.h.b16 %v424
    %v629 = vunpack.c.l.b16 %v425
    %v630 = vunpack.c.h.b16 %v425
    %v631 = vunpack.c.l.b16 %v426
    %v632 = vunpack.c.h.b16 %v426
    %v633 = vunpack.c.l.b16 %v427
    %v634 = vunpack.c.h.b16 %v427
    %v635 = vunpack.c.l.b16 %v428
    %v636 = vunpack.c.h.b16 %v428
    %v637 = vunpack.c.l.b16 %v429
    %v638 = vunpack.c.h.b16 %v429
    %v639 = vunpack.c.l.b16 %v430
    %v640 = vunpack.c.h.b16 %v430
    %v641 = vunpack.c.l.b16 %v431
    %v642 = vunpack.c.h.b16 %v431
    %v643 = vunpack.c.l.b16 %v432
    %v644 = vunpack.c.h.b16 %v432
    %v645 = vunpack.c.l.b16 %v433
    %v646 = vunpack.c.h.b16 %v433
    %v647 = vunpack.c.l.b16 %v434
    %v648 = vunpack.c.h.b16 %v434
    %v649 = vunpack.c.l.b16 %v435
    %v650 = vunpack.c.h.b16 %v435
    %v651 = vpack.c.b16 %v527, %v523
    %v652 = vpack.c.b16 %v528, %v524
    %v653 = vpack.c.b16 %v529, %v525
    %v654 = vpack.c.b16 %v530, %v526
    %v655 = vpack.c.b16 %v535, %v531
    %v656 = vpack.c.b16 %v536, %v532
    %v657 = vpack.c.b16 %v537, %v533
    %v658 = vpack.c.b16 %v538, %v534
    %v659 = vpack.c.b16 %v543, %v539
    %v660 = vpack.c.b16 %v544, %v540
    %v661 = vpack.c.b16 %v545, %v541
    %v662 = vpack.c.b16 %v546, %v542
    %v663 = vpack.c.b16 %v551, %v547
    %v664 = vpack.c.b16 %v552, %v548
    %v665 = vpack.c.b16 %v553, %v549
    %v666 = vpack.c.b16 %v554, %v550
    %v667 = vpack.c.b16 %v559, %v555
    %v668 = vpack.c.b16 %v560, %v556
    %v669 = vpack.c.b16 %v561, %v557
    %v670 = vpack.c.b16 %v562, %v558
    %v671 = vpack.c.b16 %v567, %v563
    %v672 = vpack.c.b16 %v568, %v564
    %v673 = vpack.c.b16 %v569, %v565
    %v674 = vpack.c.b16 %v570, %v566
    %v675 = vpack.c.b16 %v575, %v571
    %v676 = vpack.c.b16 %v576, %v572
    %v677 = vpack.c.b16 %v577, %v573
    %v678 = vpack.c.b16 %v578, %v574
    %v679 = vpack.c.b16 %v583, %v579
    %v680 = vpack.c.b16 %v584, %v580
    %v681 = vpack.c.b16 %v585, %v581
    %v682 = vpack.c.b16 %v586, %v582
    %v683 = vpack.c.b16 %v591, %v587
    %v684 = vpack.c.b16 %v592, %v588
    %v685 = vpack.c.b16 %v593, %v589
    %v686 = vpack.c.b16 %v594, %v590
    %v687 = vpack.c.b16 %v599, %v595
    %v688 = vpack.c.b16 %v600, %v596
    %v689 = vpack.c.b16 %v601, %v597
    %v690 = vpack.c.b16 %v602, %v598
    %v691 = vpack.c.b16 %v607, %v603
    %v692 = vpack.c.b16 %v608, %v604
    %v693 = vpack.c.b16 %v609, %v605
    %v694 = vpack.c.b16 %v610, %v606
    %v695 = vpack.c.b16 %v615, %v611
    %v696 = vpack.c.b16 %v616, %v612
    %v697 = vpack.c.b16 %v617, %v613
    %v698 = vpack.c.b16 %v618, %v614
    %v699 = vpack.c.b16 %v623, %v619
    %v700 = vpack.c.b16 %v624, %v620
    %v701 = vpack.c.b16 %v625, %v621
    %v702 = vpack.c.b16 %v626, %v622
    %v703 = vpack.c.b16 %v631, %v627
    %v704 = vpack.c.b16 %v632, %v628
    %v705 = vpack.c.b16 %v633, %v629
    %v706 = vpack.c.b16 %v634, %v630
    %v707 = vpack.c.b16 %v639, %v635
    %v708 = vpack.c.b16 %v640, %v636
    %v709 = vpack.c.b16 %v641, %v637
    %v710 = vpack.c.b16 %v642, %v638
    %v711 = vpack.c.b16 %v647, %v643
    %v712 = vpack.c.b16 %v648, %v644
    %v713 = vpack.c.b16 %v649, %v645
    %v714 = vpack.c.b16 %v650, %v646
    %779 = vmatprep.subr.bf16.mxu0 %v680
    %780 = vmatpush1.bf16.msra.mxu0 %v679
    %781 = vmatprep.subr.bf16.mxu0 %v676
    %782 = vmatpush1.bf16.msra.mxu0 %v675
    %783 = vmatprep.subr.bf16.mxu0 %v672
    %784 = vmatpush1.bf16.msra.mxu0 %v671
    %785 = vmatprep.subr.bf16.mxu0 %v668
    %786 = vmatpush1.bf16.msra.mxu0 %v667
    %787 = vmatprep.subr.bf16.mxu0 %v664
    %788 = vmatpush1.bf16.msra.mxu0 %v663
    %789 = vmatprep.subr.bf16.mxu0 %v660
    %790 = vmatpush1.bf16.msra.mxu0 %v659
    %791 = vmatprep.subr.bf16.mxu0 %v656
    %792 = vmatpush1.bf16.msra.mxu0 %v655
    %793 = vmatprep.subr.bf16.mxu0 %v652
    %794 = vmatpush1.bf16.msra.mxu0 %v651
    %795 = vmatprep.subr.bf16.mxu0 %v712
    %796 = vmatpush2.bf16.msra.mxu0 %v711
    %797 = vmatprep.subr.bf16.mxu0 %v708
    %798 = vmatpush2.bf16.msra.mxu0 %v707
    %799 = vmatprep.subr.bf16.mxu0 %v704
    %800 = vmatpush2.bf16.msra.mxu0 %v703
    %801 = vmatprep.subr.bf16.mxu0 %v700
    %802 = vmatpush2.bf16.msra.mxu0 %v699
    %803 = vmatprep.subr.bf16.mxu0 %v696
    %804 = vmatpush2.bf16.msra.mxu0 %v695
    %805 = vmatprep.subr.bf16.mxu0 %v692
    %806 = vmatpush2.bf16.msra.mxu0 %v691
    %807 = vmatprep.subr.bf16.mxu0 %v688
    %808 = vmatpush2.bf16.msra.mxu0 %v687
    %809 = vmatprep.subr.bf16.mxu0 %v684
    %810 = vmatpush2.bf16.msra.mxu0 %v683
    %811 = vmatprep.mubr.bf16.mxu0 %v437
    %812 = vmatmul.mubr.bf16.gmra.mxu0 %v436
    %v813 = vpop.f32.mrf.mxu0
    %v814 = vadd.f32 %v442, %v813
    %v815 = vpop.f32.mrf.mxu0
    %v816 = vadd.f32 %v446, %v815
    %v817 = vpop.f32.mrf.mxu0
    %v818 = vpop.f32.mrf.mxu0
    %819 = vdwg.mxu0
    %820 = vmatprep.subr.bf16.mxu0 %v682
    %821 = vmatpush1.bf16.msra.mxu0 %v681
    %822 = vmatprep.subr.bf16.mxu0 %v678
    %823 = vmatpush1.bf16.msra.mxu0 %v677
    %824 = vmatprep.subr.bf16.mxu0 %v674
    %825 = vmatpush1.bf16.msra.mxu0 %v673
    %826 = vmatprep.subr.bf16.mxu0 %v670
    %827 = vmatpush1.bf16.msra.mxu0 %v669
    %828 = vmatprep.subr.bf16.mxu0 %v666
    %829 = vmatpush1.bf16.msra.mxu0 %v665
    %830 = vmatprep.subr.bf16.mxu0 %v662
    %831 = vmatpush1.bf16.msra.mxu0 %v661
    %832 = vmatprep.subr.bf16.mxu0 %v658
    %833 = vmatpush1.bf16.msra.mxu0 %v657
    %834 = vmatprep.subr.bf16.mxu0 %v654
    %835 = vmatpush1.bf16.msra.mxu0 %v653
    %836 = vmatprep.subr.bf16.mxu0 %v714
    %837 = vmatpush2.bf16.msra.mxu0 %v713
    %838 = vmatprep.subr.bf16.mxu0 %v710
    %839 = vmatpush2.bf16.msra.mxu0 %v709
    %840 = vmatprep.subr.bf16.mxu0 %v706
    %841 = vmatpush2.bf16.msra.mxu0 %v705
    %842 = vmatprep.subr.bf16.mxu0 %v702
    %843 = vmatpush2.bf16.msra.mxu0 %v701
    %844 = vmatprep.subr.bf16.mxu0 %v698
    %845 = vmatpush2.bf16.msra.mxu0 %v697
    %846 = vmatprep.subr.bf16.mxu0 %v694
    %847 = vmatpush2.bf16.msra.mxu0 %v693
    %848 = vmatprep.subr.bf16.mxu0 %v690
    %849 = vmatpush2.bf16.msra.mxu0 %v689
    %850 = vmatprep.subr.bf16.mxu0 %v686
    %851 = vmatpush2.bf16.msra.mxu0 %v685
    %852 = vmatprep.mubr.bf16.mxu0 %v437
    %853 = vmatmul.mubr.bf16.gmra.mxu0 %v436
    %v854 = vpop.f32.mrf.mxu0
    %v855 = vadd.f32 %v450, %v854
    %v856 = vpop.f32.mrf.mxu0
    %v857 = vadd.f32 %v454, %v856
    %v858 = vpop.f32.mrf.mxu0
    %v859 = vpop.f32.mrf.mxu0
    %860 = vdwg.mxu0
    %v861 = vmul.f32 %v814, 0.5
    %v862 = vtanh.pop %v861
    %v863 = vmul.f32 %v862, 0.5
    %v864 = vadd.f32 %v863, 0.5
    %v865 = vmul.f32 %v816, 0.5
    %v866 = vtanh.pop %v865
    %v867 = vmul.f32 %v866, 0.5
    %v868 = vadd.f32 %v867, 0.5
    %v869 = vtanh.pop %v855
    %v870 = vmul.f32 %v857, 0.5
    %v871 = vtanh.pop %v870
    %v872 = vmul.f32 %v871, 0.5
    %v873 = vadd.f32 %v872, 0.5
    %v874 = vmul.f32 %v868, 0.0
    %v875 = vmul.f32 %v864, %v869
    %v876 = vadd.f32 %v874, %v875
    %v877 = vtanh.pop %v876
    %v878 = vmul.f32 %v873, %v877
    %v879 = vld [vmem:[#allocation4 + $0x20] sm:$0xff]
    %v880 = vld [vmem:[#allocation4 + $0x28] sm:$0xff]
    %v881 = vld [vmem:[#allocation4 + $0x30] sm:$0xff]
    %v882 = vld [vmem:[#allocation4 + $0x38] sm:$0xff]
    %v915 = vunpack.c.l.b16 %v313
    %v916 = vunpack.c.h.b16 %v313
    %v917 = vunpack.c.l.b16 %v314
    %v918 = vunpack.c.h.b16 %v314
    %v919 = vunpack.c.l.b16 %v315
    %v920 = vunpack.c.h.b16 %v315
    %v921 = vunpack.c.l.b16 %v316
    %v922 = vunpack.c.h.b16 %v316
    %v923 = vunpack.c.l.b16 %v317
    %v924 = vunpack.c.h.b16 %v317
    %v925 = vunpack.c.l.b16 %v318
    %v926 = vunpack.c.h.b16 %v318
    %v927 = vunpack.c.l.b16 %v319
    %v928 = vunpack.c.h.b16 %v319
    %v929 = vunpack.c.l.b16 %v320
    %v930 = vunpack.c.h.b16 %v320
    %v931 = vunpack.c.l.b16 %v321
    %v932 = vunpack.c.h.b16 %v321
    %v933 = vunpack.c.l.b16 %v322
    %v934 = vunpack.c.h.b16 %v322
    %v935 = vunpack.c.l.b16 %v323
    %v936 = vunpack.c.h.b16 %v323
    %v937 = vunpack.c.l.b16 %v324
    %v938 = vunpack.c.h.b16 %v324
    %v939 = vunpack.c.l.b16 %v325
    %v940 = vunpack.c.h.b16 %v325
    %v941 = vunpack.c.l.b16 %v326
    %v942 = vunpack.c.h.b16 %v326
    %v943 = vunpack.c.l.b16 %v327
    %v944 = vunpack.c.h.b16 %v327
    %v945 = vunpack.c.l.b16 %v328
    %v946 = vunpack.c.h.b16 %v328
    %v947 = vunpack.c.l.b16 %v329
    %v948 = vunpack.c.h.b16 %v329
    %v949 = vunpack.c.l.b16 %v330
    %v950 = vunpack.c.h.b16 %v330
    %v951 = vunpack.c.l.b16 %v331
    %v952 = vunpack.c.h.b16 %v331
    %v953 = vunpack.c.l.b16 %v332
    %v954 = vunpack.c.h.b16 %v332
    %v955 = vunpack.c.l.b16 %v333
    %v956 = vunpack.c.h.b16 %v333
    %v957 = vunpack.c.l.b16 %v334
    %v958 = vunpack.c.h.b16 %v334
    %v959 = vunpack.c.l.b16 %v335
    %v960 = vunpack.c.h.b16 %v335
    %v961 = vunpack.c.l.b16 %v336
    %v962 = vunpack.c.h.b16 %v336
    %v963 = vunpack.c.l.b16 %v337
    %v964 = vunpack.c.h.b16 %v337
    %v965 = vunpack.c.l.b16 %v338
    %v966 = vunpack.c.h.b16 %v338
    %v967 = vunpack.c.l.b16 %v339
    %v968 = vunpack.c.h.b16 %v339
    %v969 = vunpack.c.l.b16 %v340
    %v970 = vunpack.c.h.b16 %v340
    %v971 = vunpack.c.l.b16 %v341
    %v972 = vunpack.c.h.b16 %v341
    %v973 = vunpack.c.l.b16 %v342
    %v974 = vunpack.c.h.b16 %v342
    %v975 = vunpack.c.l.b16 %v343
    %v976 = vunpack.c.h.b16 %v343
    %v977 = vunpack.c.l.b16 %v344
    %v978 = vunpack.c.h.b16 %v344
    %v979 = vpack.c.b16 %v919, %v915
    %v980 = vpack.c.b16 %v920, %v916
    %v981 = vpack.c.b16 %v921, %v917
    %v982 = vpack.c.b16 %v922, %v918
    %v983 = vpack.c.b16 %v927, %v923
    %v984 = vpack.c.b16 %v928, %v924
    %v985 = vpack.c.b16 %v929, %v925
    %v986 = vpack.c.b16 %v930, %v926
    %v987 = vpack.c.b16 %v935, %v931
    %v988 = vpack.c.b16 %v936, %v932
    %v989 = vpack.c.b16 %v937, %v933
    %v990 = vpack.c.b16 %v938, %v934
    %v991 = vpack.c.b16 %v943, %v939
    %v992 = vpack.c.b16 %v944, %v940
    %v993 = vpack.c.b16 %v945, %v941
    %v994 = vpack.c.b16 %v946, %v942
    %v995 = vpack.c.b16 %v951, %v947
    %v996 = vpack.c.b16 %v952, %v948
    %v997 = vpack.c.b16 %v953, %v949
    %v998 = vpack.c.b16 %v954, %v950
    %v999 = vpack.c.b16 %v959, %v955
    %v1000 = vpack.c.b16 %v960, %v956
    %v1001 = vpack.c.b16 %v961, %v957
    %v1002 = vpack.c.b16 %v962, %v958
    %v1003 = vpack.c.b16 %v967, %v963
    %v1004 = vpack.c.b16 %v968, %v964
    %v1005 = vpack.c.b16 %v969, %v965
    %v1006 = vpack.c.b16 %v970, %v966
    %v1007 = vpack.c.b16 %v975, %v971
    %v1008 = vpack.c.b16 %v976, %v972
    %v1009 = vpack.c.b16 %v977, %v973
    %v1010 = vpack.c.b16 %v978, %v974
    %1043 = vmatprep.subr.bf16.mxu0 %v1008
    %1044 = vmatpush1.bf16.msra.mxu0 %v1007
    %1045 = vmatprep.subr.bf16.mxu0 %v1004
    %1046 = vmatpush1.bf16.msra.mxu0 %v1003
    %1047 = vmatprep.subr.bf16.mxu0 %v1000
    %1048 = vmatpush1.bf16.msra.mxu0 %v999
    %1049 = vmatprep.subr.bf16.mxu0 %v996
    %1050 = vmatpush1.bf16.msra.mxu0 %v995
    %1051 = vmatprep.subr.bf16.mxu0 %v992
    %1052 = vmatpush1.bf16.msra.mxu0 %v991
    %1053 = vmatprep.subr.bf16.mxu0 %v988
    %1054 = vmatpush1.bf16.msra.mxu0 %v987
    %1055 = vmatprep.subr.bf16.mxu0 %v984
    %1056 = vmatpush1.bf16.msra.mxu0 %v983
    %1057 = vmatprep.subr.bf16.mxu0 %v980
    %1058 = vmatpush1.bf16.msra.mxu0 %v979
    %1059 = vmatprep.subr.bf16.mxu0 0
    %1060 = vmatpush2.bf16.msra.mxu0 0
    %1061 = vmatprep.subr.bf16.mxu0 0
    %1062 = vmatpush2.bf16.msra.mxu0 0
    %1063 = vmatprep.subr.bf16.mxu0 0
    %1064 = vmatpush2.bf16.msra.mxu0 0
    %1065 = vmatprep.subr.bf16.mxu0 0
    %1066 = vmatpush2.bf16.msra.mxu0 0
    %1067 = vmatprep.subr.bf16.mxu0 0
    %1068 = vmatpush2.bf16.msra.mxu0 0
    %1069 = vmatprep.subr.bf16.mxu0 0
    %1070 = vmatpush2.bf16.msra.mxu0 0
    %1071 = vmatprep.subr.bf16.mxu0 0
    %1072 = vmatpush2.bf16.msra.mxu0 0
    %1073 = vmatprep.subr.bf16.mxu0 0
    %1074 = vmatpush2.bf16.msra.mxu0 0
    %1075 = vmatprep.mubr.bf16.mxu0 0
    %1076 = vmatmul.mubr.bf16.gmra.mxu0 %v436
    %v1077 = vpop.f32.mrf.mxu0
    %v1078 = vadd.f32 0.0, %v1077
    %v1079 = vpop.f32.mrf.mxu0
    %v1080 = vadd.f32 0.0, %v1079
    %v1081 = vpop.f32.mrf.mxu0
    %v1082 = vpop.f32.mrf.mxu0
    %1083 = vdwg.mxu0
    %1084 = vmatprep.subr.bf16.mxu0 %v1010
    %1085 = vmatpush1.bf16.msra.mxu0 %v1009
    %1086 = vmatprep.subr.bf16.mxu0 %v1006
    %1087 = vmatpush1.bf16.msra.mxu0 %v1005
    %1088 = vmatprep.subr.bf16.mxu0 %v1002
    %1089 = vmatpush1.bf16.msra.mxu0 %v1001
    %1090 = vmatprep.subr.bf16.mxu0 %v998
    %1091 = vmatpush1.bf16.msra.mxu0 %v997
    %1092 = vmatprep.subr.bf16.mxu0 %v994
    %1093 = vmatpush1.bf16.msra.mxu0 %v993
    %1094 = vmatprep.subr.bf16.mxu0 %v990
    %1095 = vmatpush1.bf16.msra.mxu0 %v989
    %1096 = vmatprep.subr.bf16.mxu0 %v986
    %1097 = vmatpush1.bf16.msra.mxu0 %v985
    %1098 = vmatprep.subr.bf16.mxu0 %v982
    %1099 = vmatpush1.bf16.msra.mxu0 %v981
    %1100 = vmatprep.subr.bf16.mxu0 0
    %1101 = vmatpush2.bf16.msra.mxu0 0
    %1102 = vmatprep.subr.bf16.mxu0 0
    %1103 = vmatpush2.bf16.msra.mxu0 0
    %1104 = vmatprep.subr.bf16.mxu0 0
    %1105 = vmatpush2.bf16.msra.mxu0 0
    %1106 = vmatprep.subr.bf16.mxu0 0
    %1107 = vmatpush2.bf16.msra.mxu0 0
    %1108 = vmatprep.subr.bf16.mxu0 0
    %1109 = vmatpush2.bf16.msra.mxu0 0
    %1110 = vmatprep.subr.bf16.mxu0 0
    %1111 = vmatpush2.bf16.msra.mxu0 0
    %1112 = vmatprep.subr.bf16.mxu0 0
    %1113 = vmatpush2.bf16.msra.mxu0 0
    %1114 = vmatprep.subr.bf16.mxu0 0
    %1115 = vmatpush2.bf16.msra.mxu0 0
    %1116 = vmatprep.mubr.bf16.mxu0 0
    %1117 = vmatmul.mubr.bf16.gmra.mxu0 %v436
    %v1118 = vpop.f32.mrf.mxu0
    %v1119 = vadd.f32 0.0, %v1118
    %v1120 = vpop.f32.mrf.mxu0
    %v1121 = vadd.f32 0.0, %v1120
    %v1122 = vpop.f32.mrf.mxu0
    %v1123 = vpop.f32.mrf.mxu0
    %1124 = vdwg.mxu0
    %v1125 = vadd.f32 %v879, %v1078
    %v1126 = vadd.f32 %v880, %v1080
    %v1127 = vadd.f32 %v881, %v1119
    %v1128 = vadd.f32 %v882, %v1121
    %v1129 = vmul.f32 %v1125, 0.5
    %v1130 = vtanh.pop %v1129
    %v1131 = vmul.f32 %v1130, 0.5
    %v1132 = vadd.f32 %v1131, 0.5
    %v1133 = vmul.f32 %v1126, 0.5
    %v1134 = vtanh.pop %v1133
    %v1135 = vmul.f32 %v1134, 0.5
    %v1136 = vadd.f32 %v1135, 0.5
    %v1137 = vtanh.pop %v1127
    %v1138 = vmul.f32 %v1128, 0.5
    %v1139 = vtanh.pop %v1138
    %v1140 = vmul.f32 %v1139, 0.5
    %v1141 = vadd.f32 %v1140, 0.5
    %v1142 = vmul.f32 %v1136, %v365
    %v1143 = vmul.f32 %v1132, %v1137
    %v1144 = vadd.f32 %v1142, %v1143
    %v1145 = vtanh.pop %v1144
    %v1146 = vmul.f32 %v1141, %v1145
    %v1147 = vpack.c.bf16 %v1146, %v1146
    %v1148 = vpack.c.bf16 %v878, %v878
    %1149 = vmatprep.subr.bf16.mxu0 %v680
    %1150 = vmatpush1.bf16.msra.mxu0 %v679
    %1151 = vmatprep.subr.bf16.mxu0 %v676
    %1152 = vmatpush1.bf16.msra.mxu0 %v675
    %1153 = vmatprep.subr.bf16.mxu0 %v672
    %1154 = vmatpush1.bf16.msra.mxu0 %v671
    %1155 = vmatprep.subr.bf16.mxu0 %v668
    %1156 = vmatpush1.bf16.msra.mxu0 %v667
    %1157 = vmatprep.subr.bf16.mxu0 %v664
    %1158 = vmatpush1.bf16.msra.mxu0 %v663
    %1159 = vmatprep.subr.bf16.mxu0 %v660
    %1160 = vmatpush1.bf16.msra.mxu0 %v659
    %1161 = vmatprep.subr.bf16.mxu0 %v656
    %1162 = vmatpush1.bf16.msra.mxu0 %v655
    %1163 = vmatprep.subr.bf16.mxu0 %v652
    %1164 = vmatpush1.bf16.msra.mxu0 %v651
    %1165 = vmatprep.subr.bf16.mxu0 %v712
    %1166 = vmatpush2.bf16.msra.mxu0 %v711
    %1167 = vmatprep.subr.bf16.mxu0 %v708
    %1168 = vmatpush2.bf16.msra.mxu0 %v707
    %1169 = vmatprep.subr.bf16.mxu0 %v704
    %1170 = vmatpush2.bf16.msra.mxu0 %v703
    %1171 = vmatprep.subr.bf16.mxu0 %v700
    %1172 = vmatpush2.bf16.msra.mxu0 %v699
    %1173 = vmatprep.subr.bf16.mxu0 %v696
    %1174 = vmatpush2.bf16.msra.mxu0 %v695
    %1175 = vmatprep.subr.bf16.mxu0 %v692
    %1176 = vmatpush2.bf16.msra.mxu0 %v691
    %1177 = vmatprep.subr.bf16.mxu0 %v688
    %1178 = vmatpush2.bf16.msra.mxu0 %v687
    %1179 = vmatprep.subr.bf16.mxu0 %v684
    %1180 = vmatpush2.bf16.msra.mxu0 %v683
    %1181 = vmatprep.mubr.bf16.mxu0 %v1148
    %1182 = vmatmul.mubr.bf16.gmra.mxu0 %v1147
    %v1183 = vpop.f32.mrf.mxu0
    %v1184 = vadd.f32 %v442, %v1183
    %v1185 = vpop.f32.mrf.mxu0
    %v1186 = vadd.f32 %v446, %v1185
    %v1187 = vpop.f32.mrf.mxu0
    %v1188 = vpop.f32.mrf.mxu0
    %1189 = vdwg.mxu0
    %1190 = vmatprep.subr.bf16.mxu0 %v682
    %1191 = vmatpush1.bf16.msra.mxu0 %v681
    %1192 = vmatprep.subr.bf16.mxu0 %v678
    %1193 = vmatpush1.bf16.msra.mxu0 %v677
    %1194 = vmatprep.subr.bf16.mxu0 %v674
    %1195 = vmatpush1.bf16.msra.mxu0 %v673
    %1196 = vmatprep.subr.bf16.mxu0 %v670
    %1197 = vmatpush1.bf16.msra.mxu0 %v669
    %1198 = vmatprep.subr.bf16.mxu0 %v666
    %1199 = vmatpush1.bf16.msra.mxu0 %v665
    %1200 = vmatprep.subr.bf16.mxu0 %v662
    %1201 = vmatpush1.bf16.msra.mxu0 %v661
    %1202 = vmatprep.subr.bf16.mxu0 %v658
    %1203 = vmatpush1.bf16.msra.mxu0 %v657
    %1204 = vmatprep.subr.bf16.mxu0 %v654
    %1205 = vmatpush1.bf16.msra.mxu0 %v653
    %1206 = vmatprep.subr.bf16.mxu0 %v714
    %1207 = vmatpush2.bf16.msra.mxu0 %v713
    %1208 = vmatprep.subr.bf16.mxu0 %v710
    %1209 = vmatpush2.bf16.msra.mxu0 %v709
    %1210 = vmatprep.subr.bf16.mxu0 %v706
    %1211 = vmatpush2.bf16.msra.mxu0 %v705
    %1212 = vmatprep.subr.bf16.mxu0 %v702
    %1213 = vmatpush2.bf16.msra.mxu0 %v701
    %1214 = vmatprep.subr.bf16.mxu0 %v698
    %1215 = vmatpush2.bf16.msra.mxu0 %v697
    %1216 = vmatprep.subr.bf16.mxu0 %v694
    %1217 = vmatpush2.bf16.msra.mxu0 %v693
    %1218 = vmatprep.subr.bf16.mxu0 %v690
    %1219 = vmatpush2.bf16.msra.mxu0 %v689
    %1220 = vmatprep.subr.bf16.mxu0 %v686
    %1221 = vmatpush2.bf16.msra.mxu0 %v685
    %1222 = vmatprep.mubr.bf16.mxu0 %v1148
    %1223 = vmatmul.mubr.bf16.gmra.mxu0 %v1147
    %v1224 = vpop.f32.mrf.mxu0
    %v1225 = vadd.f32 %v450, %v1224
    %v1226 = vpop.f32.mrf.mxu0
    %v1227 = vadd.f32 %v454, %v1226
    %v1228 = vpop.f32.mrf.mxu0
    %v1229 = vpop.f32.mrf.mxu0
    %1230 = vdwg.mxu0
    %v1231 = vmul.f32 %v1184, 0.5
    %v1232 = vtanh.pop %v1231
    %v1233 = vmul.f32 %v1232, 0.5
    %v1234 = vadd.f32 %v1233, 0.5
    %v1235 = vmul.f32 %v1186, 0.5
    %v1236 = vtanh.pop %v1235
    %v1237 = vmul.f32 %v1236, 0.5
    %v1238 = vadd.f32 %v1237, 0.5
    %v1239 = vtanh.pop %v1225
    %v1240 = vmul.f32 %v1227, 0.5
    %v1241 = vtanh.pop %v1240
    %v1242 = vmul.f32 %v1241, 0.5
    %v1243 = vadd.f32 %v1242, 0.5
    %v1244 = vmul.f32 %v1238, %v876
    %v1245 = vmul.f32 %v1234, %v1239
    %v1246 = vadd.f32 %v1244, %v1245
    %v1247 = vtanh.pop %v1246
    %v1248 = vmul.f32 %v1243, %v1247
    %v1249 = vld [vmem:[#allocation4 + $0x40] sm:$0xff]
    %v1250 = vld [vmem:[#allocation4 + $0x48] sm:$0xff]
    %v1251 = vld [vmem:[#allocation4 + $0x50] sm:$0xff]
    %v1252 = vld [vmem:[#allocation4 + $0x58] sm:$0xff]
    %1253 = vmatprep.subr.bf16.mxu0 %v1008
    %1254 = vmatpush1.bf16.msra.mxu0 %v1007
    %1255 = vmatprep.subr.bf16.mxu0 %v1004
    %1256 = vmatpush1.bf16.msra.mxu0 %v1003
    %1257 = vmatprep.subr.bf16.mxu0 %v1000
    %1258 = vmatpush1.bf16.msra.mxu0 %v999
    %1259 = vmatprep.subr.bf16.mxu0 %v996
    %1260 = vmatpush1.bf16.msra.mxu0 %v995
    %1261 = vmatprep.subr.bf16.mxu0 %v992
    %1262 = vmatpush1.bf16.msra.mxu0 %v991
    %1263 = vmatprep.subr.bf16.mxu0 %v988
    %1264 = vmatpush1.bf16.msra.mxu0 %v987
    %1265 = vmatprep.subr.bf16.mxu0 %v984
    %1266 = vmatpush1.bf16.msra.mxu0 %v983
    %1267 = vmatprep.subr.bf16.mxu0 %v980
    %1268 = vmatpush1.bf16.msra.mxu0 %v979
    %1269 = vmatprep.subr.bf16.mxu0 0
    %1270 = vmatpush2.bf16.msra.mxu0 0
    %1271 = vmatprep.subr.bf16.mxu0 0
    %1272 = vmatpush2.bf16.msra.mxu0 0
    %1273 = vmatprep.subr.bf16.mxu0 0
    %1274 = vmatpush2.bf16.msra.mxu0 0
    %1275 = vmatprep.subr.bf16.mxu0 0
    %1276 = vmatpush2.bf16.msra.mxu0 0
    %1277 = vmatprep.subr.bf16.mxu0 0
    %1278 = vmatpush2.bf16.msra.mxu0 0
    %1279 = vmatprep.subr.bf16.mxu0 0
    %1280 = vmatpush2.bf16.msra.mxu0 0
    %1281 = vmatprep.subr.bf16.mxu0 0
    %1282 = vmatpush2.bf16.msra.mxu0 0
    %1283 = vmatprep.subr.bf16.mxu0 0
    %1284 = vmatpush2.bf16.msra.mxu0 0
    %1285 = vmatprep.mubr.bf16.mxu0 0
    %1286 = vmatmul.mubr.bf16.gmra.mxu0 %v1147
    %v1287 = vpop.f32.mrf.mxu0
    %v1288 = vadd.f32 0.0, %v1287
    %v1289 = vpop.f32.mrf.mxu0
    %v1290 = vadd.f32 0.0, %v1289
    %v1291 = vpop.f32.mrf.mxu0
    %v1292 = vpop.f32.mrf.mxu0
    %1293 = vdwg.mxu0
    %1294 = vmatprep.subr.bf16.mxu0 %v1010
    %1295 = vmatpush1.bf16.msra.mxu0 %v1009
    %1296 = vmatprep.subr.bf16.mxu0 %v1006
    %1297 = vmatpush1.bf16.msra.mxu0 %v1005
    %1298 = vmatprep.subr.bf16.mxu0 %v1002
    %1299 = vmatpush1.bf16.msra.mxu0 %v1001
    %1300 = vmatprep.subr.bf16.mxu0 %v998
    %1301 = vmatpush1.bf16.msra.mxu0 %v997
    %1302 = vmatprep.subr.bf16.mxu0 %v994
    %1303 = vmatpush1.bf16.msra.mxu0 %v993
    %1304 = vmatprep.subr.bf16.mxu0 %v990
    %1305 = vmatpush1.bf16.msra.mxu0 %v989
    %1306 = vmatprep.subr.bf16.mxu0 %v986
    %1307 = vmatpush1.bf16.msra.mxu0 %v985
    %1308 = vmatprep.subr.bf16.mxu0 %v982
    %1309 = vmatpush1.bf16.msra.mxu0 %v981
    %1310 = vmatprep.subr.bf16.mxu0 0
    %1311 = vmatpush2.bf16.msra.mxu0 0
    %1312 = vmatprep.subr.bf16.mxu0 0
    %1313 = vmatpush2.bf16.msra.mxu0 0
    %1314 = vmatprep.subr.bf16.mxu0 0
    %1315 = vmatpush2.bf16.msra.mxu0 0
    %1316 = vmatprep.subr.bf16.mxu0 0
    %1317 = vmatpush2.bf16.msra.mxu0 0
    %1318 = vmatprep.subr.bf16.mxu0 0
    %1319 = vmatpush2.bf16.msra.mxu0 0
    %1320 = vmatprep.subr.bf16.mxu0 0
    %1321 = vmatpush2.bf16.msra.mxu0 0
    %1322 = vmatprep.subr.bf16.mxu0 0
    %1323 = vmatpush2.bf16.msra.mxu0 0
    %1324 = vmatprep.subr.bf16.mxu0 0
    %1325 = vmatpush2.bf16.msra.mxu0 0
    %1326 = vmatprep.mubr.bf16.mxu0 0
    %1327 = vmatmul.mubr.bf16.gmra.mxu0 %v1147
    %v1328 = vpop.f32.mrf.mxu0
    %v1329 = vadd.f32 0.0, %v1328
    %v1330 = vpop.f32.mrf.mxu0
    %v1331 = vadd.f32 0.0, %v1330
    %v1332 = vpop.f32.mrf.mxu0
    %v1333 = vpop.f32.mrf.mxu0
    %1334 = vdwg.mxu0
    %v1335 = vadd.f32 %v1249, %v1288
    %v1336 = vadd.f32 %v1250, %v1290
    %v1337 = vadd.f32 %v1251, %v1329
    %v1338 = vadd.f32 %v1252, %v1331
    %v1339 = vmul.f32 %v1335, 0.5
    %v1340 = vtanh.pop %v1339
    %v1341 = vmul.f32 %v1340, 0.5
    %v1342 = vadd.f32 %v1341, 0.5
    %v1343 = vmul.f32 %v1336, 0.5
    %v1344 = vtanh.pop %v1343
    %v1345 = vmul.f32 %v1344, 0.5
    %v1346 = vadd.f32 %v1345, 0.5
    %v1347 = vtanh.pop %v1337
    %v1348 = vmul.f32 %v1338, 0.5
    %v1349 = vtanh.pop %v1348
    %v1350 = vmul.f32 %v1349, 0.5
    %v1351 = vadd.f32 %v1350, 0.5
    %v1352 = vmul.f32 %v1346, %v1144
    %v1353 = vmul.f32 %v1342, %v1347
    %v1354 = vadd.f32 %v1352, %v1353
    %v1355 = vtanh.pop %v1354
    %v1356 = vmul.f32 %v1351, %v1355
    %v1357 = vpack.c.bf16 %v1356, %v1356
    %v1358 = vpack.c.bf16 %v1248, %v1248
    %1359 = vmatprep.subr.bf16.mxu0 %v680
    %1360 = vmatpush1.bf16.msra.mxu0 %v679
    %1361 = vmatprep.subr.bf16.mxu0 %v676
    %1362 = vmatpush1.bf16.msra.mxu0 %v675
    %1363 = vmatprep.subr.bf16.mxu0 %v672
    %1364 = vmatpush1.bf16.msra.mxu0 %v671
    %1365 = vmatprep.subr.bf16.mxu0 %v668
    %1366 = vmatpush1.bf16.msra.mxu0 %v667
    %1367 = vmatprep.subr.bf16.mxu0 %v664
    %1368 = vmatpush1.bf16.msra.mxu0 %v663
    %1369 = vmatprep.subr.bf16.mxu0 %v660
    %1370 = vmatpush1.bf16.msra.mxu0 %v659
    %1371 = vmatprep.subr.bf16.mxu0 %v656
    %1372 = vmatpush1.bf16.msra.mxu0 %v655
    %1373 = vmatprep.subr.bf16.mxu0 %v652
    %1374 = vmatpush1.bf16.msra.mxu0 %v651
    %1375 = vmatprep.subr.bf16.mxu0 %v712
    %1376 = vmatpush2.bf16.msra.mxu0 %v711
    %1377 = vmatprep.subr.bf16.mxu0 %v708
    %1378 = vmatpush2.bf16.msra.mxu0 %v707
    %1379 = vmatprep.subr.bf16.mxu0 %v704
    %1380 = vmatpush2.bf16.msra.mxu0 %v703
    %1381 = vmatprep.subr.bf16.mxu0 %v700
    %1382 = vmatpush2.bf16.msra.mxu0 %v699
    %1383 = vmatprep.subr.bf16.mxu0 %v696
    %1384 = vmatpush2.bf16.msra.mxu0 %v695
    %1385 = vmatprep.subr.bf16.mxu0 %v692
    %1386 = vmatpush2.bf16.msra.mxu0 %v691
    %1387 = vmatprep.subr.bf16.mxu0 %v688
    %1388 = vmatpush2.bf16.msra.mxu0 %v687
    %1389 = vmatprep.subr.bf16.mxu0 %v684
    %1390 = vmatpush2.bf16.msra.mxu0 %v683
    %1391 = vmatprep.mubr.bf16.mxu0 %v1358
    %1392 = vmatmul.mubr.bf16.gmra.mxu0 %v1357
    %v1393 = vpop.f32.mrf.mxu0
    %v1394 = vadd.f32 %v442, %v1393
    %v1395 = vpop.f32.mrf.mxu0
    %v1396 = vadd.f32 %v446, %v1395
    %v1397 = vpop.f32.mrf.mxu0
    %v1398 = vpop.f32.mrf.mxu0
    %1399 = vdwg.mxu0
    %1400 = vmatprep.subr.bf16.mxu0 %v682
    %1401 = vmatpush1.bf16.msra.mxu0 %v681
    %1402 = vmatprep.subr.bf16.mxu0 %v678
    %1403 = vmatpush1.bf16.msra.mxu0 %v677
    %1404 = vmatprep.subr.bf16.mxu0 %v674
    %1405 = vmatpush1.bf16.msra.mxu0 %v673
    %1406 = vmatprep.subr.bf16.mxu0 %v670
    %1407 = vmatpush1.bf16.msra.mxu0 %v669
    %1408 = vmatprep.subr.bf16.mxu0 %v666
    %1409 = vmatpush1.bf16.msra.mxu0 %v665
    %1410 = vmatprep.subr.bf16.mxu0 %v662
    %1411 = vmatpush1.bf16.msra.mxu0 %v661
    %1412 = vmatprep.subr.bf16.mxu0 %v658
    %1413 = vmatpush1.bf16.msra.mxu0 %v657
    %1414 = vmatprep.subr.bf16.mxu0 %v654
    %1415 = vmatpush1.bf16.msra.mxu0 %v653
    %1416 = vmatprep.subr.bf16.mxu0 %v714
    %1417 = vmatpush2.bf16.msra.mxu0 %v713
    %1418 = vmatprep.subr.bf16.mxu0 %v710
    %1419 = vmatpush2.bf16.msra.mxu0 %v709
    %1420 = vmatprep.subr.bf16.mxu0 %v706
    %1421 = vmatpush2.bf16.msra.mxu0 %v705
    %1422 = vmatprep.subr.bf16.mxu0 %v702
    %1423 = vmatpush2.bf16.msra.mxu0 %v701
    %1424 = vmatprep.subr.bf16.mxu0 %v698
    %1425 = vmatpush2.bf16.msra.mxu0 %v697
    %1426 = vmatprep.subr.bf16.mxu0 %v694
    %1427 = vmatpush2.bf16.msra.mxu0 %v693
    %1428 = vmatprep.subr.bf16.mxu0 %v690
    %1429 = vmatpush2.bf16.msra.mxu0 %v689
    %1430 = vmatprep.subr.bf16.mxu0 %v686
    %1431 = vmatpush2.bf16.msra.mxu0 %v685
    %1432 = vmatprep.mubr.bf16.mxu0 %v1358
    %1433 = vmatmul.mubr.bf16.gmra.mxu0 %v1357
    %v1434 = vpop.f32.mrf.mxu0
    %v1435 = vadd.f32 %v450, %v1434
    %v1436 = vpop.f32.mrf.mxu0
    %v1437 = vadd.f32 %v454, %v1436
    %v1438 = vpop.f32.mrf.mxu0
    %v1439 = vpop.f32.mrf.mxu0
    %1440 = vdwg.mxu0
    %v1441 = vmul.f32 %v1394, 0.5
    %v1442 = vtanh.pop %v1441
    %v1443 = vmul.f32 %v1442, 0.5
    %v1444 = vadd.f32 %v1443, 0.5
    %v1445 = vmul.f32 %v1396, 0.5
    %v1446 = vtanh.pop %v1445
    %v1447 = vmul.f32 %v1446, 0.5
    %v1448 = vadd.f32 %v1447, 0.5
    %v1449 = vtanh.pop %v1435
    %v1450 = vmul.f32 %v1437, 0.5
    %v1451 = vtanh.pop %v1450
    %v1452 = vmul.f32 %v1451, 0.5
    %v1453 = vadd.f32 %v1452, 0.5
    %v1454 = vmul.f32 %v1448, %v1246
    %v1455 = vmul.f32 %v1444, %v1449
    %v1456 = vadd.f32 %v1454, %v1455
    %v1457 = vtanh.pop %v1456
    %v1458 = vmul.f32 %v1453, %v1457
    %v1459 = vld [vmem:[#allocation4 + $0x60] sm:$0xff]
    %v1460 = vld [vmem:[#allocation4 + $0x68] sm:$0xff]
    %v1461 = vld [vmem:[#allocation4 + $0x70] sm:$0xff]
    %v1462 = vld [vmem:[#allocation4 + $0x78] sm:$0xff]
    %1463 = vmatprep.subr.bf16.mxu0 %v1008
    %1464 = vmatpush1.bf16.msra.mxu0 %v1007
    %1465 = vmatprep.subr.bf16.mxu0 %v1004
    %1466 = vmatpush1.bf16.msra.mxu0 %v1003
    %1467 = vmatprep.subr.bf16.mxu0 %v1000
    %1468 = vmatpush1.bf16.msra.mxu0 %v999
    %1469 = vmatprep.subr.bf16.mxu0 %v996
    %1470 = vmatpush1.bf16.msra.mxu0 %v995
    %1471 = vmatprep.subr.bf16.mxu0 %v992
    %1472 = vmatpush1.bf16.msra.mxu0 %v991
    %1473 = vmatprep.subr.bf16.mxu0 %v988
    %1474 = vmatpush1.bf16.msra.mxu0 %v987
    %1475 = vmatprep.subr.bf16.mxu0 %v984
    %1476 = vmatpush1.bf16.msra.mxu0 %v983
    %1477 = vmatprep.subr.bf16.mxu0 %v980
    %1478 = vmatpush1.bf16.msra.mxu0 %v979
    %1479 = vmatprep.subr.bf16.mxu0 0
    %1480 = vmatpush2.bf16.msra.mxu0 0
    %1481 = vmatprep.subr.bf16.mxu0 0
    %1482 = vmatpush2.bf16.msra.mxu0 0
    %1483 = vmatprep.subr.bf16.mxu0 0
    %1484 = vmatpush2.bf16.msra.mxu0 0
    %1485 = vmatprep.subr.bf16.mxu0 0
    %1486 = vmatpush2.bf16.msra.mxu0 0
    %1487 = vmatprep.subr.bf16.mxu0 0
    %1488 = vmatpush2.bf16.msra.mxu0 0
    %1489 = vmatprep.subr.bf16.mxu0 0
    %1490 = vmatpush2.bf16.msra.mxu0 0
    %1491 = vmatprep.subr.bf16.mxu0 0
    %1492 = vmatpush2.bf16.msra.mxu0 0
    %1493 = vmatprep.subr.bf16.mxu0 0
    %1494 = vmatpush2.bf16.msra.mxu0 0
    %1495 = vmatprep.mubr.bf16.mxu0 0
    %1496 = vmatmul.mubr.bf16.gmra.mxu0 %v1357
    %v1497 = vpop.f32.mrf.mxu0
    %v1498 = vadd.f32 0.0, %v1497
    %v1499 = vpop.f32.mrf.mxu0
    %v1500 = vadd.f32 0.0, %v1499
    %v1501 = vpop.f32.mrf.mxu0
    %v1502 = vpop.f32.mrf.mxu0
    %1503 = vdwg.mxu0
    %1504 = vmatprep.subr.bf16.mxu0 %v1010
    %1505 = vmatpush1.bf16.msra.mxu0 %v1009
    %1506 = vmatprep.subr.bf16.mxu0 %v1006
    %1507 = vmatpush1.bf16.msra.mxu0 %v1005
    %1508 = vmatprep.subr.bf16.mxu0 %v1002
    %1509 = vmatpush1.bf16.msra.mxu0 %v1001
    %1510 = vmatprep.subr.bf16.mxu0 %v998
    %1511 = vmatpush1.bf16.msra.mxu0 %v997
    %1512 = vmatprep.subr.bf16.mxu0 %v994
    %1513 = vmatpush1.bf16.msra.mxu0 %v993
    %1514 = vmatprep.subr.bf16.mxu0 %v990
    %1515 = vmatpush1.bf16.msra.mxu0 %v989
    %1516 = vmatprep.subr.bf16.mxu0 %v986
    %1517 = vmatpush1.bf16.msra.mxu0 %v985
    %1518 = vmatprep.subr.bf16.mxu0 %v982
    %1519 = vmatpush1.bf16.msra.mxu0 %v981
    %1520 = vmatprep.subr.bf16.mxu0 0
    %1521 = vmatpush2.bf16.msra.mxu0 0
    %1522 = vmatprep.subr.bf16.mxu0 0
    %1523 = vmatpush2.bf16.msra.mxu0 0
    %1524 = vmatprep.subr.bf16.mxu0 0
    %1525 = vmatpush2.bf16.msra.mxu0 0
    %1526 = vmatprep.subr.bf16.mxu0 0
    %1527 = vmatpush2.bf16.msra.mxu0 0
    %1528 = vmatprep.subr.bf16.mxu0 0
    %1529 = vmatpush2.bf16.msra.mxu0 0
    %1530 = vmatprep.subr.bf16.mxu0 0
    %1531 = vmatpush2.bf16.msra.mxu0 0
    %1532 = vmatprep.subr.bf16.mxu0 0
    %1533 = vmatpush2.bf16.msra.mxu0 0
    %1534 = vmatprep.subr.bf16.mxu0 0
    %1535 = vmatpush2.bf16.msra.mxu0 0
    %1536 = vmatprep.mubr.bf16.mxu0 0
    %1537 = vmatmul.mubr.bf16.gmra.mxu0 %v1357
    %v1538 = vpop.f32.mrf.mxu0
    %v1539 = vadd.f32 0.0, %v1538
    %v1540 = vpop.f32.mrf.mxu0
    %v1541 = vadd.f32 0.0, %v1540
    %v1542 = vpop.f32.mrf.mxu0
    %v1543 = vpop.f32.mrf.mxu0
    %1544 = vdwg.mxu0
    %v1545 = vadd.f32 %v1459, %v1498
    %v1546 = vadd.f32 %v1460, %v1500
    %v1547 = vadd.f32 %v1461, %v1539
    %v1548 = vadd.f32 %v1462, %v1541
    %v1549 = vmul.f32 %v1545, 0.5
    %v1550 = vtanh.pop %v1549
    %v1551 = vmul.f32 %v1550, 0.5
    %v1552 = vadd.f32 %v1551, 0.5
    %v1553 = vmul.f32 %v1546, 0.5
    %v1554 = vtanh.pop %v1553
    %v1555 = vmul.f32 %v1554, 0.5
    %v1556 = vadd.f32 %v1555, 0.5
    %v1557 = vtanh.pop %v1547
    %v1558 = vmul.f32 %v1548, 0.5
    %v1559 = vtanh.pop %v1558
    %v1560 = vmul.f32 %v1559, 0.5
    %v1561 = vadd.f32 %v1560, 0.5
    %v1562 = vmul.f32 %v1556, %v1354
    %v1563 = vmul.f32 %v1552, %v1557
    %v1564 = vadd.f32 %v1562, %v1563
    %v1565 = vtanh.pop %v1564
    %v1566 = vmul.f32 %v1561, %v1565
    %v1567 = vpack.c.bf16 %v1566, %v1566
    %v1568 = vpack.c.bf16 %v1458, %v1458
    %1569 = vmatprep.subr.bf16.mxu0 %v680
    %1570 = vmatpush1.bf16.msra.mxu0 %v679
    %1571 = vmatprep.subr.bf16.mxu0 %v676
    %1572 = vmatpush1.bf16.msra.mxu0 %v675
    %1573 = vmatprep.subr.bf16.mxu0 %v672
    %1574 = vmatpush1.bf16.msra.mxu0 %v671
    %1575 = vmatprep.subr.bf16.mxu0 %v668
    %1576 = vmatpush1.bf16.msra.mxu0 %v667
    %1577 = vmatprep.subr.bf16.mxu0 %v664
    %1578 = vmatpush1.bf16.msra.mxu0 %v663
    %1579 = vmatprep.subr.bf16.mxu0 %v660
    %1580 = vmatpush1.bf16.msra.mxu0 %v659
    %1581 = vmatprep.subr.bf16.mxu0 %v656
    %1582 = vmatpush1.bf16.msra.mxu0 %v655
    %1583 = vmatprep.subr.bf16.mxu0 %v652
    %1584 = vmatpush1.bf16.msra.mxu0 %v651
    %1585 = vmatprep.subr.bf16.mxu0 %v712
    %1586 = vmatpush2.bf16.msra.mxu0 %v711
    %1587 = vmatprep.subr.bf16.mxu0 %v708
    %1588 = vmatpush2.bf16.msra.mxu0 %v707
    %1589 = vmatprep.subr.bf16.mxu0 %v704
    %1590 = vmatpush2.bf16.msra.mxu0 %v703
    %1591 = vmatprep.subr.bf16.mxu0 %v700
    %1592 = vmatpush2.bf16.msra.mxu0 %v699
    %1593 = vmatprep.subr.bf16.mxu0 %v696
    %1594 = vmatpush2.bf16.msra.mxu0 %v695
    %1595 = vmatprep.subr.bf16.mxu0 %v692
    %1596 = vmatpush2.bf16.msra.mxu0 %v691
    %1597 = vmatprep.subr.bf16.mxu0 %v688
    %1598 = vmatpush2.bf16.msra.mxu0 %v687
    %1599 = vmatprep.subr.bf16.mxu0 %v684
    %1600 = vmatpush2.bf16.msra.mxu0 %v683
    %1601 = vmatprep.mubr.bf16.mxu0 %v1568
    %1602 = vmatmul.mubr.bf16.gmra.mxu0 %v1567
    %v1603 = vpop.f32.mrf.mxu0
    %v1604 = vadd.f32 %v442, %v1603
    %v1605 = vpop.f32.mrf.mxu0
    %v1606 = vadd.f32 %v446, %v1605
    %v1607 = vpop.f32.mrf.mxu0
    %v1608 = vpop.f32.mrf.mxu0
    %1609 = vdwg.mxu0
    %1610 = vmatprep.subr.bf16.mxu0 %v682
    %1611 = vmatpush1.bf16.msra.mxu0 %v681
    %1612 = vmatprep.subr.bf16.mxu0 %v678
    %1613 = vmatpush1.bf16.msra.mxu0 %v677
    %1614 = vmatprep.subr.bf16.mxu0 %v674
    %1615 = vmatpush1.bf16.msra.mxu0 %v673
    %1616 = vmatprep.subr.bf16.mxu0 %v670
    %1617 = vmatpush1.bf16.msra.mxu0 %v669
    %1618 = vmatprep.subr.bf16.mxu0 %v666
    %1619 = vmatpush1.bf16.msra.mxu0 %v665
    %1620 = vmatprep.subr.bf16.mxu0 %v662
    %1621 = vmatpush1.bf16.msra.mxu0 %v661
    %1622 = vmatprep.subr.bf16.mxu0 %v658
    %1623 = vmatpush1.bf16.msra.mxu0 %v657
    %1624 = vmatprep.subr.bf16.mxu0 %v654
    %1625 = vmatpush1.bf16.msra.mxu0 %v653
    %1626 = vmatprep.subr.bf16.mxu0 %v714
    %1627 = vmatpush2.bf16.msra.mxu0 %v713
    %1628 = vmatprep.subr.bf16.mxu0 %v710
    %1629 = vmatpush2.bf16.msra.mxu0 %v709
    %1630 = vmatprep.subr.bf16.mxu0 %v706
    %1631 = vmatpush2.bf16.msra.mxu0 %v705
    %1632 = vmatprep.subr.bf16.mxu0 %v702
    %1633 = vmatpush2.bf16.msra.mxu0 %v701
    %1634 = vmatprep.subr.bf16.mxu0 %v698
    %1635 = vmatpush2.bf16.msra.mxu0 %v697
    %1636 = vmatprep.subr.bf16.mxu0 %v694
    %1637 = vmatpush2.bf16.msra.mxu0 %v693
    %1638 = vmatprep.subr.bf16.mxu0 %v690
    %1639 = vmatpush2.bf16.msra.mxu0 %v689
    %1640 = vmatprep.subr.bf16.mxu0 %v686
    %1641 = vmatpush2.bf16.msra.mxu0 %v685
    %1642 = vmatprep.mubr.bf16.mxu0 %v1568
    %1643 = vmatmul.mubr.bf16.gmra.mxu0 %v1567
    %v1644 = vpop.f32.mrf.mxu0
    %v1645 = vadd.f32 %v450, %v1644
    %v1646 = vpop.f32.mrf.mxu0
    %v1647 = vadd.f32 %v454, %v1646
    %v1648 = vpop.f32.mrf.mxu0
    %v1649 = vpop.f32.mrf.mxu0
    %1650 = vdwg.mxu0
    %v1651 = vmul.f32 %v1604, 0.5
    %v1652 = vtanh.pop %v1651
    %v1653 = vmul.f32 %v1652, 0.5
    %v1654 = vadd.f32 %v1653, 0.5
    %v1655 = vmul.f32 %v1606, 0.5
    %v1656 = vtanh.pop %v1655
    %v1657 = vmul.f32 %v1656, 0.5
    %v1658 = vadd.f32 %v1657, 0.5
    %v1659 = vtanh.pop %v1645
    %v1660 = vmul.f32 %v1647, 0.5
    %v1661 = vtanh.pop %v1660
    %v1662 = vmul.f32 %v1661, 0.5
    %v1663 = vadd.f32 %v1662, 0.5
    %v1664 = vmul.f32 %v1658, %v1456
    %v1665 = vmul.f32 %v1654, %v1659
    %v1666 = vadd.f32 %v1664, %v1665
    %v1667 = vtanh.pop %v1666
    %v1668 = vmul.f32 %v1663, %v1667
    %v1669 = vld [vmem:[#allocation4 + $0x80] sm:$0xff]
    %v1670 = vld [vmem:[#allocation4 + $0x88] sm:$0xff]
    %v1671 = vld [vmem:[#allocation4 + $0x90] sm:$0xff]
    %v1672 = vld [vmem:[#allocation4 + $0x98] sm:$0xff]
    %1673 = vmatprep.subr.bf16.mxu0 %v1008
    %1674 = vmatpush1.bf16.msra.mxu0 %v1007
    %1675 = vmatprep.subr.bf16.mxu0 %v1004
    %1676 = vmatpush1.bf16.msra.mxu0 %v1003
    %1677 = vmatprep.subr.bf16.mxu0 %v1000
    %1678 = vmatpush1.bf16.msra.mxu0 %v999
    %1679 = vmatprep.subr.bf16.mxu0 %v996
    %1680 = vmatpush1.bf16.msra.mxu0 %v995
    %1681 = vmatprep.subr.bf16.mxu0 %v992
    %1682 = vmatpush1.bf16.msra.mxu0 %v991
    %1683 = vmatprep.subr.bf16.mxu0 %v988
    %1684 = vmatpush1.bf16.msra.mxu0 %v987
    %1685 = vmatprep.subr.bf16.mxu0 %v984
    %1686 = vmatpush1.bf16.msra.mxu0 %v983
    %1687 = vmatprep.subr.bf16.mxu0 %v980
    %1688 = vmatpush1.bf16.msra.mxu0 %v979
    %1689 = vmatprep.subr.bf16.mxu0 0
    %1690 = vmatpush2.bf16.msra.mxu0 0
    %1691 = vmatprep.subr.bf16.mxu0 0
    %1692 = vmatpush2.bf16.msra.mxu0 0
    %1693 = vmatprep.subr.bf16.mxu0 0
    %1694 = vmatpush2.bf16.msra.mxu0 0
    %1695 = vmatprep.subr.bf16.mxu0 0
    %1696 = vmatpush2.bf16.msra.mxu0 0
    %1697 = vmatprep.subr.bf16.mxu0 0
    %1698 = vmatpush2.bf16.msra.mxu0 0
    %1699 = vmatprep.subr.bf16.mxu0 0
    %1700 = vmatpush2.bf16.msra.mxu0 0
    %1701 = vmatprep.subr.bf16.mxu0 0
    %1702 = vmatpush2.bf16.msra.mxu0 0
    %1703 = vmatprep.subr.bf16.mxu0 0
    %1704 = vmatpush2.bf16.msra.mxu0 0
    %1705 = vmatprep.mubr.bf16.mxu0 0
    %1706 = vmatmul.mubr.bf16.gmra.mxu0 %v1567
    %v1707 = vpop.f32.mrf.mxu0
    %v1708 = vadd.f32 0.0, %v1707
    %v1709 = vpop.f32.mrf.mxu0
    %v1710 = vadd.f32 0.0, %v1709
    %v1711 = vpop.f32.mrf.mxu0
    %v1712 = vpop.f32.mrf.mxu0
    %1713 = vdwg.mxu0
    %1714 = vmatprep.subr.bf16.mxu0 %v1010
    %1715 = vmatpush1.bf16.msra.mxu0 %v1009
    %1716 = vmatprep.subr.bf16.mxu0 %v1006
    %1717 = vmatpush1.bf16.msra.mxu0 %v1005
    %1718 = vmatprep.subr.bf16.mxu0 %v1002
    %1719 = vmatpush1.bf16.msra.mxu0 %v1001
    %1720 = vmatprep.subr.bf16.mxu0 %v998
    %1721 = vmatpush1.bf16.msra.mxu0 %v997
    %1722 = vmatprep.subr.bf16.mxu0 %v994
    %1723 = vmatpush1.bf16.msra.mxu0 %v993
    %1724 = vmatprep.subr.bf16.mxu0 %v990
    %1725 = vmatpush1.bf16.msra.mxu0 %v989
    %1726 = vmatprep.subr.bf16.mxu0 %v986
    %1727 = vmatpush1.bf16.msra.mxu0 %v985
    %1728 = vmatprep.subr.bf16.mxu0 %v982
    %1729 = vmatpush1.bf16.msra.mxu0 %v981
    %1730 = vmatprep.subr.bf16.mxu0 0
    %1731 = vmatpush2.bf16.msra.mxu0 0
    %1732 = vmatprep.subr.bf16.mxu0 0
    %1733 = vmatpush2.bf16.msra.mxu0 0
    %1734 = vmatprep.subr.bf16.mxu0 0
    %1735 = vmatpush2.bf16.msra.mxu0 0
    %1736 = vmatprep.subr.bf16.mxu0 0
    %1737 = vmatpush2.bf16.msra.mxu0 0
    %1738 = vmatprep.subr.bf16.mxu0 0
    %1739 = vmatpush2.bf16.msra.mxu0 0
    %1740 = vmatprep.subr.bf16.mxu0 0
    %1741 = vmatpush2.bf16.msra.mxu0 0
    %1742 = vmatprep.subr.bf16.mxu0 0
    %1743 = vmatpush2.bf16.msra.mxu0 0
    %1744 = vmatprep.subr.bf16.mxu0 0
    %1745 = vmatpush2.bf16.msra.mxu0 0
    %1746 = vmatprep.mubr.bf16.mxu0 0
    %1747 = vmatmul.mubr.bf16.gmra.mxu0 %v1567
    %v1748 = vpop.f32.mrf.mxu0
    %v1749 = vadd.f32 0.0, %v1748
    %v1750 = vpop.f32.mrf.mxu0
    %v1751 = vadd.f32 0.0, %v1750
    %v1752 = vpop.f32.mrf.mxu0
    %v1753 = vpop.f32.mrf.mxu0
    %1754 = vdwg.mxu0
    %v1755 = vadd.f32 %v1669, %v1708
    %v1756 = vadd.f32 %v1670, %v1710
    %v1757 = vadd.f32 %v1671, %v1749
    %v1758 = vadd.f32 %v1672, %v1751
    %v1759 = vmul.f32 %v1755, 0.5
    %v1760 = vtanh.pop %v1759
    %v1761 = vmul.f32 %v1760, 0.5
    %v1762 = vadd.f32 %v1761, 0.5
    %v1763 = vmul.f32 %v1756, 0.5
    %v1764 = vtanh.pop %v1763
    %v1765 = vmul.f32 %v1764, 0.5
    %v1766 = vadd.f32 %v1765, 0.5
    %v1767 = vtanh.pop %v1757
    %v1768 = vmul.f32 %v1758, 0.5
    %v1769 = vtanh.pop %v1768
    %v1770 = vmul.f32 %v1769, 0.5
    %v1771 = vadd.f32 %v1770, 0.5
    %v1772 = vmul.f32 %v1766, %v1564
    %v1773 = vmul.f32 %v1762, %v1767
    %v1774 = vadd.f32 %v1772, %v1773
    %v1775 = vtanh.pop %v1774
    %v1776 = vmul.f32 %v1771, %v1775
    %v1777 = vpack.c.bf16 %v1776, %v1776
    %v1778 = vpack.c.bf16 %v1668, %v1668
    %1779 = vmatprep.subr.bf16.mxu0 %v680
    %1780 = vmatpush1.bf16.msra.mxu0 %v679
    %1781 = vmatprep.subr.bf16.mxu0 %v676
    %1782 = vmatpush1.bf16.msra.mxu0 %v675
    %1783 = vmatprep.subr.bf16.mxu0 %v672
    %1784 = vmatpush1.bf16.msra.mxu0 %v671
    %1785 = vmatprep.subr.bf16.mxu0 %v668
    %1786 = vmatpush1.bf16.msra.mxu0 %v667
    %1787 = vmatprep.subr.bf16.mxu0 %v664
    %1788 = vmatpush1.bf16.msra.mxu0 %v663
    %1789 = vmatprep.subr.bf16.mxu0 %v660
    %1790 = vmatpush1.bf16.msra.mxu0 %v659
    %1791 = vmatprep.subr.bf16.mxu0 %v656
    %1792 = vmatpush1.bf16.msra.mxu0 %v655
    %1793 = vmatprep.subr.bf16.mxu0 %v652
    %1794 = vmatpush1.bf16.msra.mxu0 %v651
    %1795 = vmatprep.subr.bf16.mxu0 %v712
    %1796 = vmatpush2.bf16.msra.mxu0 %v711
    %1797 = vmatprep.subr.bf16.mxu0 %v708
    %1798 = vmatpush2.bf16.msra.mxu0 %v707
    %1799 = vmatprep.subr.bf16.mxu0 %v704
    %1800 = vmatpush2.bf16.msra.mxu0 %v703
    %1801 = vmatprep.subr.bf16.mxu0 %v700
    %1802 = vmatpush2.bf16.msra.mxu0 %v699
    %1803 = vmatprep.subr.bf16.mxu0 %v696
    %1804 = vmatpush2.bf16.msra.mxu0 %v695
    %1805 = vmatprep.subr.bf16.mxu0 %v692
    %1806 = vmatpush2.bf16.msra.mxu0 %v691
    %1807 = vmatprep.subr.bf16.mxu0 %v688
    %1808 = vmatpush2.bf16.msra.mxu0 %v687
    %1809 = vmatprep.subr.bf16.mxu0 %v684
    %1810 = vmatpush2.bf16.msra.mxu0 %v683
    %1811 = vmatprep.mubr.bf16.mxu0 %v1778
    %1812 = vmatmul.mubr.bf16.gmra.mxu0 %v1777
    %v1813 = vpop.f32.mrf.mxu0
    %v1814 = vadd.f32 %v442, %v1813
    %v1815 = vpop.f32.mrf.mxu0
    %v1816 = vadd.f32 %v446, %v1815
    %v1817 = vpop.f32.mrf.mxu0
    %v1818 = vpop.f32.mrf.mxu0
    %1819 = vdwg.mxu0
    %1820 = vmatprep.subr.bf16.mxu0 %v682
    %1821 = vmatpush1.bf16.msra.mxu0 %v681
    %1822 = vmatprep.subr.bf16.mxu0 %v678
    %1823 = vmatpush1.bf16.msra.mxu0 %v677
    %1824 = vmatprep.subr.bf16.mxu0 %v674
    %1825 = vmatpush1.bf16.msra.mxu0 %v673
    %1826 = vmatprep.subr.bf16.mxu0 %v670
    %1827 = vmatpush1.bf16.msra.mxu0 %v669
    %1828 = vmatprep.subr.bf16.mxu0 %v666
    %1829 = vmatpush1.bf16.msra.mxu0 %v665
    %1830 = vmatprep.subr.bf16.mxu0 %v662
    %1831 = vmatpush1.bf16.msra.mxu0 %v661
    %1832 = vmatprep.subr.bf16.mxu0 %v658
    %1833 = vmatpush1.bf16.msra.mxu0 %v657
    %1834 = vmatprep.subr.bf16.mxu0 %v654
    %1835 = vmatpush1.bf16.msra.mxu0 %v653
    %1836 = vmatprep.subr.bf16.mxu0 %v714
    %1837 = vmatpush2.bf16.msra.mxu0 %v713
    %1838 = vmatprep.subr.bf16.mxu0 %v710
    %1839 = vmatpush2.bf16.msra.mxu0 %v709
    %1840 = vmatprep.subr.bf16.mxu0 %v706
    %1841 = vmatpush2.bf16.msra.mxu0 %v705
    %1842 = vmatprep.subr.bf16.mxu0 %v702
    %1843 = vmatpush2.bf16.msra.mxu0 %v701
    %1844 = vmatprep.subr.bf16.mxu0 %v698
    %1845 = vmatpush2.bf16.msra.mxu0 %v697
    %1846 = vmatprep.subr.bf16.mxu0 %v694
    %1847 = vmatpush2.bf16.msra.mxu0 %v693
    %1848 = vmatprep.subr.bf16.mxu0 %v690
    %1849 = vmatpush2.bf16.msra.mxu0 %v689
    %1850 = vmatprep.subr.bf16.mxu0 %v686
    %1851 = vmatpush2.bf16.msra.mxu0 %v685
    %1852 = vmatprep.mubr.bf16.mxu0 %v1778
    %1853 = vmatmul.mubr.bf16.gmra.mxu0 %v1777
    %v1854 = vpop.f32.mrf.mxu0
    %v1855 = vadd.f32 %v450, %v1854
    %v1856 = vpop.f32.mrf.mxu0
    %v1857 = vadd.f32 %v454, %v1856
    %v1858 = vpop.f32.mrf.mxu0
    %v1859 = vpop.f32.mrf.mxu0
    %1860 = vdwg.mxu0
    %v1861 = vmul.f32 %v1814, 0.5
    %v1862 = vtanh.pop %v1861
    %v1863 = vmul.f32 %v1862, 0.5
    %v1864 = vadd.f32 %v1863, 0.5
    %v1865 = vmul.f32 %v1816, 0.5
    %v1866 = vtanh.pop %v1865
    %v1867 = vmul.f32 %v1866, 0.5
    %v1868 = vadd.f32 %v1867, 0.5
    %v1869 = vtanh.pop %v1855
    %v1870 = vmul.f32 %v1857, 0.5
    %v1871 = vtanh.pop %v1870
    %v1872 = vmul.f32 %v1871, 0.5
    %v1873 = vadd.f32 %v1872, 0.5
    %v1874 = vmul.f32 %v1868, %v1666
    %v1875 = vmul.f32 %v1864, %v1869
    %v1876 = vadd.f32 %v1874, %v1875
    %v1877 = vtanh.pop %v1876
    %v1878 = vmul.f32 %v1873, %v1877
    %v1879 = vld [vmem:[#allocation4 + $0xa0] sm:$0xff]
    %v1880 = vld [vmem:[#allocation4 + $0xa8] sm:$0xff]
    %v1881 = vld [vmem:[#allocation4 + $0xb0] sm:$0xff]
    %v1882 = vld [vmem:[#allocation4 + $0xb8] sm:$0xff]
    %1883 = vmatprep.subr.bf16.mxu0 %v1008
    %1884 = vmatpush1.bf16.msra.mxu0 %v1007
    %1885 = vmatprep.subr.bf16.mxu0 %v1004
    %1886 = vmatpush1.bf16.msra.mxu0 %v1003
    %1887 = vmatprep.subr.bf16.mxu0 %v1000
    %1888 = vmatpush1.bf16.msra.mxu0 %v999
    %1889 = vmatprep.subr.bf16.mxu0 %v996
    %1890 = vmatpush1.bf16.msra.mxu0 %v995
    %1891 = vmatprep.subr.bf16.mxu0 %v992
    %1892 = vmatpush1.bf16.msra.mxu0 %v991
    %1893 = vmatprep.subr.bf16.mxu0 %v988
    %1894 = vmatpush1.bf16.msra.mxu0 %v987
    %1895 = vmatprep.subr.bf16.mxu0 %v984
    %1896 = vmatpush1.bf16.msra.mxu0 %v983
    %1897 = vmatprep.subr.bf16.mxu0 %v980
    %1898 = vmatpush1.bf16.msra.mxu0 %v979
    %1899 = vmatprep.subr.bf16.mxu0 0
    %1900 = vmatpush2.bf16.msra.mxu0 0
    %1901 = vmatprep.subr.bf16.mxu0 0
    %1902 = vmatpush2.bf16.msra.mxu0 0
    %1903 = vmatprep.subr.bf16.mxu0 0
    %1904 = vmatpush2.bf16.msra.mxu0 0
    %1905 = vmatprep.subr.bf16.mxu0 0
    %1906 = vmatpush2.bf16.msra.mxu0 0
    %1907 = vmatprep.subr.bf16.mxu0 0
    %1908 = vmatpush2.bf16.msra.mxu0 0
    %1909 = vmatprep.subr.bf16.mxu0 0
    %1910 = vmatpush2.bf16.msra.mxu0 0
    %1911 = vmatprep.subr.bf16.mxu0 0
    %1912 = vmatpush2.bf16.msra.mxu0 0
    %1913 = vmatprep.subr.bf16.mxu0 0
    %1914 = vmatpush2.bf16.msra.mxu0 0
    %1915 = vmatprep.mubr.bf16.mxu0 0
    %1916 = vmatmul.mubr.bf16.gmra.mxu0 %v1777
    %v1917 = vpop.f32.mrf.mxu0
    %v1918 = vadd.f32 0.0, %v1917
    %v1919 = vpop.f32.mrf.mxu0
    %v1920 = vadd.f32 0.0, %v1919
    %v1921 = vpop.f32.mrf.mxu0
    %v1922 = vpop.f32.mrf.mxu0
    %1923 = vdwg.mxu0
    %1924 = vmatprep.subr.bf16.mxu0 %v1010
    %1925 = vmatpush1.bf16.msra.mxu0 %v1009
    %1926 = vmatprep.subr.bf16.mxu0 %v1006
    %1927 = vmatpush1.bf16.msra.mxu0 %v1005
    %1928 = vmatprep.subr.bf16.mxu0 %v1002
    %1929 = vmatpush1.bf16.msra.mxu0 %v1001
    %1930 = vmatprep.subr.bf16.mxu0 %v998
    %1931 = vmatpush1.bf16.msra.mxu0 %v997
    %1932 = vmatprep.subr.bf16.mxu0 %v994
    %1933 = vmatpush1.bf16.msra.mxu0 %v993
    %1934 = vmatprep.subr.bf16.mxu0 %v990
    %1935 = vmatpush1.bf16.msra.mxu0 %v989
    %1936 = vmatprep.subr.bf16.mxu0 %v986
    %1937 = vmatpush1.bf16.msra.mxu0 %v985
    %1938 = vmatprep.subr.bf16.mxu0 %v982
    %1939 = vmatpush1.bf16.msra.mxu0 %v981
    %1940 = vmatprep.subr.bf16.mxu0 0
    %1941 = vmatpush2.bf16.msra.mxu0 0
    %1942 = vmatprep.subr.bf16.mxu0 0
    %1943 = vmatpush2.bf16.msra.mxu0 0
    %1944 = vmatprep.subr.bf16.mxu0 0
    %1945 = vmatpush2.bf16.msra.mxu0 0
    %1946 = vmatprep.subr.bf16.mxu0 0
    %1947 = vmatpush2.bf16.msra.mxu0 0
    %1948 = vmatprep.subr.bf16.mxu0 0
    %1949 = vmatpush2.bf16.msra.mxu0 0
    %1950 = vmatprep.subr.bf16.mxu0 0
    %1951 = vmatpush2.bf16.msra.mxu0 0
    %1952 = vmatprep.subr.bf16.mxu0 0
    %1953 = vmatpush2.bf16.msra.mxu0 0
    %1954 = vmatprep.subr.bf16.mxu0 0
    %1955 = vmatpush2.bf16.msra.mxu0 0
    %1956 = vmatprep.mubr.bf16.mxu0 0
    %1957 = vmatmul.mubr.bf16.gmra.mxu0 %v1777
    %v1958 = vpop.f32.mrf.mxu0
    %v1959 = vadd.f32 0.0, %v1958
    %v1960 = vpop.f32.mrf.mxu0
    %v1961 = vadd.f32 0.0, %v1960
    %v1962 = vpop.f32.mrf.mxu0
    %v1963 = vpop.f32.mrf.mxu0
    %1964 = vdwg.mxu0
    %v1965 = vadd.f32 %v1879, %v1918
    %v1966 = vadd.f32 %v1880, %v1920
    %v1967 = vadd.f32 %v1881, %v1959
    %v1968 = vadd.f32 %v1882, %v1961
    %v1969 = vmul.f32 %v1965, 0.5
    %v1970 = vtanh.pop %v1969
    %v1971 = vmul.f32 %v1970, 0.5
    %v1972 = vadd.f32 %v1971, 0.5
    %v1973 = vmul.f32 %v1966, 0.5
    %v1974 = vtanh.pop %v1973
    %v1975 = vmul.f32 %v1974, 0.5
    %v1976 = vadd.f32 %v1975, 0.5
    %v1977 = vtanh.pop %v1967
    %v1978 = vmul.f32 %v1968, 0.5
    %v1979 = vtanh.pop %v1978
    %v1980 = vmul.f32 %v1979, 0.5
    %v1981 = vadd.f32 %v1980, 0.5
    %v1982 = vmul.f32 %v1976, %v1774
    %v1983 = vmul.f32 %v1972, %v1977
    %v1984 = vadd.f32 %v1982, %v1983
    %v1985 = vtanh.pop %v1984
    %v1986 = vmul.f32 %v1981, %v1985
    %v1987 = vpack.c.bf16 %v1986, %v1986
    %v1988 = vpack.c.bf16 %v1878, %v1878
    %1989 = vmatprep.subr.bf16.mxu0 %v680
    %1990 = vmatpush1.bf16.msra.mxu0 %v679
    %1991 = vmatprep.subr.bf16.mxu0 %v676
    %1992 = vmatpush1.bf16.msra.mxu0 %v675
    %1993 = vmatprep.subr.bf16.mxu0 %v672
    %1994 = vmatpush1.bf16.msra.mxu0 %v671
    %1995 = vmatprep.subr.bf16.mxu0 %v668
    %1996 = vmatpush1.bf16.msra.mxu0 %v667
    %1997 = vmatprep.subr.bf16.mxu0 %v664
    %1998 = vmatpush1.bf16.msra.mxu0 %v663
    %1999 = vmatprep.subr.bf16.mxu0 %v660
    %2000 = vmatpush1.bf16.msra.mxu0 %v659
    %2001 = vmatprep.subr.bf16.mxu0 %v656
    %2002 = vmatpush1.bf16.msra.mxu0 %v655
    %2003 = vmatprep.subr.bf16.mxu0 %v652
    %2004 = vmatpush1.bf16.msra.mxu0 %v651
    %2005 = vmatprep.subr.bf16.mxu0 %v712
    %2006 = vmatpush2.bf16.msra.mxu0 %v711
    %2007 = vmatprep.subr.bf16.mxu0 %v708
    %2008 = vmatpush2.bf16.msra.mxu0 %v707
    %2009 = vmatprep.subr.bf16.mxu0 %v704
    %2010 = vmatpush2.bf16.msra.mxu0 %v703
    %2011 = vmatprep.subr.bf16.mxu0 %v700
    %2012 = vmatpush2.bf16.msra.mxu0 %v699
    %2013 = vmatprep.subr.bf16.mxu0 %v696
    %2014 = vmatpush2.bf16.msra.mxu0 %v695
    %2015 = vmatprep.subr.bf16.mxu0 %v692
    %2016 = vmatpush2.bf16.msra.mxu0 %v691
    %2017 = vmatprep.subr.bf16.mxu0 %v688
    %2018 = vmatpush2.bf16.msra.mxu0 %v687
    %2019 = vmatprep.subr.bf16.mxu0 %v684
    %2020 = vmatpush2.bf16.msra.mxu0 %v683
    %2021 = vmatprep.mubr.bf16.mxu0 %v1988
    %2022 = vmatmul.mubr.bf16.gmra.mxu0 %v1987
    %v2023 = vpop.f32.mrf.mxu0
    %v2024 = vadd.f32 %v442, %v2023
    %v2025 = vpop.f32.mrf.mxu0
    %v2026 = vadd.f32 %v446, %v2025
    %v2027 = vpop.f32.mrf.mxu0
    %v2028 = vpop.f32.mrf.mxu0
    %2029 = vdwg.mxu0
    %2030 = vmatprep.subr.bf16.mxu0 %v682
    %2031 = vmatpush1.bf16.msra.mxu0 %v681
    %2032 = vmatprep.subr.bf16.mxu0 %v678
    %2033 = vmatpush1.bf16.msra.mxu0 %v677
    %2034 = vmatprep.subr.bf16.mxu0 %v674
    %2035 = vmatpush1.bf16.msra.mxu0 %v673
    %2036 = vmatprep.subr.bf16.mxu0 %v670
    %2037 = vmatpush1.bf16.msra.mxu0 %v669
    %2038 = vmatprep.subr.bf16.mxu0 %v666
    %2039 = vmatpush1.bf16.msra.mxu0 %v665
    %2040 = vmatprep.subr.bf16.mxu0 %v662
    %2041 = vmatpush1.bf16.msra.mxu0 %v661
    %2042 = vmatprep.subr.bf16.mxu0 %v658
    %2043 = vmatpush1.bf16.msra.mxu0 %v657
    %2044 = vmatprep.subr.bf16.mxu0 %v654
    %2045 = vmatpush1.bf16.msra.mxu0 %v653
    %2046 = vmatprep.subr.bf16.mxu0 %v714
    %2047 = vmatpush2.bf16.msra.mxu0 %v713
    %2048 = vmatprep.subr.bf16.mxu0 %v710
    %2049 = vmatpush2.bf16.msra.mxu0 %v709
    %2050 = vmatprep.subr.bf16.mxu0 %v706
    %2051 = vmatpush2.bf16.msra.mxu0 %v705
    %2052 = vmatprep.subr.bf16.mxu0 %v702
    %2053 = vmatpush2.bf16.msra.mxu0 %v701
    %2054 = vmatprep.subr.bf16.mxu0 %v698
    %2055 = vmatpush2.bf16.msra.mxu0 %v697
    %2056 = vmatprep.subr.bf16.mxu0 %v694
    %2057 = vmatpush2.bf16.msra.mxu0 %v693
    %2058 = vmatprep.subr.bf16.mxu0 %v690
    %2059 = vmatpush2.bf16.msra.mxu0 %v689
    %2060 = vmatprep.subr.bf16.mxu0 %v686
    %2061 = vmatpush2.bf16.msra.mxu0 %v685
    %2062 = vmatprep.mubr.bf16.mxu0 %v1988
    %2063 = vmatmul.mubr.bf16.gmra.mxu0 %v1987
    %v2064 = vpop.f32.mrf.mxu0
    %v2065 = vadd.f32 %v450, %v2064
    %v2066 = vpop.f32.mrf.mxu0
    %v2067 = vadd.f32 %v454, %v2066
    %v2068 = vpop.f32.mrf.mxu0
    %v2069 = vpop.f32.mrf.mxu0
    %2070 = vdwg.mxu0
    %v2071 = vmul.f32 %v2024, 0.5
    %v2072 = vtanh.pop %v2071
    %v2073 = vmul.f32 %v2072, 0.5
    %v2074 = vadd.f32 %v2073, 0.5
    %v2075 = vmul.f32 %v2026, 0.5
    %v2076 = vtanh.pop %v2075
    %v2077 = vmul.f32 %v2076, 0.5
    %v2078 = vadd.f32 %v2077, 0.5
    %v2079 = vtanh.pop %v2065
    %v2080 = vmul.f32 %v2067, 0.5
    %v2081 = vtanh.pop %v2080
    %v2082 = vmul.f32 %v2081, 0.5
    %v2083 = vadd.f32 %v2082, 0.5
    %v2084 = vmul.f32 %v2078, %v1876
    %v2085 = vmul.f32 %v2074, %v2079
    %v2086 = vadd.f32 %v2084, %v2085
    %v2087 = vtanh.pop %v2086
    %v2088 = vmul.f32 %v2083, %v2087
    %v2089 = vld [vmem:[#allocation4 + $0xc0] sm:$0xff]
    %v2090 = vld [vmem:[#allocation4 + $0xc8] sm:$0xff]
    %v2091 = vld [vmem:[#allocation4 + $0xd0] sm:$0xff]
    %v2092 = vld [vmem:[#allocation4 + $0xd8] sm:$0xff]
    %2093 = vmatprep.subr.bf16.mxu0 %v1008
    %2094 = vmatpush1.bf16.msra.mxu0 %v1007
    %2095 = vmatprep.subr.bf16.mxu0 %v1004
    %2096 = vmatpush1.bf16.msra.mxu0 %v1003
    %2097 = vmatprep.subr.bf16.mxu0 %v1000
    %2098 = vmatpush1.bf16.msra.mxu0 %v999
    %2099 = vmatprep.subr.bf16.mxu0 %v996
    %2100 = vmatpush1.bf16.msra.mxu0 %v995
    %2101 = vmatprep.subr.bf16.mxu0 %v992
    %2102 = vmatpush1.bf16.msra.mxu0 %v991
    %2103 = vmatprep.subr.bf16.mxu0 %v988
    %2104 = vmatpush1.bf16.msra.mxu0 %v987
    %2105 = vmatprep.subr.bf16.mxu0 %v984
    %2106 = vmatpush1.bf16.msra.mxu0 %v983
    %2107 = vmatprep.subr.bf16.mxu0 %v980
    %2108 = vmatpush1.bf16.msra.mxu0 %v979
    %2109 = vmatprep.subr.bf16.mxu0 0
    %2110 = vmatpush2.bf16.msra.mxu0 0
    %2111 = vmatprep.subr.bf16.mxu0 0
    %2112 = vmatpush2.bf16.msra.mxu0 0
    %2113 = vmatprep.subr.bf16.mxu0 0
    %2114 = vmatpush2.bf16.msra.mxu0 0
    %2115 = vmatprep.subr.bf16.mxu0 0
    %2116 = vmatpush2.bf16.msra.mxu0 0
    %2117 = vmatprep.subr.bf16.mxu0 0
    %2118 = vmatpush2.bf16.msra.mxu0 0
    %2119 = vmatprep.subr.bf16.mxu0 0
    %2120 = vmatpush2.bf16.msra.mxu0 0
    %2121 = vmatprep.subr.bf16.mxu0 0
    %2122 = vmatpush2.bf16.msra.mxu0 0
    %2123 = vmatprep.subr.bf16.mxu0 0
    %2124 = vmatpush2.bf16.msra.mxu0 0
    %2125 = vmatprep.mubr.bf16.mxu0 0
    %2126 = vmatmul.mubr.bf16.gmra.mxu0 %v1987
    %v2127 = vpop.f32.mrf.mxu0
    %v2128 = vadd.f32 0.0, %v2127
    %v2129 = vpop.f32.mrf.mxu0
    %v2130 = vadd.f32 0.0, %v2129
    %v2131 = vpop.f32.mrf.mxu0
    %v2132 = vpop.f32.mrf.mxu0
    %2133 = vdwg.mxu0
    %2134 = vmatprep.subr.bf16.mxu0 %v1010
    %2135 = vmatpush1.bf16.msra.mxu0 %v1009
    %2136 = vmatprep.subr.bf16.mxu0 %v1006
    %2137 = vmatpush1.bf16.msra.mxu0 %v1005
    %2138 = vmatprep.subr.bf16.mxu0 %v1002
    %2139 = vmatpush1.bf16.msra.mxu0 %v1001
    %2140 = vmatprep.subr.bf16.mxu0 %v998
    %2141 = vmatpush1.bf16.msra.mxu0 %v997
    %2142 = vmatprep.subr.bf16.mxu0 %v994
    %2143 = vmatpush1.bf16.msra.mxu0 %v993
    %2144 = vmatprep.subr.bf16.mxu0 %v990
    %2145 = vmatpush1.bf16.msra.mxu0 %v989
    %2146 = vmatprep.subr.bf16.mxu0 %v986
    %2147 = vmatpush1.bf16.msra.mxu0 %v985
    %2148 = vmatprep.subr.bf16.mxu0 %v982
    %2149 = vmatpush1.bf16.msra.mxu0 %v981
    %2150 = vmatprep.subr.bf16.mxu0 0
    %2151 = vmatpush2.bf16.msra.mxu0 0
    %2152 = vmatprep.subr.bf16.mxu0 0
    %2153 = vmatpush2.bf16.msra.mxu0 0
    %2154 = vmatprep.subr.bf16.mxu0 0
    %2155 = vmatpush2.bf16.msra.mxu0 0
    %2156 = vmatprep.subr.bf16.mxu0 0
    %2157 = vmatpush2.bf16.msra.mxu0 0
    %2158 = vmatprep.subr.bf16.mxu0 0
    %2159 = vmatpush2.bf16.msra.mxu0 0
    %2160 = vmatprep.subr.bf16.mxu0 0
    %2161 = vmatpush2.bf16.msra.mxu0 0
    %2162 = vmatprep.subr.bf16.mxu0 0
    %2163 = vmatpush2.bf16.msra.mxu0 0
    %2164 = vmatprep.subr.bf16.mxu0 0
    %2165 = vmatpush2.bf16.msra.mxu0 0
    %2166 = vmatprep.mubr.bf16.mxu0 0
    %2167 = vmatmul.mubr.bf16.gmra.mxu0 %v1987
    %v2168 = vpop.f32.mrf.mxu0
    %v2169 = vadd.f32 0.0, %v2168
    %v2170 = vpop.f32.mrf.mxu0
    %v2171 = vadd.f32 0.0, %v2170
    %v2172 = vpop.f32.mrf.mxu0
    %v2173 = vpop.f32.mrf.mxu0
    %2174 = vdwg.mxu0
    %v2175 = vadd.f32 %v2089, %v2128
    %v2176 = vadd.f32 %v2090, %v2130
    %v2177 = vadd.f32 %v2091, %v2169
    %v2178 = vadd.f32 %v2092, %v2171
    %v2179 = vmul.f32 %v2175, 0.5
    %v2180 = vtanh.pop %v2179
    %v2181 = vmul.f32 %v2180, 0.5
    %v2182 = vadd.f32 %v2181, 0.5
    %v2183 = vmul.f32 %v2176, 0.5
    %v2184 = vtanh.pop %v2183
    %v2185 = vmul.f32 %v2184, 0.5
    %v2186 = vadd.f32 %v2185, 0.5
    %v2187 = vtanh.pop %v2177
    %v2188 = vmul.f32 %v2178, 0.5
    %v2189 = vtanh.pop %v2188
    %v2190 = vmul.f32 %v2189, 0.5
    %v2191 = vadd.f32 %v2190, 0.5
    %v2192 = vmul.f32 %v2186, %v1984
    %v2193 = vmul.f32 %v2182, %v2187
    %v2194 = vadd.f32 %v2192, %v2193
    %v2195 = vtanh.pop %v2194
    %v2196 = vmul.f32 %v2191, %v2195
    %v2197 = vpack.c.bf16 %v2196, %v2196
    %v2198 = vpack.c.bf16 %v2088, %v2088
    %2199 = vmatprep.subr.bf16.mxu0 %v680
    %2200 = vmatpush1.bf16.msra.mxu0 %v679
    %2201 = vmatprep.subr.bf16.mxu0 %v676
    %2202 = vmatpush1.bf16.msra.mxu0 %v675
    %2203 = vmatprep.subr.bf16.mxu0 %v672
    %2204 = vmatpush1.bf16.msra.mxu0 %v671
    %2205 = vmatprep.subr.bf16.mxu0 %v668
    %2206 = vmatpush1.bf16.msra.mxu0 %v667
    %2207 = vmatprep.subr.bf16.mxu0 %v664
    %2208 = vmatpush1.bf16.msra.mxu0 %v663
    %2209 = vmatprep.subr.bf16.mxu0 %v660
    %2210 = vmatpush1.bf16.msra.mxu0 %v659
    %2211 = vmatprep.subr.bf16.mxu0 %v656
    %2212 = vmatpush1.bf16.msra.mxu0 %v655
    %2213 = vmatprep.subr.bf16.mxu0 %v652
    %2214 = vmatpush1.bf16.msra.mxu0 %v651
    %2215 = vmatprep.subr.bf16.mxu0 %v712
    %2216 = vmatpush2.bf16.msra.mxu0 %v711
    %2217 = vmatprep.subr.bf16.mxu0 %v708
    %2218 = vmatpush2.bf16.msra.mxu0 %v707
    %2219 = vmatprep.subr.bf16.mxu0 %v704
    %2220 = vmatpush2.bf16.msra.mxu0 %v703
    %2221 = vmatprep.subr.bf16.mxu0 %v700
    %2222 = vmatpush2.bf16.msra.mxu0 %v699
    %2223 = vmatprep.subr.bf16.mxu0 %v696
    %2224 = vmatpush2.bf16.msra.mxu0 %v695
    %2225 = vmatprep.subr.bf16.mxu0 %v692
    %2226 = vmatpush2.bf16.msra.mxu0 %v691
    %2227 = vmatprep.subr.bf16.mxu0 %v688
    %2228 = vmatpush2.bf16.msra.mxu0 %v687
    %2229 = vmatprep.subr.bf16.mxu0 %v684
    %2230 = vmatpush2.bf16.msra.mxu0 %v683
    %2231 = vmatprep.mubr.bf16.mxu0 %v2198
    %2232 = vmatmul.mubr.bf16.gmra.mxu0 %v2197
    %v2233 = vpop.f32.mrf.mxu0
    %v2234 = vadd.f32 %v442, %v2233
    %v2235 = vpop.f32.mrf.mxu0
    %v2236 = vadd.f32 %v446, %v2235
    %v2237 = vpop.f32.mrf.mxu0
    %v2238 = vpop.f32.mrf.mxu0
    %2239 = vdwg.mxu0
    %2240 = vmatprep.subr.bf16.mxu0 %v682
    %2241 = vmatpush1.bf16.msra.mxu0 %v681
    %2242 = vmatprep.subr.bf16.mxu0 %v678
    %2243 = vmatpush1.bf16.msra.mxu0 %v677
    %2244 = vmatprep.subr.bf16.mxu0 %v674
    %2245 = vmatpush1.bf16.msra.mxu0 %v673
    %2246 = vmatprep.subr.bf16.mxu0 %v670
    %2247 = vmatpush1.bf16.msra.mxu0 %v669
    %2248 = vmatprep.subr.bf16.mxu0 %v666
    %2249 = vmatpush1.bf16.msra.mxu0 %v665
    %2250 = vmatprep.subr.bf16.mxu0 %v662
    %2251 = vmatpush1.bf16.msra.mxu0 %v661
    %2252 = vmatprep.subr.bf16.mxu0 %v658
    %2253 = vmatpush1.bf16.msra.mxu0 %v657
    %2254 = vmatprep.subr.bf16.mxu0 %v654
    %2255 = vmatpush1.bf16.msra.mxu0 %v653
    %2256 = vmatprep.subr.bf16.mxu0 %v714
    %2257 = vmatpush2.bf16.msra.mxu0 %v713
    %2258 = vmatprep.subr.bf16.mxu0 %v710
    %2259 = vmatpush2.bf16.msra.mxu0 %v709
    %2260 = vmatprep.subr.bf16.mxu0 %v706
    %2261 = vmatpush2.bf16.msra.mxu0 %v705
    %2262 = vmatprep.subr.bf16.mxu0 %v702
    %2263 = vmatpush2.bf16.msra.mxu0 %v701
    %2264 = vmatprep.subr.bf16.mxu0 %v698
    %2265 = vmatpush2.bf16.msra.mxu0 %v697
    %2266 = vmatprep.subr.bf16.mxu0 %v694
    %2267 = vmatpush2.bf16.msra.mxu0 %v693
    %2268 = vmatprep.subr.bf16.mxu0 %v690
    %2269 = vmatpush2.bf16.msra.mxu0 %v689
    %2270 = vmatprep.subr.bf16.mxu0 %v686
    %2271 = vmatpush2.bf16.msra.mxu0 %v685
    %2272 = vmatprep.mubr.bf16.mxu0 %v2198
    %2273 = vmatmul.mubr.bf16.gmra.mxu0 %v2197
    %v2274 = vpop.f32.mrf.mxu0
    %v2275 = vadd.f32 %v450, %v2274
    %v2276 = vpop.f32.mrf.mxu0
    %v2277 = vadd.f32 %v454, %v2276
    %v2278 = vpop.f32.mrf.mxu0
    %v2279 = vpop.f32.mrf.mxu0
    %2280 = vdwg.mxu0
    %v2281 = vmul.f32 %v2234, 0.5
    %v2282 = vtanh.pop %v2281
    %v2283 = vmul.f32 %v2282, 0.5
    %v2284 = vadd.f32 %v2283, 0.5
    %v2285 = vmul.f32 %v2236, 0.5
    %v2286 = vtanh.pop %v2285
    %v2287 = vmul.f32 %v2286, 0.5
    %v2288 = vadd.f32 %v2287, 0.5
    %v2289 = vtanh.pop %v2275
    %v2290 = vmul.f32 %v2277, 0.5
    %v2291 = vtanh.pop %v2290
    %v2292 = vmul.f32 %v2291, 0.5
    %v2293 = vadd.f32 %v2292, 0.5
    %v2294 = vmul.f32 %v2288, %v2086
    %v2295 = vmul.f32 %v2284, %v2289
    %v2296 = vadd.f32 %v2294, %v2295
    %v2297 = vtanh.pop %v2296
    %v2298 = vmul.f32 %v2293, %v2297
    %v2299 = vld [vmem:[#allocation4 + $0xe0] sm:$0xff]
    %v2300 = vld [vmem:[#allocation4 + $0xe8] sm:$0xff]
    %v2301 = vld [vmem:[#allocation4 + $0xf0] sm:$0xff]
    %v2302 = vld [vmem:[#allocation4 + $0xf8] sm:$0xff]
    %2303 = vmatprep.subr.bf16.mxu0 %v1008
    %2304 = vmatpush1.bf16.msra.mxu0 %v1007
    %2305 = vmatprep.subr.bf16.mxu0 %v1004
    %2306 = vmatpush1.bf16.msra.mxu0 %v1003
    %2307 = vmatprep.subr.bf16.mxu0 %v1000
    %2308 = vmatpush1.bf16.msra.mxu0 %v999
    %2309 = vmatprep.subr.bf16.mxu0 %v996
    %2310 = vmatpush1.bf16.msra.mxu0 %v995
    %2311 = vmatprep.subr.bf16.mxu0 %v992
    %2312 = vmatpush1.bf16.msra.mxu0 %v991
    %2313 = vmatprep.subr.bf16.mxu0 %v988
    %2314 = vmatpush1.bf16.msra.mxu0 %v987
    %2315 = vmatprep.subr.bf16.mxu0 %v984
    %2316 = vmatpush1.bf16.msra.mxu0 %v983
    %2317 = vmatprep.subr.bf16.mxu0 %v980
    %2318 = vmatpush1.bf16.msra.mxu0 %v979
    %2319 = vmatprep.subr.bf16.mxu0 0
    %2320 = vmatpush2.bf16.msra.mxu0 0
    %2321 = vmatprep.subr.bf16.mxu0 0
    %2322 = vmatpush2.bf16.msra.mxu0 0
    %2323 = vmatprep.subr.bf16.mxu0 0
    %2324 = vmatpush2.bf16.msra.mxu0 0
    %2325 = vmatprep.subr.bf16.mxu0 0
    %2326 = vmatpush2.bf16.msra.mxu0 0
    %2327 = vmatprep.subr.bf16.mxu0 0
    %2328 = vmatpush2.bf16.msra.mxu0 0
    %2329 = vmatprep.subr.bf16.mxu0 0
    %2330 = vmatpush2.bf16.msra.mxu0 0
    %2331 = vmatprep.subr.bf16.mxu0 0
    %2332 = vmatpush2.bf16.msra.mxu0 0
    %2333 = vmatprep.subr.bf16.mxu0 0
    %2334 = vmatpush2.bf16.msra.mxu0 0
    %2335 = vmatprep.mubr.bf16.mxu0 0
    %2336 = vmatmul.mubr.bf16.gmra.mxu0 %v2197
    %v2337 = vpop.f32.mrf.mxu0
    %v2338 = vadd.f32 0.0, %v2337
    %v2339 = vpop.f32.mrf.mxu0
    %v2340 = vadd.f32 0.0, %v2339
    %v2341 = vpop.f32.mrf.mxu0
    %v2342 = vpop.f32.mrf.mxu0
    %2343 = vdwg.mxu0
    %2344 = vmatprep.subr.bf16.mxu0 %v1010
    %2345 = vmatpush1.bf16.msra.mxu0 %v1009
    %2346 = vmatprep.subr.bf16.mxu0 %v1006
    %2347 = vmatpush1.bf16.msra.mxu0 %v1005
    %2348 = vmatprep.subr.bf16.mxu0 %v1002
    %2349 = vmatpush1.bf16.msra.mxu0 %v1001
    %2350 = vmatprep.subr.bf16.mxu0 %v998
    %2351 = vmatpush1.bf16.msra.mxu0 %v997
    %2352 = vmatprep.subr.bf16.mxu0 %v994
    %2353 = vmatpush1.bf16.msra.mxu0 %v993
    %2354 = vmatprep.subr.bf16.mxu0 %v990
    %2355 = vmatpush1.bf16.msra.mxu0 %v989
    %2356 = vmatprep.subr.bf16.mxu0 %v986
    %2357 = vmatpush1.bf16.msra.mxu0 %v985
    %2358 = vmatprep.subr.bf16.mxu0 %v982
    %2359 = vmatpush1.bf16.msra.mxu0 %v981
    %2360 = vmatprep.subr.bf16.mxu0 0
    %2361 = vmatpush2.bf16.msra.mxu0 0
    %2362 = vmatprep.subr.bf16.mxu0 0
    %2363 = vmatpush2.bf16.msra.mxu0 0
    %2364 = vmatprep.subr.bf16.mxu0 0
    %2365 = vmatpush2.bf16.msra.mxu0 0
    %2366 = vmatprep.subr.bf16.mxu0 0
    %2367 = vmatpush2.bf16.msra.mxu0 0
    %2368 = vmatprep.subr.bf16.mxu0 0
    %2369 = vmatpush2.bf16.msra.mxu0 0
    %2370 = vmatprep.subr.bf16.mxu0 0
    %2371 = vmatpush2.bf16.msra.mxu0 0
    %2372 = vmatprep.subr.bf16.mxu0 0
    %2373 = vmatpush2.bf16.msra.mxu0 0
    %2374 = vmatprep.subr.bf16.mxu0 0
    %2375 = vmatpush2.bf16.msra.mxu0 0
    %2376 = vmatprep.mubr.bf16.mxu0 0
    %2377 = vmatmul.mubr.bf16.gmra.mxu0 %v2197
    %v2378 = vpop.f32.mrf.mxu0
    %v2379 = vadd.f32 0.0, %v2378
    %v2380 = vpop.f32.mrf.mxu0
    %v2381 = vadd.f32 0.0, %v2380
    %v2382 = vpop.f32.mrf.mxu0
    %v2383 = vpop.f32.mrf.mxu0
    %2384 = vdwg.mxu0
    %v2385 = vadd.f32 %v2299, %v2338
    %v2386 = vadd.f32 %v2300, %v2340
    %v2387 = vadd.f32 %v2301, %v2379
    %v2388 = vadd.f32 %v2302, %v2381
    %v2389 = vmul.f32 %v2385, 0.5
    %v2390 = vtanh.pop %v2389
    %v2391 = vmul.f32 %v2390, 0.5
    %v2392 = vadd.f32 %v2391, 0.5
    %v2393 = vmul.f32 %v2386, 0.5
    %v2394 = vtanh.pop %v2393
    %v2395 = vmul.f32 %v2394, 0.5
    %v2396 = vadd.f32 %v2395, 0.5
    %v2397 = vtanh.pop %v2387
    %v2398 = vmul.f32 %v2388, 0.5
    %v2399 = vtanh.pop %v2398
    %v2400 = vmul.f32 %v2399, 0.5
    %v2401 = vadd.f32 %v2400, 0.5
    %v2402 = vmul.f32 %v2396, %v2194
    %v2403 = vmul.f32 %v2392, %v2397
    %v2404 = vadd.f32 %v2402, %v2403
    %v2405 = vtanh.pop %v2404
    %v2406 = vmul.f32 %v2401, %v2405
    %v2407 = vpack.c.bf16 %v2406, %v2406
    %v2408 = vpack.c.bf16 %v2298, %v2298
    %2409 = vmatprep.subr.bf16.mxu0 %v680
    %2410 = vmatpush1.bf16.msra.mxu0 %v679
    %2411 = vmatprep.subr.bf16.mxu0 %v676
    %2412 = vmatpush1.bf16.msra.mxu0 %v675
    %2413 = vmatprep.subr.bf16.mxu0 %v672
    %2414 = vmatpush1.bf16.msra.mxu0 %v671
    %2415 = vmatprep.subr.bf16.mxu0 %v668
    %2416 = vmatpush1.bf16.msra.mxu0 %v667
    %2417 = vmatprep.subr.bf16.mxu0 %v664
    %2418 = vmatpush1.bf16.msra.mxu0 %v663
    %2419 = vmatprep.subr.bf16.mxu0 %v660
    %2420 = vmatpush1.bf16.msra.mxu0 %v659
    %2421 = vmatprep.subr.bf16.mxu0 %v656
    %2422 = vmatpush1.bf16.msra.mxu0 %v655
    %2423 = vmatprep.subr.bf16.mxu0 %v652
    %2424 = vmatpush1.bf16.msra.mxu0 %v651
    %2425 = vmatprep.subr.bf16.mxu0 %v712
    %2426 = vmatpush2.bf16.msra.mxu0 %v711
    %2427 = vmatprep.subr.bf16.mxu0 %v708
    %2428 = vmatpush2.bf16.msra.mxu0 %v707
    %2429 = vmatprep.subr.bf16.mxu0 %v704
    %2430 = vmatpush2.bf16.msra.mxu0 %v703
    %2431 = vmatprep.subr.bf16.mxu0 %v700
    %2432 = vmatpush2.bf16.msra.mxu0 %v699
    %2433 = vmatprep.subr.bf16.mxu0 %v696
    %2434 = vmatpush2.bf16.msra.mxu0 %v695
    %2435 = vmatprep.subr.bf16.mxu0 %v692
    %2436 = vmatpush2.bf16.msra.mxu0 %v691
    %2437 = vmatprep.subr.bf16.mxu0 %v688
    %2438 = vmatpush2.bf16.msra.mxu0 %v687
    %2439 = vmatprep.subr.bf16.mxu0 %v684
    %2440 = vmatpush2.bf16.msra.mxu0 %v683
    %2441 = vmatprep.mubr.bf16.mxu0 %v2408
    %2442 = vmatmul.mubr.bf16.gmra.mxu0 %v2407
    %v2443 = vpop.f32.mrf.mxu0
    %v2444 = vadd.f32 %v442, %v2443
    %v2445 = vpop.f32.mrf.mxu0
    %v2446 = vadd.f32 %v446, %v2445
    %v2447 = vpop.f32.mrf.mxu0
    %v2448 = vpop.f32.mrf.mxu0
    %2449 = vdwg.mxu0
    %2450 = vmatprep.subr.bf16.mxu0 %v682
    %2451 = vmatpush1.bf16.msra.mxu0 %v681
    %2452 = vmatprep.subr.bf16.mxu0 %v678
    %2453 = vmatpush1.bf16.msra.mxu0 %v677
    %2454 = vmatprep.subr.bf16.mxu0 %v674
    %2455 = vmatpush1.bf16.msra.mxu0 %v673
    %2456 = vmatprep.subr.bf16.mxu0 %v670
    %2457 = vmatpush1.bf16.msra.mxu0 %v669
    %2458 = vmatprep.subr.bf16.mxu0 %v666
    %2459 = vmatpush1.bf16.msra.mxu0 %v665
    %2460 = vmatprep.subr.bf16.mxu0 %v662
    %2461 = vmatpush1.bf16.msra.mxu0 %v661
    %2462 = vmatprep.subr.bf16.mxu0 %v658
    %2463 = vmatpush1.bf16.msra.mxu0 %v657
    %2464 = vmatprep.subr.bf16.mxu0 %v654
    %2465 = vmatpush1.bf16.msra.mxu0 %v653
    %2466 = vmatprep.subr.bf16.mxu0 %v714
    %2467 = vmatpush2.bf16.msra.mxu0 %v713
    %2468 = vmatprep.subr.bf16.mxu0 %v710
    %2469 = vmatpush2.bf16.msra.mxu0 %v709
    %2470 = vmatprep.subr.bf16.mxu0 %v706
    %2471 = vmatpush2.bf16.msra.mxu0 %v705
    %2472 = vmatprep.subr.bf16.mxu0 %v702
    %2473 = vmatpush2.bf16.msra.mxu0 %v701
    %2474 = vmatprep.subr.bf16.mxu0 %v698
    %2475 = vmatpush2.bf16.msra.mxu0 %v697
    %2476 = vmatprep.subr.bf16.mxu0 %v694
    %2477 = vmatpush2.bf16.msra.mxu0 %v693
    %2478 = vmatprep.subr.bf16.mxu0 %v690
    %2479 = vmatpush2.bf16.msra.mxu0 %v689
    %2480 = vmatprep.subr.bf16.mxu0 %v686
    %2481 = vmatpush2.bf16.msra.mxu0 %v685
    %2482 = vmatprep.mubr.bf16.mxu0 %v2408
    %2483 = vmatmul.mubr.bf16.gmra.mxu0 %v2407
    %v2484 = vpop.f32.mrf.mxu0
    %v2485 = vadd.f32 %v450, %v2484
    %v2486 = vpop.f32.mrf.mxu0
    %v2487 = vadd.f32 %v454, %v2486
    %v2488 = vpop.f32.mrf.mxu0
    %v2489 = vpop.f32.mrf.mxu0
    %2490 = vdwg.mxu0
    %v2491 = vmul.f32 %v2444, 0.5
    %v2492 = vtanh.pop %v2491
    %v2493 = vmul.f32 %v2492, 0.5
    %v2494 = vadd.f32 %v2493, 0.5
    %v2495 = vmul.f32 %v2446, 0.5
    %v2496 = vtanh.pop %v2495
    %v2497 = vmul.f32 %v2496, 0.5
    %v2498 = vadd.f32 %v2497, 0.5
    %v2499 = vtanh.pop %v2485
    %v2500 = vmul.f32 %v2487, 0.5
    %v2501 = vtanh.pop %v2500
    %v2502 = vmul.f32 %v2501, 0.5
    %v2503 = vadd.f32 %v2502, 0.5
    %v2504 = vmul.f32 %v2498, %v2296
    %v2505 = vmul.f32 %v2494, %v2499
    %v2506 = vadd.f32 %v2504, %v2505
    %v2507 = vtanh.pop %v2506
    %v2508 = vmul.f32 %v2503, %v2507
    %2509 = vst [vmem:[%s6] sm:$0xff] %v2508
    // Predicated region
    $region30: #{encoder_forward.1} parent=1 // pred_check
      _
    $region31: #{encoder_forward.1} parent=1 // pred_check_branch
      %2511 = sbr.rel (0) target = $region33
    $region32: #{encoder_forward.1} parent=1 // pred_region
      _
    $region33: #{encoder_forward.1} parent=1 // pred_fallthru
      _
    // Predicated region
    $region34: #{encoder_forward.1} parent=1 // pred_check
      _
    $region35: #{encoder_forward.1} parent=1 // pred_check_branch
      %2513 = sbr.rel (0) target = $region37
    $region36: #{encoder_forward.1} parent=1 // pred_region
      _
    $region37: #{encoder_forward.1} parent=1 // pred_fallthru
      _
    %2514 = vsyncpa [#allocation6], 1
  %2515 = vsyncmov [#allocation3]
  %s2516 = vpop.sfrf %2515
  %p2517 = scmp.eq.s32.totalorder %s2516, 0
  %p2518 = pneg %p2517
  %2520 = shalt.err (%p2518)

</llo_original>
